<compile_context>
chip_gen: v7x
topology: tpu7x:2x2x1
jax: 0.10.0
libtpu: 0.0.40
codegen_flags: <defaults>
</compile_context>

<pallas_src>
import jax
import jax.numpy as jnp
from jax import lax
from jax.experimental import pallas as pl
from jax.experimental.pallas import tpu as pltpu


# ------------------------------ Pallas kernel ------------------------------

def _basic_block_kernel(xpad_ref, w1_ref, w2_ref, ws_ref, w3_ref, out_ref):
    """Fused BasicBlock_Ganilla forward for one batch element (NHWC in VMEM).

    xpad_ref: (1, H+2, W+2, Cin)  reflection-padded input (pad=1 done in wrapper)
    w1_ref:   (9*Cin,   Cout)     conv1 weights, im2col layout, (kh, kw, ci)-major rows
    w2_ref:   (9*Cout,  Cout)     conv2 weights
    ws_ref:   (Cin,     Cout)     shortcut 1x1 weights (identity matrix if Cin == Cout)
    w3_ref:   (18*Cout, Cout)     final conv weights (input = concat[conv2, shortcut])
    out_ref:  (1, H*W,  Cout)
    """
    Cout = out_ref.shape[2]
    H, W = xpad_ref.shape[1] - 2, xpad_ref.shape[2] - 2

    def conv3x3(pad, wmat):
        # pad: (H+2, W+2, C). Whole-image im2col -> ONE MXU matmul per conv
        # (M = H*W, K = 9*C) instead of 9 small per-tap matmuls.
        c = pad.shape[-1]
        cols = [pad[kh:kh + H, kw:kw + W, :].reshape(H * W, c)
                for kh in range(3) for kw in range(3)]
        patch = jnp.concatenate(cols, axis=1)                        # (H*W, 9*C)
        return jnp.dot(patch, wmat, preferred_element_type=jnp.float32)

    def reflect_pad1(img):
        # ReflectionPad2d(1): (H, W, C) -> (H+2, W+2, C); stays in VMEM/vregs.
        v = jnp.concatenate([img[1:2], img, img[H - 2:H - 1]], axis=0)
        return jnp.concatenate([v[:, 1:2, :], v, v[:, W - 2:W - 1, :]], axis=1)

    xpad = xpad_ref[0]                                               # (H+2, W+2, Cin)

    # conv1 -> ReLU                              (norm='none', use_dropout=False)
    y1 = jnp.maximum(conv3x3(xpad, w1_ref[...]), 0.0).reshape(H, W, Cout)

    # conv2 (no activation)
    y2 = conv3x3(reflect_pad1(y1), w2_ref[...])                      # (H*W, Cout)

    # shortcut: 1x1 conv (identity matrix when input_dim == output_dim)
    xc = xpad[1:H + 1, 1:W + 1, :].reshape(H * W, xpad.shape[-1])
    sc = jnp.dot(xc, ws_ref[...], preferred_element_type=jnp.float32)  # (H*W, Cout)

    # channel concat [conv2, shortcut] -> reflect pad -> final conv -> ReLU
    cat = jnp.concatenate([y2, sc], axis=1).reshape(H, W, 2 * Cout)
    out = jnp.maximum(conv3x3(reflect_pad1(cat), w3_ref[...]), 0.0)    # (H*W, Cout)
    out_ref[0] = out.astype(out_ref.dtype)


# ------------------------------- JAX wrapper -------------------------------

def basic_block_ganilla(x_nchw, w1_oihw, w2_oihw, w3_oihw, ws_oihw=None):
    """Pallas implementation of BasicBlock_Ganilla.forward.

    x_nchw:  (B, Cin, H, W)
    w1_oihw: (Cout, Cin,     3, 3)   conv1
    w2_oihw: (Cout, Cout,    3, 3)   conv2
    w3_oihw: (Cout, 2*Cout,  3, 3)   final_conv
    ws_oihw: (Cout, Cin, 1, 1) shortcut 1x1 conv, or None for identity (Cin==Cout).
    Returns (B, Cout, H, W).
    """
    B, Cin, H, W = x_nchw.shape
    Cout = w1_oihw.shape[0]

    # NCHW -> NHWC + input reflection pad (glue; input is read from HBM once anyway).
    x = jnp.transpose(x_nchw, (0, 2, 3, 1)).astype(jnp.float32)
    x_pad = jnp.pad(x, ((0, 0), (1, 1), (1, 1), (0, 0)), mode="reflect")

    def as_im2col(w):  # OIHW (Co, Ci, 3, 3) -> (9*Ci, Co), rows (kh, kw, ci)-major
        return jnp.transpose(w, (2, 3, 1, 0)).reshape(-1, w.shape[0]).astype(jnp.float32)

    w1m, w2m, w3m = as_im2col(w1_oihw), as_im2col(w2_oihw), as_im2col(w3_oihw)
    if ws_oihw is None:
        assert Cin == Cout, "identity shortcut requires input_dim == output_dim"
        wsm = jnp.eye(Cin, dtype=jnp.float32)
    else:
        wsm = jnp.transpose(ws_oihw[:, :, 0, 0]).astype(jnp.float32)   # (Cin, Cout)

    out_flat = pl.pallas_call(
        _basic_block_kernel,
        out_shape=jax.ShapeDtypeStruct((B, H * W, Cout), jnp.float32),
        grid=(B,),
        in_specs=[
            pl.BlockSpec((1, H + 2, W + 2, Cin), lambda b: (b, 0, 0, 0)),
            pl.BlockSpec(w1m.shape, lambda b: (0, 0)),
            pl.BlockSpec(w2m.shape, lambda b: (0, 0)),
            pl.BlockSpec(wsm.shape, lambda b: (0, 0)),
            pl.BlockSpec(w3m.shape, lambda b: (0, 0)),
        ],
        out_specs=pl.BlockSpec((1, H * W, Cout), lambda b: (b, 0, 0)),
        compiler_params=pltpu.CompilerParams(dimension_semantics=("parallel",)),
    )(x_pad, w1m, w2m, wsm, w3m)

    # (B, H*W, Cout) -> (B, Cout, H, W)
    return jnp.transpose(out_flat.reshape(B, H, W, Cout), (0, 3, 1, 2))


# -------------------------- pure-JAX reference check ------------------------

def _reference(x, w1, w2, w3, ws=None):
    def rpad(t):
        return jnp.pad(t, ((0, 0), (0, 0), (1, 1), (1, 1)), mode="reflect")

    def conv(t, w):
        return lax.conv_general_dilated(
            t, w, window_strides=(1, 1), padding="VALID",
            dimension_numbers=("NCHW", "OIHW", "NCHW"),
            precision=lax.Precision.HIGHEST)

    y1 = jnp.maximum(conv(rpad(x), w1), 0.0)
    y2 = conv(rpad(y1), w2)
    sc = x if ws is None else conv(x, ws)
    cat = jnp.concatenate([y2, sc], axis=1)
    return jnp.maximum(conv(rpad(cat), w3), 0.0)


if __name__ == "__main__":
    B, Cin, Cout, H, W = 2, 4, 8, 16, 16

    key = jax.random.PRNGKey(0)
    kx, k1, k2, k3, ks = jax.random.split(key, 5)
    x = jax.random.normal(kx, (B, Cin, H, W), dtype=jnp.float32)

    def conv_w(k, co, ci, kh, kw):
        bound = 1.0 / ((ci * kh * kw) ** 0.5)
        return jax.random.uniform(k, (co, ci, kh, kw), jnp.float32, -bound, bound)

    w1 = conv_w(k1, Cout, Cin, 3, 3)          # conv1
    w2 = conv_w(k2, Cout, Cout, 3, 3)         # conv2
    w3 = conv_w(k3, Cout, 2 * Cout, 3, 3)     # final_conv
    ws = conv_w(ks, Cout, Cin, 1, 1)          # shortcut 1x1 (input_dim != output_dim)

    out = jax.jit(basic_block_ganilla)(x, w1, w2, w3, ws)
    out = jax.block_until_ready(out)

    ref = _reference(x, w1, w2, w3, ws)
    assert out.shape == ref.shape == (B, Cout, H, W), (out.shape, ref.shape)
    max_err = float(jnp.max(jnp.abs(out - ref)))
    assert jnp.allclose(out, ref, atol=2e-3, rtol=2e-3), max_err

    print("KERNEL_OK")
</pallas_src>

<mosaic_0001>
module attributes {stable_mosaic.version = 11 : i64} {
  func.func @_basic_block_kernel(%arg0: i32, %arg1: memref<1x18x18x4xf32, #tpu.memory_space<vmem>>, %arg2: memref<36x8xf32, #tpu.memory_space<vmem>>, %arg3: memref<72x8xf32, #tpu.memory_space<vmem>>, %arg4: memref<4x8xf32, #tpu.memory_space<vmem>>, %arg5: memref<144x8xf32, #tpu.memory_space<vmem>>, %arg6: memref<1x256x8xf32, #tpu.memory_space<vmem>>) attributes {dimension_semantics = [#tpu.dimension_semantics<parallel>], iteration_bounds = array<i64: 2>, scalar_prefetch = 0 : i64, scratch_operands = 0 : i64, tpu.core_type = #tpu.core_type<tc>, window_params = [{transform_indices = @transform_0, window_bounds = array<i64: 1, 18, 18, 4>}, {pipeline_mode = #tpu.pipeline_mode<synchronous>, transform_indices = @transform_1, window_bounds = array<i64: 36, 8>}, {pipeline_mode = #tpu.pipeline_mode<synchronous>, transform_indices = @transform_2, window_bounds = array<i64: 72, 8>}, {pipeline_mode = #tpu.pipeline_mode<synchronous>, transform_indices = @transform_3, window_bounds = array<i64: 4, 8>}, {pipeline_mode = #tpu.pipeline_mode<synchronous>, transform_indices = @transform_4, window_bounds = array<i64: 144, 8>}, {transform_indices = @transform_5, window_bounds = array<i64: 1, 256, 8>}]} {
    %c0 = arith.constant 0 : index
    %c0_0 = arith.constant 0 : index
    %c0_1 = arith.constant 0 : index
    %c0_2 = arith.constant 0 : index
    %0 = vector.load %arg1[%c0, %c0_0, %c0_1, %c0_2] : memref<1x18x18x4xf32, #tpu.memory_space<vmem>>, vector<1x18x18x4xf32>
    %1 = vector.shape_cast %0 : vector<1x18x18x4xf32> to vector<18x18x4xf32>
    %c0_3 = arith.constant 0 : index
    %c0_4 = arith.constant 0 : index
    %2 = vector.load %arg2[%c0_3, %c0_4] : memref<36x8xf32, #tpu.memory_space<vmem>>, vector<36x8xf32>
    %3 = vector.extract_strided_slice %1 {offsets = [0, 0, 0], sizes = [16, 16, 4], strides = [1, 1, 1]} : vector<18x18x4xf32> to vector<16x16x4xf32>
    %4 = vector.shape_cast %3 : vector<16x16x4xf32> to vector<256x4xf32>
    %5 = vector.extract_strided_slice %1 {offsets = [0, 1, 0], sizes = [16, 16, 4], strides = [1, 1, 1]} : vector<18x18x4xf32> to vector<16x16x4xf32>
    %6 = vector.shape_cast %5 : vector<16x16x4xf32> to vector<256x4xf32>
    %7 = vector.extract_strided_slice %1 {offsets = [0, 2, 0], sizes = [16, 16, 4], strides = [1, 1, 1]} : vector<18x18x4xf32> to vector<16x16x4xf32>
    %8 = vector.shape_cast %7 : vector<16x16x4xf32> to vector<256x4xf32>
    %9 = vector.extract_strided_slice %1 {offsets = [1, 0, 0], sizes = [16, 16, 4], strides = [1, 1, 1]} : vector<18x18x4xf32> to vector<16x16x4xf32>
    %10 = vector.shape_cast %9 : vector<16x16x4xf32> to vector<256x4xf32>
    %11 = vector.extract_strided_slice %1 {offsets = [1, 1, 0], sizes = [16, 16, 4], strides = [1, 1, 1]} : vector<18x18x4xf32> to vector<16x16x4xf32>
    %12 = vector.shape_cast %11 : vector<16x16x4xf32> to vector<256x4xf32>
    %13 = vector.extract_strided_slice %1 {offsets = [1, 2, 0], sizes = [16, 16, 4], strides = [1, 1, 1]} : vector<18x18x4xf32> to vector<16x16x4xf32>
    %14 = vector.shape_cast %13 : vector<16x16x4xf32> to vector<256x4xf32>
    %15 = vector.extract_strided_slice %1 {offsets = [2, 0, 0], sizes = [16, 16, 4], strides = [1, 1, 1]} : vector<18x18x4xf32> to vector<16x16x4xf32>
    %16 = vector.shape_cast %15 : vector<16x16x4xf32> to vector<256x4xf32>
    %17 = vector.extract_strided_slice %1 {offsets = [2, 1, 0], sizes = [16, 16, 4], strides = [1, 1, 1]} : vector<18x18x4xf32> to vector<16x16x4xf32>
    %18 = vector.shape_cast %17 : vector<16x16x4xf32> to vector<256x4xf32>
    %19 = vector.extract_strided_slice %1 {offsets = [2, 2, 0], sizes = [16, 16, 4], strides = [1, 1, 1]} : vector<18x18x4xf32> to vector<16x16x4xf32>
    %20 = vector.shape_cast %19 : vector<16x16x4xf32> to vector<256x4xf32>
    %21 = tpu.concatenate %4, %6, %8, %10, %12, %14, %16, %18, %20 in 1 : vector<256x4xf32>, vector<256x4xf32>, vector<256x4xf32>, vector<256x4xf32>, vector<256x4xf32>, vector<256x4xf32>, vector<256x4xf32>, vector<256x4xf32>, vector<256x4xf32> -> vector<256x36xf32>
    %cst = arith.constant dense<0.000000e+00> : vector<256x8xf32>
    %22 = tpu.matmul %21, %2, %cst {dimension_numbers = #tpu.dot_dimension_numbers<[1], [0], [0], [1], [0, 0, 1, 1], [], []>} : vector<256x36xf32>, vector<36x8xf32>, vector<256x8xf32> -> vector<256x8xf32>
    %cst_5 = arith.constant 0.000000e+00 : f32
    %23 = vector.broadcast %cst_5 : f32 to vector<256x8xf32>
    %24 = arith.maximumf %22, %23 : vector<256x8xf32>
    %25 = vector.shape_cast %24 : vector<256x8xf32> to vector<16x16x8xf32>
    %26 = vector.extract_strided_slice %25 {offsets = [1, 0, 0], sizes = [1, 16, 8], strides = [1, 1, 1]} : vector<16x16x8xf32> to vector<1x16x8xf32>
    %27 = vector.extract_strided_slice %25 {offsets = [14, 0, 0], sizes = [1, 16, 8], strides = [1, 1, 1]} : vector<16x16x8xf32> to vector<1x16x8xf32>
    %28 = tpu.concatenate %26, %25, %27 in 0 : vector<1x16x8xf32>, vector<16x16x8xf32>, vector<1x16x8xf32> -> vector<18x16x8xf32>
    %29 = vector.extract_strided_slice %28 {offsets = [0, 1, 0], sizes = [18, 1, 8], strides = [1, 1, 1]} : vector<18x16x8xf32> to vector<18x1x8xf32>
    %30 = vector.extract_strided_slice %28 {offsets = [0, 14, 0], sizes = [18, 1, 8], strides = [1, 1, 1]} : vector<18x16x8xf32> to vector<18x1x8xf32>
    %31 = tpu.concatenate %29, %28, %30 in 1 : vector<18x1x8xf32>, vector<18x16x8xf32>, vector<18x1x8xf32> -> vector<18x18x8xf32>
    %c0_6 = arith.constant 0 : index
    %c0_7 = arith.constant 0 : index
    %32 = vector.load %arg3[%c0_6, %c0_7] : memref<72x8xf32, #tpu.memory_space<vmem>>, vector<72x8xf32>
    %33 = vector.extract_strided_slice %31 {offsets = [0, 0, 0], sizes = [16, 16, 8], strides = [1, 1, 1]} : vector<18x18x8xf32> to vector<16x16x8xf32>
    %34 = vector.shape_cast %33 : vector<16x16x8xf32> to vector<256x8xf32>
    %35 = vector.extract_strided_slice %31 {offsets = [0, 1, 0], sizes = [16, 16, 8], strides = [1, 1, 1]} : vector<18x18x8xf32> to vector<16x16x8xf32>
    %36 = vector.shape_cast %35 : vector<16x16x8xf32> to vector<256x8xf32>
    %37 = vector.extract_strided_slice %31 {offsets = [0, 2, 0], sizes = [16, 16, 8], strides = [1, 1, 1]} : vector<18x18x8xf32> to vector<16x16x8xf32>
    %38 = vector.shape_cast %37 : vector<16x16x8xf32> to vector<256x8xf32>
    %39 = vector.extract_strided_slice %31 {offsets = [1, 0, 0], sizes = [16, 16, 8], strides = [1, 1, 1]} : vector<18x18x8xf32> to vector<16x16x8xf32>
    %40 = vector.shape_cast %39 : vector<16x16x8xf32> to vector<256x8xf32>
    %41 = vector.extract_strided_slice %31 {offsets = [1, 1, 0], sizes = [16, 16, 8], strides = [1, 1, 1]} : vector<18x18x8xf32> to vector<16x16x8xf32>
    %42 = vector.shape_cast %41 : vector<16x16x8xf32> to vector<256x8xf32>
    %43 = vector.extract_strided_slice %31 {offsets = [1, 2, 0], sizes = [16, 16, 8], strides = [1, 1, 1]} : vector<18x18x8xf32> to vector<16x16x8xf32>
    %44 = vector.shape_cast %43 : vector<16x16x8xf32> to vector<256x8xf32>
    %45 = vector.extract_strided_slice %31 {offsets = [2, 0, 0], sizes = [16, 16, 8], strides = [1, 1, 1]} : vector<18x18x8xf32> to vector<16x16x8xf32>
    %46 = vector.shape_cast %45 : vector<16x16x8xf32> to vector<256x8xf32>
    %47 = vector.extract_strided_slice %31 {offsets = [2, 1, 0], sizes = [16, 16, 8], strides = [1, 1, 1]} : vector<18x18x8xf32> to vector<16x16x8xf32>
    %48 = vector.shape_cast %47 : vector<16x16x8xf32> to vector<256x8xf32>
    %49 = vector.extract_strided_slice %31 {offsets = [2, 2, 0], sizes = [16, 16, 8], strides = [1, 1, 1]} : vector<18x18x8xf32> to vector<16x16x8xf32>
    %50 = vector.shape_cast %49 : vector<16x16x8xf32> to vector<256x8xf32>
    %51 = tpu.concatenate %34, %36, %38, %40, %42, %44, %46, %48, %50 in 1 : vector<256x8xf32>, vector<256x8xf32>, vector<256x8xf32>, vector<256x8xf32>, vector<256x8xf32>, vector<256x8xf32>, vector<256x8xf32>, vector<256x8xf32>, vector<256x8xf32> -> vector<256x72xf32>
    %cst_8 = arith.constant dense<0.000000e+00> : vector<256x8xf32>
    %52 = tpu.matmul %51, %32, %cst_8 {dimension_numbers = #tpu.dot_dimension_numbers<[1], [0], [0], [1], [0, 0, 1, 1], [], []>} : vector<256x72xf32>, vector<72x8xf32>, vector<256x8xf32> -> vector<256x8xf32>
    %53 = vector.extract_strided_slice %1 {offsets = [1, 1, 0], sizes = [16, 16, 4], strides = [1, 1, 1]} : vector<18x18x4xf32> to vector<16x16x4xf32>
    %54 = vector.shape_cast %53 : vector<16x16x4xf32> to vector<256x4xf32>
    %c0_9 = arith.constant 0 : index
    %c0_10 = arith.constant 0 : index
    %55 = vector.load %arg4[%c0_9, %c0_10] : memref<4x8xf32, #tpu.memory_space<vmem>>, vector<4x8xf32>
    %cst_11 = arith.constant dense<0.000000e+00> : vector<256x8xf32>
    %56 = tpu.matmul %54, %55, %cst_11 {dimension_numbers = #tpu.dot_dimension_numbers<[1], [0], [0], [1], [0, 0, 1, 1], [], []>} : vector<256x4xf32>, vector<4x8xf32>, vector<256x8xf32> -> vector<256x8xf32>
    %57 = tpu.concatenate %52, %56 in 1 : vector<256x8xf32>, vector<256x8xf32> -> vector<256x16xf32>
    %58 = vector.shape_cast %57 : vector<256x16xf32> to vector<16x16x16xf32>
    %59 = vector.extract_strided_slice %58 {offsets = [1, 0, 0], sizes = [1, 16, 16], strides = [1, 1, 1]} : vector<16x16x16xf32> to vector<1x16x16xf32>
    %60 = vector.extract_strided_slice %58 {offsets = [14, 0, 0], sizes = [1, 16, 16], strides = [1, 1, 1]} : vector<16x16x16xf32> to vector<1x16x16xf32>
    %61 = tpu.concatenate %59, %58, %60 in 0 : vector<1x16x16xf32>, vector<16x16x16xf32>, vector<1x16x16xf32> -> vector<18x16x16xf32>
    %62 = vector.extract_strided_slice %61 {offsets = [0, 1, 0], sizes = [18, 1, 16], strides = [1, 1, 1]} : vector<18x16x16xf32> to vector<18x1x16xf32>
    %63 = vector.extract_strided_slice %61 {offsets = [0, 14, 0], sizes = [18, 1, 16], strides = [1, 1, 1]} : vector<18x16x16xf32> to vector<18x1x16xf32>
    %64 = tpu.concatenate %62, %61, %63 in 1 : vector<18x1x16xf32>, vector<18x16x16xf32>, vector<18x1x16xf32> -> vector<18x18x16xf32>
    %c0_12 = arith.constant 0 : index
    %c0_13 = arith.constant 0 : index
    %65 = vector.load %arg5[%c0_12, %c0_13] : memref<144x8xf32, #tpu.memory_space<vmem>>, vector<144x8xf32>
    %66 = vector.extract_strided_slice %64 {offsets = [0, 0, 0], sizes = [16, 16, 16], strides = [1, 1, 1]} : vector<18x18x16xf32> to vector<16x16x16xf32>
    %67 = vector.shape_cast %66 : vector<16x16x16xf32> to vector<256x16xf32>
    %68 = vector.extract_strided_slice %64 {offsets = [0, 1, 0], sizes = [16, 16, 16], strides = [1, 1, 1]} : vector<18x18x16xf32> to vector<16x16x16xf32>
    %69 = vector.shape_cast %68 : vector<16x16x16xf32> to vector<256x16xf32>
    %70 = vector.extract_strided_slice %64 {offsets = [0, 2, 0], sizes = [16, 16, 16], strides = [1, 1, 1]} : vector<18x18x16xf32> to vector<16x16x16xf32>
    %71 = vector.shape_cast %70 : vector<16x16x16xf32> to vector<256x16xf32>
    %72 = vector.extract_strided_slice %64 {offsets = [1, 0, 0], sizes = [16, 16, 16], strides = [1, 1, 1]} : vector<18x18x16xf32> to vector<16x16x16xf32>
    %73 = vector.shape_cast %72 : vector<16x16x16xf32> to vector<256x16xf32>
    %74 = vector.extract_strided_slice %64 {offsets = [1, 1, 0], sizes = [16, 16, 16], strides = [1, 1, 1]} : vector<18x18x16xf32> to vector<16x16x16xf32>
    %75 = vector.shape_cast %74 : vector<16x16x16xf32> to vector<256x16xf32>
    %76 = vector.extract_strided_slice %64 {offsets = [1, 2, 0], sizes = [16, 16, 16], strides = [1, 1, 1]} : vector<18x18x16xf32> to vector<16x16x16xf32>
    %77 = vector.shape_cast %76 : vector<16x16x16xf32> to vector<256x16xf32>
    %78 = vector.extract_strided_slice %64 {offsets = [2, 0, 0], sizes = [16, 16, 16], strides = [1, 1, 1]} : vector<18x18x16xf32> to vector<16x16x16xf32>
    %79 = vector.shape_cast %78 : vector<16x16x16xf32> to vector<256x16xf32>
    %80 = vector.extract_strided_slice %64 {offsets = [2, 1, 0], sizes = [16, 16, 16], strides = [1, 1, 1]} : vector<18x18x16xf32> to vector<16x16x16xf32>
    %81 = vector.shape_cast %80 : vector<16x16x16xf32> to vector<256x16xf32>
    %82 = vector.extract_strided_slice %64 {offsets = [2, 2, 0], sizes = [16, 16, 16], strides = [1, 1, 1]} : vector<18x18x16xf32> to vector<16x16x16xf32>
    %83 = vector.shape_cast %82 : vector<16x16x16xf32> to vector<256x16xf32>
    %84 = tpu.concatenate %67, %69, %71, %73, %75, %77, %79, %81, %83 in 1 : vector<256x16xf32>, vector<256x16xf32>, vector<256x16xf32>, vector<256x16xf32>, vector<256x16xf32>, vector<256x16xf32>, vector<256x16xf32>, vector<256x16xf32>, vector<256x16xf32> -> vector<256x144xf32>
    %cst_14 = arith.constant dense<0.000000e+00> : vector<256x8xf32>
    %85 = tpu.matmul %84, %65, %cst_14 {dimension_numbers = #tpu.dot_dimension_numbers<[1], [0], [0], [1], [0, 0, 1, 1], [], []>} : vector<256x144xf32>, vector<144x8xf32>, vector<256x8xf32> -> vector<256x8xf32>
    %cst_15 = arith.constant 0.000000e+00 : f32
    %86 = vector.broadcast %cst_15 : f32 to vector<256x8xf32>
    %87 = arith.maximumf %85, %86 : vector<256x8xf32>
    %c0_16 = arith.constant 0 : index
    %c0_17 = arith.constant 0 : index
    %c0_18 = arith.constant 0 : index
    %88 = vector.load %arg6[%c0_16, %c0_17, %c0_18] : memref<1x256x8xf32, #tpu.memory_space<vmem>>, vector<1x256x8xf32>
    %89 = vector.shape_cast %88 : vector<1x256x8xf32> to vector<256x8xf32>
    %90 = vector.shape_cast %87 : vector<256x8xf32> to vector<1x256x8xf32>
    tpu.vector_store %arg6[%c0_16, %c0_17, %c0_18], %90 {strides = array<i32>} : memref<1x256x8xf32, #tpu.memory_space<vmem>>, vector<1x256x8xf32>,
    return
  }
  func.func @transform_0(%arg0: i32) -> (i32, i32, i32, i32) {
    %c0_i32 = arith.constant 0 : i32
    %c0_i32_0 = arith.constant 0 : i32
    %c0_i32_1 = arith.constant 0 : i32
    %c0_i32_2 = arith.constant 0 : i32
    return %arg0, %c0_i32, %c0_i32_0, %c0_i32_1 : i32, i32, i32, i32
  }
  func.func @transform_1(%arg0: i32) -> (i32, i32) {
    %c0_i32 = arith.constant 0 : i32
    %c0_i32_0 = arith.constant 0 : i32
    %c0_i32_1 = arith.constant 0 : i32
    return %c0_i32, %c0_i32_0 : i32, i32
  }
  func.func @transform_2(%arg0: i32) -> (i32, i32) {
    %c0_i32 = arith.constant 0 : i32
    %c0_i32_0 = arith.constant 0 : i32
    %c0_i32_1 = arith.constant 0 : i32
    return %c0_i32, %c0_i32_0 : i32, i32
  }
  func.func @transform_3(%arg0: i32) -> (i32, i32) {
    %c0_i32 = arith.constant 0 : i32
    %c0_i32_0 = arith.constant 0 : i32
    %c0_i32_1 = arith.constant 0 : i32
    return %c0_i32, %c0_i32_0 : i32, i32
  }
  func.func @transform_4(%arg0: i32) -> (i32, i32) {
    %c0_i32 = arith.constant 0 : i32
    %c0_i32_0 = arith.constant 0 : i32
    %c0_i32_1 = arith.constant 0 : i32
    return %c0_i32, %c0_i32_0 : i32, i32
  }
  func.func @transform_5(%arg0: i32) -> (i32, i32, i32) {
    %c0_i32 = arith.constant 0 : i32
    %c0_i32_0 = arith.constant 0 : i32
    %c0_i32_1 = arith.constant 0 : i32
    return %arg0, %c0_i32, %c0_i32_0 : i32, i32, i32
  }
}

</mosaic_0001>

<llo_original>
// kernel: basic_block_ganilla.1
$region0: #{basic_block_ganilla.1}
  #allocation0 [shape = 'u32[]', space=smem, size = 0x4, offset = 0x4, fixed_abs, tag = 'smem constant byte address 0x4 - core index']
  #allocation1 [shape = 'u32[144,128]{1,0:T(1,128)}', space=vmem, size = 0x12000, scoped, tag = 'internal scratch']
  %s0 = inlined_call_operand.vmem [shape: f32[2,18,18,4], index: 0, kind: input, shape index: {}]
  %s1 = inlined_call_operand.vmem [shape: f32[36,8], index: 1, kind: input, shape index: {}]
  %s2 = inlined_call_operand.vmem [shape: f32[72,8], index: 2, kind: input, shape index: {}]
  %s3 = inlined_call_operand.vmem [shape: f32[4,8], index: 3, kind: input, shape index: {}]
  %s4 = inlined_call_operand.vmem [shape: f32[144,8], index: 4, kind: input, shape index: {}]
  %s5 = inlined_call_operand.vmem [shape: f32[2,256,8], index: 5, kind: output, shape index: {}]
  %s6 = sld [smem:[#allocation0]]
  $region53: #{basic_block_ganilla.1} parent=0
    _
  %s8 = ssub.s32 1, %s6
  %s9 = scalar_select 0, %s8, %s6
  loop: start=0, step=1, limit=4
  $region2: #{basic_block_ganilla.1} parent=0 // loop_pre_header
    _
  $region3: #{basic_block_ganilla.1} parent=0 // loop_header
    %s11 = sphi 0, %s15
    %p12 = scmp.ge.s32.totalorder %s11, 4
    %s21 = sphi 0, %s23
    %s24 = sphi 0, %s21
    %s25 = sphi 0, %s24
    %s41 = sphi 0, %s25
    %s45 = sphi 0, %s45
    %s47 = sphi 0, %s45
    %s48 = sphi 0, %s47
    %s62 = sphi 0, %s48
    %s66 = sphi 0, %s66
    %s68 = sphi 0, %s66
    %s69 = sphi 0, %s68
    %s83 = sphi 0, %s69
    %s87 = sphi 0, %s87
    %s89 = sphi 0, %s87
    %s90 = sphi 0, %s89
    %s104 = sphi 0, %s90
    %s108 = sphi 0, %s108
    %s110 = sphi 0, %s108
    %s111 = sphi 0, %s110
    %s125 = sphi 0, %s111
    %s131 = sphi 0, %s133
    %s134 = sphi 0, %s131
    %s135 = sphi 0, %s134
    %s151 = sphi 0, %s135
  $region4: #{basic_block_ganilla.1} parent=0 // loop_header_branch
    %14 = sbr.rel (%p12) target = $region8
  $region5: #{basic_block_ganilla.1} parent=0 // loop_body
    %s16 = ssub.s32 %s11, 1
    %s17 = ssub.s32 %s11, 2
    %s18 = sadd.s32 %s11, 1
    %s19 = ssub.s32 %s11, %s18
    %p20 = scmp.eq.s32.totalorder %s19, 0
    %s22 = sadd.s32 %s21, 1
    %s23 = scalar_select %p20, %s21, %s22
    %p26 = pneg %p20
    %p27 = scmp.eq.s32.totalorder %s11, 1
    %p28 = por %p26, %p27
    %p29 = scmp.ne.s32.totalorder %s21, %s24
    %p30 = scmp.eq.s32.totalorder %s11, 0
    %p31 = por %p29, %p30
    %p32 = scmp.ne.s32.totalorder %s21, %s24
    %p33 = scmp.eq.s32.totalorder %s16, 1
    %p34 = por %p32, %p33
    %p35 = scmp.ne.s32.totalorder %s24, %s25
    %p36 = scmp.eq.s32.totalorder %s16, 0
    %p37 = por %p35, %p36
    %p38 = scmp.ne.s32.totalorder %s24, %s25
    %p39 = scmp.eq.s32.totalorder %s17, 1
    %p40 = por %p38, %p39
    %p42 = scmp.ne.s32.totalorder %s25, %s41
    %p43 = scmp.eq.s32.totalorder %s17, 0
    %p44 = por %p42, %p43
    %s46 = sadd.s32 %s45, 1
    %p49 = scmp.eq.s32.totalorder %s11, 1
    %p50 = scmp.ne.s32.totalorder %s45, %s47
    %p51 = scmp.eq.s32.totalorder %s11, 0
    %p52 = por %p50, %p51
    %p53 = scmp.ne.s32.totalorder %s45, %s47
    %p54 = scmp.eq.s32.totalorder %s16, 1
    %p55 = por %p53, %p54
    %p56 = scmp.ne.s32.totalorder %s47, %s48
    %p57 = scmp.eq.s32.totalorder %s16, 0
    %p58 = por %p56, %p57
    %p59 = scmp.ne.s32.totalorder %s47, %s48
    %p60 = scmp.eq.s32.totalorder %s17, 1
    %p61 = por %p59, %p60
    %p63 = scmp.ne.s32.totalorder %s48, %s62
    %p64 = scmp.eq.s32.totalorder %s17, 0
    %p65 = por %p63, %p64
    %s67 = sadd.s32 %s66, 1
    %p70 = scmp.eq.s32.totalorder %s11, 1
    %p71 = scmp.ne.s32.totalorder %s66, %s68
    %p72 = scmp.eq.s32.totalorder %s11, 0
    %p73 = por %p71, %p72
    %p74 = scmp.ne.s32.totalorder %s66, %s68
    %p75 = scmp.eq.s32.totalorder %s16, 1
    %p76 = por %p74, %p75
    %p77 = scmp.ne.s32.totalorder %s68, %s69
    %p78 = scmp.eq.s32.totalorder %s16, 0
    %p79 = por %p77, %p78
    %p80 = scmp.ne.s32.totalorder %s68, %s69
    %p81 = scmp.eq.s32.totalorder %s17, 1
    %p82 = por %p80, %p81
    %p84 = scmp.ne.s32.totalorder %s69, %s83
    %p85 = scmp.eq.s32.totalorder %s17, 0
    %p86 = por %p84, %p85
    %s88 = sadd.s32 %s87, 1
    %p91 = scmp.eq.s32.totalorder %s11, 1
    %p92 = scmp.ne.s32.totalorder %s87, %s89
    %p93 = scmp.eq.s32.totalorder %s11, 0
    %p94 = por %p92, %p93
    %p95 = scmp.ne.s32.totalorder %s87, %s89
    %p96 = scmp.eq.s32.totalorder %s16, 1
    %p97 = por %p95, %p96
    %p98 = scmp.ne.s32.totalorder %s89, %s90
    %p99 = scmp.eq.s32.totalorder %s16, 0
    %p100 = por %p98, %p99
    %p101 = scmp.ne.s32.totalorder %s89, %s90
    %p102 = scmp.eq.s32.totalorder %s17, 1
    %p103 = por %p101, %p102
    %p105 = scmp.ne.s32.totalorder %s90, %s104
    %p106 = scmp.eq.s32.totalorder %s17, 0
    %p107 = por %p105, %p106
    %s109 = sadd.s32 %s108, 1
    %p112 = scmp.eq.s32.totalorder %s11, 1
    %p113 = scmp.ne.s32.totalorder %s108, %s110
    %p114 = scmp.eq.s32.totalorder %s11, 0
    %p115 = por %p113, %p114
    %p116 = scmp.ne.s32.totalorder %s108, %s110
    %p117 = scmp.eq.s32.totalorder %s16, 1
    %p118 = por %p116, %p117
    %p119 = scmp.ne.s32.totalorder %s110, %s111
    %p120 = scmp.eq.s32.totalorder %s16, 0
    %p121 = por %p119, %p120
    %p122 = scmp.ne.s32.totalorder %s110, %s111
    %p123 = scmp.eq.s32.totalorder %s17, 1
    %p124 = por %p122, %p123
    %p126 = scmp.ne.s32.totalorder %s111, %s125
    %p127 = scmp.eq.s32.totalorder %s17, 0
    %p128 = por %p126, %p127
    %s129 = ssub.s32 %s11, %s18
    %p130 = scmp.eq.s32.totalorder %s129, 0
    %s132 = sadd.s32 %s131, 1
    %s133 = scalar_select %p130, %s131, %s132
    %p136 = pneg %p130
    %p137 = scmp.eq.s32.totalorder %s11, 1
    %p138 = por %p136, %p137
    %p139 = scmp.ne.s32.totalorder %s131, %s134
    %p140 = scmp.eq.s32.totalorder %s11, 0
    %p141 = por %p139, %p140
    %p142 = scmp.ne.s32.totalorder %s131, %s134
    %p143 = scmp.eq.s32.totalorder %s16, 1
    %p144 = por %p142, %p143
    %p145 = scmp.ne.s32.totalorder %s134, %s135
    %p146 = scmp.eq.s32.totalorder %s16, 0
    %p147 = por %p145, %p146
    %p148 = scmp.ne.s32.totalorder %s134, %s135
    %p149 = scmp.eq.s32.totalorder %s17, 1
    %p150 = por %p148, %p149
    %p152 = scmp.ne.s32.totalorder %s135, %s151
    %p153 = scmp.eq.s32.totalorder %s17, 0
    %p154 = por %p152, %p153
    %p155 = scmp.le.s32.totalorder 1, %s11
    %p156 = scmp.lt.s32.totalorder %s11, 3
    %p157 = pnand %p155, %p156
    %p158 = pneg %p157
    // Predicated region
    $region9: #{basic_block_ganilla.1} parent=5 // pred_check
      _
    $region10: #{basic_block_ganilla.1} parent=5 // pred_check_branch
      %160 = sbr.rel (%p157) target = $region12
    $region11: #{basic_block_ganilla.1} parent=5 // pred_region
      %s161 = ssub.s32 %s11, 1
      // Predicated region
      $region13: #{basic_block_ganilla.1} parent=11 // pred_check
        %p162 = pneg %p58
      $region14: #{basic_block_ganilla.1} parent=11 // pred_check_branch
        %164 = sbr.rel (%p162) target = $region16
      $region15: #{basic_block_ganilla.1} parent=11 // pred_region
        _
      $region16: #{basic_block_ganilla.1} parent=11 // pred_fallthru
        _
      // Predicated region
      $region17: #{basic_block_ganilla.1} parent=11 // pred_check
        %p165 = pneg %p79
      $region18: #{basic_block_ganilla.1} parent=11 // pred_check_branch
        %167 = sbr.rel (%p165) target = $region20
      $region19: #{basic_block_ganilla.1} parent=11 // pred_region
        _
      $region20: #{basic_block_ganilla.1} parent=11 // pred_fallthru
        _
      // Predicated region
      $region21: #{basic_block_ganilla.1} parent=11 // pred_check
        %p168 = pneg %p100
      $region22: #{basic_block_ganilla.1} parent=11 // pred_check_branch
        %170 = sbr.rel (%p168) target = $region24
      $region23: #{basic_block_ganilla.1} parent=11 // pred_region
        _
      $region24: #{basic_block_ganilla.1} parent=11 // pred_fallthru
        _
      // Predicated region
      $region25: #{basic_block_ganilla.1} parent=11 // pred_check
        %p171 = pneg %p121
      $region26: #{basic_block_ganilla.1} parent=11 // pred_check_branch
        %173 = sbr.rel (%p171) target = $region28
      $region27: #{basic_block_ganilla.1} parent=11 // pred_region
        _
      $region28: #{basic_block_ganilla.1} parent=11 // pred_fallthru
        _
    $region12: #{basic_block_ganilla.1} parent=5 // pred_fallthru
      _
    %p174 = scmp.lt.s32.totalorder %s11, 2
    // Predicated region
    $region29: #{basic_block_ganilla.1} parent=5 // pred_check
      %p175 = pneg %p174
    $region30: #{basic_block_ganilla.1} parent=5 // pred_check_branch
      %177 = sbr.rel (%p175) target = $region32
    $region31: #{basic_block_ganilla.1} parent=5 // pred_region
      // Predicated region
      $region33: #{basic_block_ganilla.1} parent=31 // pred_check
        %p178 = pneg %p31
      $region34: #{basic_block_ganilla.1} parent=31 // pred_check_branch
        %180 = sbr.rel (%p178) target = $region36
      $region35: #{basic_block_ganilla.1} parent=31 // pred_region
        %p181 = scmp.lt.s32.totalorder %s11, 1
        %s182 = scalar_select %p181, %s11, 1
        %s183 = smul.addr %s182, 54
        %s184 = smul.addr %s183, 8
        %s185 = scalar_lea.vmem %s0, %s184
      $region36: #{basic_block_ganilla.1} parent=31 // pred_fallthru
        _
    $region32: #{basic_block_ganilla.1} parent=5 // pred_fallthru
      _
    %p186 = scmp.le.s32.totalorder 1, %s11
    %p187 = scmp.lt.s32.totalorder %s11, 3
    %p188 = pnand %p186, %p187
    %p189 = pneg %p188
    // Predicated region
    $region37: #{basic_block_ganilla.1} parent=5 // pred_check
      _
    $region38: #{basic_block_ganilla.1} parent=5 // pred_check_branch
      %191 = sbr.rel (%p188) target = $region40
    $region39: #{basic_block_ganilla.1} parent=5 // pred_region
      %s192 = ssub.s32 %s11, 1
      %p193 = scmp.lt.s32.totalorder %s16, 1
      %s194 = scalar_select %p193, %s16, 1
      %s195 = smul.addr %s194, 54
      %s196 = smul.addr %s195, 8
      %s197 = scalar_lea.vmem %s0, %s196
      %p198 = pneg %p37
      %p199 = pneg %p34
      %p200 = pneg %p58
      %p201 = pneg %p55
      %p202 = pneg %p79
      %p203 = pneg %p76
      %p204 = pneg %p100
      %p205 = pneg %p97
      %p206 = pneg %p121
      %p207 = pneg %p118
      %p208 = pneg %p147
      %p209 = pneg %p144
      %p210 = scmp.lt.s32.totalorder %s16, 1
      %s211 = scalar_select %p210, %s16, 1
      %s212 = smul.addr %s211, 32
      %s213 = smul.addr %s212, 8
      %s214 = scalar_lea.vmem %s5, %s213
      %p215 = scmp.lt.s32.totalorder %s16, 1
      %s216 = scalar_select %p215, %s16, 1
      %s217 = smul.addr %s216, 54
      %s218 = smul.addr %s217, 8
      %s219 = scalar_lea.vmem %s0, %s218
      %p220 = scmp.lt.s32.totalorder %s16, 1
      %s221 = scalar_select %p220, %s16, 1
      %s222 = smul.addr %s221, 32
      %s223 = smul.addr %s222, 8
      %s224 = scalar_lea.vmem %s5, %s223
      %v225 = vld [vmem:[%s219] sm:$0xff]
      %v226 = vld [vmem:[%s219 + $0x8] sm:$0xff]
      %v227 = vld [vmem:[%s219 + $0x10] sm:$0x3]
      %v228 = vld [vmem:[%s219 + $0x18] sm:$0xff]
      %v229 = vld [vmem:[%s219 + $0x20] sm:$0xff]
      %v230 = vld [vmem:[%s219 + $0x28] sm:$0x3]
      %v231 = vld [vmem:[%s219 + $0x30] sm:$0xff]
      %v232 = vld [vmem:[%s219 + $0x38] sm:$0xff]
      %v233 = vld [vmem:[%s219 + $0x40] sm:$0x3]
      %v234 = vld [vmem:[%s219 + $0x48] sm:$0xff]
      %v235 = vld [vmem:[%s219 + $0x50] sm:$0xff]
      %v236 = vld [vmem:[%s219 + $0x58] sm:$0x3]
      %v237 = vld [vmem:[%s219 + $0x60] sm:$0xff]
      %v238 = vld [vmem:[%s219 + $0x68] sm:$0xff]
      %v239 = vld [vmem:[%s219 + $0x70] sm:$0x3]
      %v240 = vld [vmem:[%s219 + $0x78] sm:$0xff]
      %v241 = vld [vmem:[%s219 + $0x80] sm:$0xff]
      %v242 = vld [vmem:[%s219 + $0x88] sm:$0x3]
      %v243 = vld [vmem:[%s219 + $0x90] sm:$0xff]
      %v244 = vld [vmem:[%s219 + $0x98] sm:$0xff]
      %v245 = vld [vmem:[%s219 + $0xa0] sm:$0x3]
      %v246 = vld [vmem:[%s219 + $0xa8] sm:$0xff]
      %v247 = vld [vmem:[%s219 + $0xb0] sm:$0xff]
      %v248 = vld [vmem:[%s219 + $0xb8] sm:$0x3]
      %v249 = vld [vmem:[%s219 + $0xc0] sm:$0xff]
      %v250 = vld [vmem:[%s219 + $0xc8] sm:$0xff]
      %v251 = vld [vmem:[%s219 + $0xd0] sm:$0x3]
      %v252 = vld [vmem:[%s219 + $0xd8] sm:$0xff]
      %v253 = vld [vmem:[%s219 + $0xe0] sm:$0xff]
      %v254 = vld [vmem:[%s219 + $0xe8] sm:$0x3]
      %v255 = vld [vmem:[%s219 + $0xf0] sm:$0xff]
      %v256 = vld [vmem:[%s219 + $0xf8] sm:$0xff]
      %v257 = vld [vmem:[%s219 + $0x100] sm:$0x3]
      %v258 = vld [vmem:[%s219 + $0x108] sm:$0xff]
      %v259 = vld [vmem:[%s219 + $0x110] sm:$0xff]
      %v260 = vld [vmem:[%s219 + $0x118] sm:$0x3]
      %v261 = vld [vmem:[%s219 + $0x120] sm:$0xff]
      %v262 = vld [vmem:[%s219 + $0x128] sm:$0xff]
      %v263 = vld [vmem:[%s219 + $0x130] sm:$0x3]
      %v264 = vld [vmem:[%s219 + $0x138] sm:$0xff]
      %v265 = vld [vmem:[%s219 + $0x140] sm:$0xff]
      %v266 = vld [vmem:[%s219 + $0x148] sm:$0x3]
      %v267 = vld [vmem:[%s219 + $0x150] sm:$0xff]
      %v268 = vld [vmem:[%s219 + $0x158] sm:$0xff]
      %v269 = vld [vmem:[%s219 + $0x160] sm:$0x3]
      %v270 = vld [vmem:[%s219 + $0x168] sm:$0xff]
      %v271 = vld [vmem:[%s219 + $0x170] sm:$0xff]
      %v272 = vld [vmem:[%s219 + $0x178] sm:$0x3]
      %v273 = vld [vmem:[%s219 + $0x180] sm:$0xff]
      %v274 = vld [vmem:[%s219 + $0x188] sm:$0xff]
      %v275 = vld [vmem:[%s219 + $0x190] sm:$0x3]
      %v276 = vld [vmem:[%s219 + $0x198] sm:$0xff]
      %v277 = vld [vmem:[%s219 + $0x1a0] sm:$0xff]
      %v278 = vld [vmem:[%s219 + $0x1a8] sm:$0x3]
      %v279 = vld [vmem:[%s1] sm:$0xff]
      %v280 = vld [vmem:[%s1 + $0x8] sm:$0xff]
      %v281 = vld [vmem:[%s1 + $0x10] sm:$0xff]
      %v282 = vld [vmem:[%s1 + $0x18] sm:$0xff]
      %v283 = vld [vmem:[%s1 + $0x20] sm:$0xf]
      %vm332 = vcmask 1046528
      %v333 = vrot.slane %v225, 1
      %v334 = vrot.slane %v226, 1
      %v335 = vsel %vm332, %v333, %v334
      %v336 = vrot.slane %v227, 1
      %v337 = vsel %vm332, %v334, %v336
      %v338 = vrot.slane %v228, 1
      %v339 = vrot.slane %v229, 1
      %v340 = vsel %vm332, %v338, %v339
      %v341 = vrot.slane %v230, 1
      %v342 = vsel %vm332, %v339, %v341
      %v343 = vrot.slane %v231, 1
      %v344 = vrot.slane %v232, 1
      %v345 = vsel %vm332, %v343, %v344
      %v346 = vrot.slane %v233, 1
      %v347 = vsel %vm332, %v344, %v346
      %v348 = vrot.slane %v234, 1
      %v349 = vrot.slane %v235, 1
      %v350 = vsel %vm332, %v348, %v349
      %v351 = vrot.slane %v236, 1
      %v352 = vsel %vm332, %v349, %v351
      %v353 = vrot.slane %v237, 1
      %v354 = vrot.slane %v238, 1
      %v355 = vsel %vm332, %v353, %v354
      %v356 = vrot.slane %v239, 1
      %v357 = vsel %vm332, %v354, %v356
      %v358 = vrot.slane %v240, 1
      %v359 = vrot.slane %v241, 1
      %v360 = vsel %vm332, %v358, %v359
      %v361 = vrot.slane %v242, 1
      %v362 = vsel %vm332, %v359, %v361
      %v363 = vrot.slane %v243, 1
      %v364 = vrot.slane %v244, 1
      %v365 = vsel %vm332, %v363, %v364
      %v366 = vrot.slane %v245, 1
      %v367 = vsel %vm332, %v364, %v366
      %v368 = vrot.slane %v246, 1
      %v369 = vrot.slane %v247, 1
      %v370 = vsel %vm332, %v368, %v369
      %v371 = vrot.slane %v248, 1
      %v372 = vsel %vm332, %v369, %v371
      %v373 = vrot.slane %v249, 1
      %v374 = vrot.slane %v250, 1
      %v375 = vsel %vm332, %v373, %v374
      %v376 = vrot.slane %v251, 1
      %v377 = vsel %vm332, %v374, %v376
      %v378 = vrot.slane %v252, 1
      %v379 = vrot.slane %v253, 1
      %v380 = vsel %vm332, %v378, %v379
      %v381 = vrot.slane %v254, 1
      %v382 = vsel %vm332, %v379, %v381
      %v383 = vrot.slane %v255, 1
      %v384 = vrot.slane %v256, 1
      %v385 = vsel %vm332, %v383, %v384
      %v386 = vrot.slane %v257, 1
      %v387 = vsel %vm332, %v384, %v386
      %v388 = vrot.slane %v258, 1
      %v389 = vrot.slane %v259, 1
      %v390 = vsel %vm332, %v388, %v389
      %v391 = vrot.slane %v260, 1
      %v392 = vsel %vm332, %v389, %v391
      %v393 = vrot.slane %v261, 1
      %v394 = vrot.slane %v262, 1
      %v395 = vsel %vm332, %v393, %v394
      %v396 = vrot.slane %v263, 1
      %v397 = vsel %vm332, %v394, %v396
      %v398 = vrot.slane %v264, 1
      %v399 = vrot.slane %v265, 1
      %v400 = vsel %vm332, %v398, %v399
      %v401 = vrot.slane %v266, 1
      %v402 = vsel %vm332, %v399, %v401
      %v403 = vrot.slane %v267, 1
      %v404 = vrot.slane %v268, 1
      %v405 = vsel %vm332, %v403, %v404
      %v406 = vrot.slane %v269, 1
      %v407 = vsel %vm332, %v404, %v406
      %v408 = vrot.slane %v270, 1
      %v409 = vrot.slane %v271, 1
      %v410 = vsel %vm332, %v408, %v409
      %v411 = vrot.slane %v272, 1
      %v412 = vsel %vm332, %v409, %v411
      %vm413 = vcmask 1045504
      %v414 = vrot.slane %v225, 2
      %v415 = vrot.slane %v226, 2
      %v416 = vsel %vm413, %v414, %v415
      %v417 = vrot.slane %v227, 2
      %v418 = vsel %vm413, %v415, %v417
      %v419 = vrot.slane %v228, 2
      %v420 = vrot.slane %v229, 2
      %v421 = vsel %vm413, %v419, %v420
      %v422 = vrot.slane %v230, 2
      %v423 = vsel %vm413, %v420, %v422
      %v424 = vrot.slane %v231, 2
      %v425 = vrot.slane %v232, 2
      %v426 = vsel %vm413, %v424, %v425
      %v427 = vrot.slane %v233, 2
      %v428 = vsel %vm413, %v425, %v427
      %v429 = vrot.slane %v234, 2
      %v430 = vrot.slane %v235, 2
      %v431 = vsel %vm413, %v429, %v430
      %v432 = vrot.slane %v236, 2
      %v433 = vsel %vm413, %v430, %v432
      %v434 = vrot.slane %v237, 2
      %v435 = vrot.slane %v238, 2
      %v436 = vsel %vm413, %v434, %v435
      %v437 = vrot.slane %v239, 2
      %v438 = vsel %vm413, %v435, %v437
      %v439 = vrot.slane %v240, 2
      %v440 = vrot.slane %v241, 2
      %v441 = vsel %vm413, %v439, %v440
      %v442 = vrot.slane %v242, 2
      %v443 = vsel %vm413, %v440, %v442
      %v444 = vrot.slane %v243, 2
      %v445 = vrot.slane %v244, 2
      %v446 = vsel %vm413, %v444, %v445
      %v447 = vrot.slane %v245, 2
      %v448 = vsel %vm413, %v445, %v447
      %v449 = vrot.slane %v246, 2
      %v450 = vrot.slane %v247, 2
      %v451 = vsel %vm413, %v449, %v450
      %v452 = vrot.slane %v248, 2
      %v453 = vsel %vm413, %v450, %v452
      %v454 = vrot.slane %v249, 2
      %v455 = vrot.slane %v250, 2
      %v456 = vsel %vm413, %v454, %v455
      %v457 = vrot.slane %v251, 2
      %v458 = vsel %vm413, %v455, %v457
      %v459 = vrot.slane %v252, 2
      %v460 = vrot.slane %v253, 2
      %v461 = vsel %vm413, %v459, %v460
      %v462 = vrot.slane %v254, 2
      %v463 = vsel %vm413, %v460, %v462
      %v464 = vrot.slane %v255, 2
      %v465 = vrot.slane %v256, 2
      %v466 = vsel %vm413, %v464, %v465
      %v467 = vrot.slane %v257, 2
      %v468 = vsel %vm413, %v465, %v467
      %v469 = vrot.slane %v258, 2
      %v470 = vrot.slane %v259, 2
      %v471 = vsel %vm413, %v469, %v470
      %v472 = vrot.slane %v260, 2
      %v473 = vsel %vm413, %v470, %v472
      %v474 = vrot.slane %v261, 2
      %v475 = vrot.slane %v262, 2
      %v476 = vsel %vm413, %v474, %v475
      %v477 = vrot.slane %v263, 2
      %v478 = vsel %vm413, %v475, %v477
      %v479 = vrot.slane %v264, 2
      %v480 = vrot.slane %v265, 2
      %v481 = vsel %vm413, %v479, %v480
      %v482 = vrot.slane %v266, 2
      %v483 = vsel %vm413, %v480, %v482
      %v484 = vrot.slane %v267, 2
      %v485 = vrot.slane %v268, 2
      %v486 = vsel %vm413, %v484, %v485
      %v487 = vrot.slane %v269, 2
      %v488 = vsel %vm413, %v485, %v487
      %v489 = vrot.slane %v270, 2
      %v490 = vrot.slane %v271, 2
      %v491 = vsel %vm413, %v489, %v490
      %v492 = vrot.slane %v272, 2
      %v493 = vsel %vm413, %v490, %v492
      %v497 = vrot.slane %v273, 1
      %v498 = vrot.slane %v274, 1
      %v499 = vsel %vm332, %v497, %v498
      %v500 = vrot.slane %v275, 1
      %v501 = vsel %vm332, %v498, %v500
      %v502 = vrot.slane %v273, 2
      %v503 = vrot.slane %v274, 2
      %v504 = vsel %vm413, %v502, %v503
      %v505 = vrot.slane %v275, 2
      %v506 = vsel %vm413, %v503, %v505
      %v510 = vrot.slane %v276, 1
      %v511 = vrot.slane %v277, 1
      %v512 = vsel %vm332, %v510, %v511
      %v513 = vrot.slane %v278, 1
      %v514 = vsel %vm332, %v511, %v513
      %v515 = vrot.slane %v276, 2
      %v516 = vrot.slane %v277, 2
      %v517 = vsel %vm413, %v515, %v516
      %v518 = vrot.slane %v278, 2
      %v519 = vsel %vm413, %v516, %v518
      %520 = vrot.lane.b32.xlu0 %v335, 4
      %v521 = vpop.permute.xlu0 %520
      %522 = vrot.lane.b32.xlu0 %v337, 4
      %v523 = vpop.permute.xlu0 %522
      %524 = vrot.lane.b32.xlu0 %v340, 4
      %v525 = vpop.permute.xlu0 %524
      %526 = vrot.lane.b32.xlu0 %v342, 4
      %v527 = vpop.permute.xlu0 %526
      %528 = vrot.lane.b32.xlu0 %v345, 4
      %v529 = vpop.permute.xlu0 %528
      %530 = vrot.lane.b32.xlu0 %v347, 4
      %v531 = vpop.permute.xlu0 %530
      %532 = vrot.lane.b32.xlu0 %v350, 4
      %v533 = vpop.permute.xlu0 %532
      %534 = vrot.lane.b32.xlu0 %v352, 4
      %v535 = vpop.permute.xlu0 %534
      %536 = vrot.lane.b32.xlu0 %v355, 4
      %v537 = vpop.permute.xlu0 %536
      %538 = vrot.lane.b32.xlu0 %v357, 4
      %v539 = vpop.permute.xlu0 %538
      %540 = vrot.lane.b32.xlu0 %v360, 4
      %v541 = vpop.permute.xlu0 %540
      %542 = vrot.lane.b32.xlu0 %v362, 4
      %v543 = vpop.permute.xlu0 %542
      %544 = vrot.lane.b32.xlu0 %v365, 4
      %v545 = vpop.permute.xlu0 %544
      %546 = vrot.lane.b32.xlu0 %v367, 4
      %v547 = vpop.permute.xlu0 %546
      %548 = vrot.lane.b32.xlu0 %v370, 4
      %v549 = vpop.permute.xlu0 %548
      %550 = vrot.lane.b32.xlu0 %v372, 4
      %v551 = vpop.permute.xlu0 %550
      %552 = vrot.lane.b32.xlu0 %v375, 4
      %v553 = vpop.permute.xlu0 %552
      %554 = vrot.lane.b32.xlu0 %v377, 4
      %v555 = vpop.permute.xlu0 %554
      %556 = vrot.lane.b32.xlu0 %v380, 4
      %v557 = vpop.permute.xlu0 %556
      %558 = vrot.lane.b32.xlu0 %v382, 4
      %v559 = vpop.permute.xlu0 %558
      %560 = vrot.lane.b32.xlu0 %v385, 4
      %v561 = vpop.permute.xlu0 %560
      %562 = vrot.lane.b32.xlu0 %v387, 4
      %v563 = vpop.permute.xlu0 %562
      %564 = vrot.lane.b32.xlu0 %v390, 4
      %v565 = vpop.permute.xlu0 %564
      %566 = vrot.lane.b32.xlu0 %v392, 4
      %v567 = vpop.permute.xlu0 %566
      %568 = vrot.lane.b32.xlu0 %v395, 4
      %v569 = vpop.permute.xlu0 %568
      %570 = vrot.lane.b32.xlu0 %v397, 4
      %v571 = vpop.permute.xlu0 %570
      %572 = vrot.lane.b32.xlu0 %v400, 4
      %v573 = vpop.permute.xlu0 %572
      %574 = vrot.lane.b32.xlu0 %v402, 4
      %v575 = vpop.permute.xlu0 %574
      %576 = vrot.lane.b32.xlu0 %v405, 4
      %v577 = vpop.permute.xlu0 %576
      %578 = vrot.lane.b32.xlu0 %v407, 4
      %v579 = vpop.permute.xlu0 %578
      %580 = vrot.lane.b32.xlu0 %v410, 4
      %v581 = vpop.permute.xlu0 %580
      %582 = vrot.lane.b32.xlu0 %v412, 4
      %v583 = vpop.permute.xlu0 %582
      %616 = vrot.lane.b32.xlu0 %v416, 8
      %v617 = vpop.permute.xlu0 %616
      %618 = vrot.lane.b32.xlu0 %v418, 8
      %v619 = vpop.permute.xlu0 %618
      %620 = vrot.lane.b32.xlu0 %v421, 8
      %v621 = vpop.permute.xlu0 %620
      %622 = vrot.lane.b32.xlu0 %v423, 8
      %v623 = vpop.permute.xlu0 %622
      %624 = vrot.lane.b32.xlu0 %v426, 8
      %v625 = vpop.permute.xlu0 %624
      %626 = vrot.lane.b32.xlu0 %v428, 8
      %v627 = vpop.permute.xlu0 %626
      %628 = vrot.lane.b32.xlu0 %v431, 8
      %v629 = vpop.permute.xlu0 %628
      %630 = vrot.lane.b32.xlu0 %v433, 8
      %v631 = vpop.permute.xlu0 %630
      %632 = vrot.lane.b32.xlu0 %v436, 8
      %v633 = vpop.permute.xlu0 %632
      %634 = vrot.lane.b32.xlu0 %v438, 8
      %v635 = vpop.permute.xlu0 %634
      %636 = vrot.lane.b32.xlu0 %v441, 8
      %v637 = vpop.permute.xlu0 %636
      %638 = vrot.lane.b32.xlu0 %v443, 8
      %v639 = vpop.permute.xlu0 %638
      %640 = vrot.lane.b32.xlu0 %v446, 8
      %v641 = vpop.permute.xlu0 %640
      %642 = vrot.lane.b32.xlu0 %v448, 8
      %v643 = vpop.permute.xlu0 %642
      %644 = vrot.lane.b32.xlu0 %v451, 8
      %v645 = vpop.permute.xlu0 %644
      %646 = vrot.lane.b32.xlu0 %v453, 8
      %v647 = vpop.permute.xlu0 %646
      %648 = vrot.lane.b32.xlu0 %v456, 8
      %v649 = vpop.permute.xlu0 %648
      %650 = vrot.lane.b32.xlu0 %v458, 8
      %v651 = vpop.permute.xlu0 %650
      %652 = vrot.lane.b32.xlu0 %v461, 8
      %v653 = vpop.permute.xlu0 %652
      %654 = vrot.lane.b32.xlu0 %v463, 8
      %v655 = vpop.permute.xlu0 %654
      %656 = vrot.lane.b32.xlu0 %v466, 8
      %v657 = vpop.permute.xlu0 %656
      %658 = vrot.lane.b32.xlu0 %v468, 8
      %v659 = vpop.permute.xlu0 %658
      %660 = vrot.lane.b32.xlu0 %v471, 8
      %v661 = vpop.permute.xlu0 %660
      %662 = vrot.lane.b32.xlu0 %v473, 8
      %v663 = vpop.permute.xlu0 %662
      %664 = vrot.lane.b32.xlu0 %v476, 8
      %v665 = vpop.permute.xlu0 %664
      %666 = vrot.lane.b32.xlu0 %v478, 8
      %v667 = vpop.permute.xlu0 %666
      %668 = vrot.lane.b32.xlu0 %v481, 8
      %v669 = vpop.permute.xlu0 %668
      %670 = vrot.lane.b32.xlu0 %v483, 8
      %v671 = vpop.permute.xlu0 %670
      %672 = vrot.lane.b32.xlu0 %v486, 8
      %v673 = vpop.permute.xlu0 %672
      %674 = vrot.lane.b32.xlu0 %v488, 8
      %v675 = vpop.permute.xlu0 %674
      %676 = vrot.lane.b32.xlu0 %v491, 8
      %v677 = vpop.permute.xlu0 %676
      %678 = vrot.lane.b32.xlu0 %v493, 8
      %v679 = vpop.permute.xlu0 %678
      %712 = vrot.lane.b32.xlu0 %v228, 12
      %v713 = vpop.permute.xlu0 %712
      %714 = vrot.lane.b32.xlu0 %v229, 12
      %v715 = vpop.permute.xlu0 %714
      %716 = vrot.lane.b32.xlu0 %v231, 12
      %v717 = vpop.permute.xlu0 %716
      %718 = vrot.lane.b32.xlu0 %v232, 12
      %v719 = vpop.permute.xlu0 %718
      %720 = vrot.lane.b32.xlu0 %v234, 12
      %v721 = vpop.permute.xlu0 %720
      %722 = vrot.lane.b32.xlu0 %v235, 12
      %v723 = vpop.permute.xlu0 %722
      %724 = vrot.lane.b32.xlu0 %v237, 12
      %v725 = vpop.permute.xlu0 %724
      %726 = vrot.lane.b32.xlu0 %v238, 12
      %v727 = vpop.permute.xlu0 %726
      %728 = vrot.lane.b32.xlu0 %v240, 12
      %v729 = vpop.permute.xlu0 %728
      %730 = vrot.lane.b32.xlu0 %v241, 12
      %v731 = vpop.permute.xlu0 %730
      %732 = vrot.lane.b32.xlu0 %v243, 12
      %v733 = vpop.permute.xlu0 %732
      %734 = vrot.lane.b32.xlu0 %v244, 12
      %v735 = vpop.permute.xlu0 %734
      %736 = vrot.lane.b32.xlu0 %v246, 12
      %v737 = vpop.permute.xlu0 %736
      %738 = vrot.lane.b32.xlu0 %v247, 12
      %v739 = vpop.permute.xlu0 %738
      %740 = vrot.lane.b32.xlu0 %v249, 12
      %v741 = vpop.permute.xlu0 %740
      %742 = vrot.lane.b32.xlu0 %v250, 12
      %v743 = vpop.permute.xlu0 %742
      %744 = vrot.lane.b32.xlu0 %v252, 12
      %v745 = vpop.permute.xlu0 %744
      %746 = vrot.lane.b32.xlu0 %v253, 12
      %v747 = vpop.permute.xlu0 %746
      %748 = vrot.lane.b32.xlu0 %v255, 12
      %v749 = vpop.permute.xlu0 %748
      %750 = vrot.lane.b32.xlu0 %v256, 12
      %v751 = vpop.permute.xlu0 %750
      %752 = vrot.lane.b32.xlu0 %v258, 12
      %v753 = vpop.permute.xlu0 %752
      %754 = vrot.lane.b32.xlu0 %v259, 12
      %v755 = vpop.permute.xlu0 %754
      %756 = vrot.lane.b32.xlu0 %v261, 12
      %v757 = vpop.permute.xlu0 %756
      %758 = vrot.lane.b32.xlu0 %v262, 12
      %v759 = vpop.permute.xlu0 %758
      %760 = vrot.lane.b32.xlu0 %v264, 12
      %v761 = vpop.permute.xlu0 %760
      %762 = vrot.lane.b32.xlu0 %v265, 12
      %v763 = vpop.permute.xlu0 %762
      %764 = vrot.lane.b32.xlu0 %v267, 12
      %v765 = vpop.permute.xlu0 %764
      %766 = vrot.lane.b32.xlu0 %v268, 12
      %v767 = vpop.permute.xlu0 %766
      %768 = vrot.lane.b32.xlu0 %v270, 12
      %v769 = vpop.permute.xlu0 %768
      %770 = vrot.lane.b32.xlu0 %v271, 12
      %v771 = vpop.permute.xlu0 %770
      %772 = vrot.lane.b32.xlu0 %v273, 12
      %v773 = vpop.permute.xlu0 %772
      %774 = vrot.lane.b32.xlu0 %v274, 12
      %v775 = vpop.permute.xlu0 %774
      %808 = vrot.lane.b32.xlu0 %v340, 16
      %v809 = vpop.permute.xlu0 %808
      %810 = vrot.lane.b32.xlu0 %v342, 16
      %v811 = vpop.permute.xlu0 %810
      %812 = vrot.lane.b32.xlu0 %v345, 16
      %v813 = vpop.permute.xlu0 %812
      %814 = vrot.lane.b32.xlu0 %v347, 16
      %v815 = vpop.permute.xlu0 %814
      %816 = vrot.lane.b32.xlu0 %v350, 16
      %v817 = vpop.permute.xlu0 %816
      %818 = vrot.lane.b32.xlu0 %v352, 16
      %v819 = vpop.permute.xlu0 %818
      %820 = vrot.lane.b32.xlu0 %v355, 16
      %v821 = vpop.permute.xlu0 %820
      %822 = vrot.lane.b32.xlu0 %v357, 16
      %v823 = vpop.permute.xlu0 %822
      %824 = vrot.lane.b32.xlu0 %v360, 16
      %v825 = vpop.permute.xlu0 %824
      %826 = vrot.lane.b32.xlu0 %v362, 16
      %v827 = vpop.permute.xlu0 %826
      %828 = vrot.lane.b32.xlu0 %v365, 16
      %v829 = vpop.permute.xlu0 %828
      %830 = vrot.lane.b32.xlu0 %v367, 16
      %v831 = vpop.permute.xlu0 %830
      %832 = vrot.lane.b32.xlu0 %v370, 16
      %v833 = vpop.permute.xlu0 %832
      %834 = vrot.lane.b32.xlu0 %v372, 16
      %v835 = vpop.permute.xlu0 %834
      %836 = vrot.lane.b32.xlu0 %v375, 16
      %v837 = vpop.permute.xlu0 %836
      %838 = vrot.lane.b32.xlu0 %v377, 16
      %v839 = vpop.permute.xlu0 %838
      %840 = vrot.lane.b32.xlu0 %v380, 16
      %v841 = vpop.permute.xlu0 %840
      %842 = vrot.lane.b32.xlu0 %v382, 16
      %v843 = vpop.permute.xlu0 %842
      %844 = vrot.lane.b32.xlu0 %v385, 16
      %v845 = vpop.permute.xlu0 %844
      %846 = vrot.lane.b32.xlu0 %v387, 16
      %v847 = vpop.permute.xlu0 %846
      %848 = vrot.lane.b32.xlu0 %v390, 16
      %v849 = vpop.permute.xlu0 %848
      %850 = vrot.lane.b32.xlu0 %v392, 16
      %v851 = vpop.permute.xlu0 %850
      %852 = vrot.lane.b32.xlu0 %v395, 16
      %v853 = vpop.permute.xlu0 %852
      %854 = vrot.lane.b32.xlu0 %v397, 16
      %v855 = vpop.permute.xlu0 %854
      %856 = vrot.lane.b32.xlu0 %v400, 16
      %v857 = vpop.permute.xlu0 %856
      %858 = vrot.lane.b32.xlu0 %v402, 16
      %v859 = vpop.permute.xlu0 %858
      %860 = vrot.lane.b32.xlu0 %v405, 16
      %v861 = vpop.permute.xlu0 %860
      %862 = vrot.lane.b32.xlu0 %v407, 16
      %v863 = vpop.permute.xlu0 %862
      %864 = vrot.lane.b32.xlu0 %v410, 16
      %v865 = vpop.permute.xlu0 %864
      %866 = vrot.lane.b32.xlu0 %v412, 16
      %v867 = vpop.permute.xlu0 %866
      %868 = vrot.lane.b32.xlu0 %v499, 16
      %v869 = vpop.permute.xlu0 %868
      %870 = vrot.lane.b32.xlu0 %v501, 16
      %v871 = vpop.permute.xlu0 %870
      %904 = vrot.lane.b32.xlu0 %v421, 20
      %v905 = vpop.permute.xlu0 %904
      %906 = vrot.lane.b32.xlu0 %v423, 20
      %v907 = vpop.permute.xlu0 %906
      %908 = vrot.lane.b32.xlu0 %v426, 20
      %v909 = vpop.permute.xlu0 %908
      %910 = vrot.lane.b32.xlu0 %v428, 20
      %v911 = vpop.permute.xlu0 %910
      %912 = vrot.lane.b32.xlu0 %v431, 20
      %v913 = vpop.permute.xlu0 %912
      %914 = vrot.lane.b32.xlu0 %v433, 20
      %v915 = vpop.permute.xlu0 %914
      %916 = vrot.lane.b32.xlu0 %v436, 20
      %v917 = vpop.permute.xlu0 %916
      %918 = vrot.lane.b32.xlu0 %v438, 20
      %v919 = vpop.permute.xlu0 %918
      %920 = vrot.lane.b32.xlu0 %v441, 20
      %v921 = vpop.permute.xlu0 %920
      %922 = vrot.lane.b32.xlu0 %v443, 20
      %v923 = vpop.permute.xlu0 %922
      %924 = vrot.lane.b32.xlu0 %v446, 20
      %v925 = vpop.permute.xlu0 %924
      %926 = vrot.lane.b32.xlu0 %v448, 20
      %v927 = vpop.permute.xlu0 %926
      %928 = vrot.lane.b32.xlu0 %v451, 20
      %v929 = vpop.permute.xlu0 %928
      %930 = vrot.lane.b32.xlu0 %v453, 20
      %v931 = vpop.permute.xlu0 %930
      %932 = vrot.lane.b32.xlu0 %v456, 20
      %v933 = vpop.permute.xlu0 %932
      %934 = vrot.lane.b32.xlu0 %v458, 20
      %v935 = vpop.permute.xlu0 %934
      %936 = vrot.lane.b32.xlu0 %v461, 20
      %v937 = vpop.permute.xlu0 %936
      %938 = vrot.lane.b32.xlu0 %v463, 20
      %v939 = vpop.permute.xlu0 %938
      %940 = vrot.lane.b32.xlu0 %v466, 20
      %v941 = vpop.permute.xlu0 %940
      %942 = vrot.lane.b32.xlu0 %v468, 20
      %v943 = vpop.permute.xlu0 %942
      %944 = vrot.lane.b32.xlu0 %v471, 20
      %v945 = vpop.permute.xlu0 %944
      %946 = vrot.lane.b32.xlu0 %v473, 20
      %v947 = vpop.permute.xlu0 %946
      %948 = vrot.lane.b32.xlu0 %v476, 20
      %v949 = vpop.permute.xlu0 %948
      %950 = vrot.lane.b32.xlu0 %v478, 20
      %v951 = vpop.permute.xlu0 %950
      %952 = vrot.lane.b32.xlu0 %v481, 20
      %v953 = vpop.permute.xlu0 %952
      %954 = vrot.lane.b32.xlu0 %v483, 20
      %v955 = vpop.permute.xlu0 %954
      %956 = vrot.lane.b32.xlu0 %v486, 20
      %v957 = vpop.permute.xlu0 %956
      %958 = vrot.lane.b32.xlu0 %v488, 20
      %v959 = vpop.permute.xlu0 %958
      %960 = vrot.lane.b32.xlu0 %v491, 20
      %v961 = vpop.permute.xlu0 %960
      %962 = vrot.lane.b32.xlu0 %v493, 20
      %v963 = vpop.permute.xlu0 %962
      %964 = vrot.lane.b32.xlu0 %v504, 20
      %v965 = vpop.permute.xlu0 %964
      %966 = vrot.lane.b32.xlu0 %v506, 20
      %v967 = vpop.permute.xlu0 %966
      %1000 = vrot.lane.b32.xlu0 %v231, 24
      %v1001 = vpop.permute.xlu0 %1000
      %1002 = vrot.lane.b32.xlu0 %v232, 24
      %v1003 = vpop.permute.xlu0 %1002
      %1004 = vrot.lane.b32.xlu0 %v234, 24
      %v1005 = vpop.permute.xlu0 %1004
      %1006 = vrot.lane.b32.xlu0 %v235, 24
      %v1007 = vpop.permute.xlu0 %1006
      %1008 = vrot.lane.b32.xlu0 %v237, 24
      %v1009 = vpop.permute.xlu0 %1008
      %1010 = vrot.lane.b32.xlu0 %v238, 24
      %v1011 = vpop.permute.xlu0 %1010
      %1012 = vrot.lane.b32.xlu0 %v240, 24
      %v1013 = vpop.permute.xlu0 %1012
      %1014 = vrot.lane.b32.xlu0 %v241, 24
      %v1015 = vpop.permute.xlu0 %1014
      %1016 = vrot.lane.b32.xlu0 %v243, 24
      %v1017 = vpop.permute.xlu0 %1016
      %1018 = vrot.lane.b32.xlu0 %v244, 24
      %v1019 = vpop.permute.xlu0 %1018
      %1020 = vrot.lane.b32.xlu0 %v246, 24
      %v1021 = vpop.permute.xlu0 %1020
      %1022 = vrot.lane.b32.xlu0 %v247, 24
      %v1023 = vpop.permute.xlu0 %1022
      %1024 = vrot.lane.b32.xlu0 %v249, 24
      %v1025 = vpop.permute.xlu0 %1024
      %1026 = vrot.lane.b32.xlu0 %v250, 24
      %v1027 = vpop.permute.xlu0 %1026
      %1028 = vrot.lane.b32.xlu0 %v252, 24
      %v1029 = vpop.permute.xlu0 %1028
      %1030 = vrot.lane.b32.xlu0 %v253, 24
      %v1031 = vpop.permute.xlu0 %1030
      %1032 = vrot.lane.b32.xlu0 %v255, 24
      %v1033 = vpop.permute.xlu0 %1032
      %1034 = vrot.lane.b32.xlu0 %v256, 24
      %v1035 = vpop.permute.xlu0 %1034
      %1036 = vrot.lane.b32.xlu0 %v258, 24
      %v1037 = vpop.permute.xlu0 %1036
      %1038 = vrot.lane.b32.xlu0 %v259, 24
      %v1039 = vpop.permute.xlu0 %1038
      %1040 = vrot.lane.b32.xlu0 %v261, 24
      %v1041 = vpop.permute.xlu0 %1040
      %1042 = vrot.lane.b32.xlu0 %v262, 24
      %v1043 = vpop.permute.xlu0 %1042
      %1044 = vrot.lane.b32.xlu0 %v264, 24
      %v1045 = vpop.permute.xlu0 %1044
      %1046 = vrot.lane.b32.xlu0 %v265, 24
      %v1047 = vpop.permute.xlu0 %1046
      %1048 = vrot.lane.b32.xlu0 %v267, 24
      %v1049 = vpop.permute.xlu0 %1048
      %1050 = vrot.lane.b32.xlu0 %v268, 24
      %v1051 = vpop.permute.xlu0 %1050
      %1052 = vrot.lane.b32.xlu0 %v270, 24
      %v1053 = vpop.permute.xlu0 %1052
      %1054 = vrot.lane.b32.xlu0 %v271, 24
      %v1055 = vpop.permute.xlu0 %1054
      %1056 = vrot.lane.b32.xlu0 %v273, 24
      %v1057 = vpop.permute.xlu0 %1056
      %1058 = vrot.lane.b32.xlu0 %v274, 24
      %v1059 = vpop.permute.xlu0 %1058
      %1060 = vrot.lane.b32.xlu0 %v276, 24
      %v1061 = vpop.permute.xlu0 %1060
      %1062 = vrot.lane.b32.xlu0 %v277, 24
      %v1063 = vpop.permute.xlu0 %1062
      %1096 = vrot.lane.b32.xlu0 %v345, 28
      %v1097 = vpop.permute.xlu0 %1096
      %1098 = vrot.lane.b32.xlu0 %v347, 28
      %v1099 = vpop.permute.xlu0 %1098
      %1100 = vrot.lane.b32.xlu0 %v350, 28
      %v1101 = vpop.permute.xlu0 %1100
      %1102 = vrot.lane.b32.xlu0 %v352, 28
      %v1103 = vpop.permute.xlu0 %1102
      %1104 = vrot.lane.b32.xlu0 %v355, 28
      %v1105 = vpop.permute.xlu0 %1104
      %1106 = vrot.lane.b32.xlu0 %v357, 28
      %v1107 = vpop.permute.xlu0 %1106
      %1108 = vrot.lane.b32.xlu0 %v360, 28
      %v1109 = vpop.permute.xlu0 %1108
      %1110 = vrot.lane.b32.xlu0 %v362, 28
      %v1111 = vpop.permute.xlu0 %1110
      %1112 = vrot.lane.b32.xlu0 %v365, 28
      %v1113 = vpop.permute.xlu0 %1112
      %1114 = vrot.lane.b32.xlu0 %v367, 28
      %v1115 = vpop.permute.xlu0 %1114
      %1116 = vrot.lane.b32.xlu0 %v370, 28
      %v1117 = vpop.permute.xlu0 %1116
      %1118 = vrot.lane.b32.xlu0 %v372, 28
      %v1119 = vpop.permute.xlu0 %1118
      %1120 = vrot.lane.b32.xlu0 %v375, 28
      %v1121 = vpop.permute.xlu0 %1120
      %1122 = vrot.lane.b32.xlu0 %v377, 28
      %v1123 = vpop.permute.xlu0 %1122
      %1124 = vrot.lane.b32.xlu0 %v380, 28
      %v1125 = vpop.permute.xlu0 %1124
      %1126 = vrot.lane.b32.xlu0 %v382, 28
      %v1127 = vpop.permute.xlu0 %1126
      %1128 = vrot.lane.b32.xlu0 %v385, 28
      %v1129 = vpop.permute.xlu0 %1128
      %1130 = vrot.lane.b32.xlu0 %v387, 28
      %v1131 = vpop.permute.xlu0 %1130
      %1132 = vrot.lane.b32.xlu0 %v390, 28
      %v1133 = vpop.permute.xlu0 %1132
      %1134 = vrot.lane.b32.xlu0 %v392, 28
      %v1135 = vpop.permute.xlu0 %1134
      %1136 = vrot.lane.b32.xlu0 %v395, 28
      %v1137 = vpop.permute.xlu0 %1136
      %1138 = vrot.lane.b32.xlu0 %v397, 28
      %v1139 = vpop.permute.xlu0 %1138
      %1140 = vrot.lane.b32.xlu0 %v400, 28
      %v1141 = vpop.permute.xlu0 %1140
      %1142 = vrot.lane.b32.xlu0 %v402, 28
      %v1143 = vpop.permute.xlu0 %1142
      %1144 = vrot.lane.b32.xlu0 %v405, 28
      %v1145 = vpop.permute.xlu0 %1144
      %1146 = vrot.lane.b32.xlu0 %v407, 28
      %v1147 = vpop.permute.xlu0 %1146
      %1148 = vrot.lane.b32.xlu0 %v410, 28
      %v1149 = vpop.permute.xlu0 %1148
      %1150 = vrot.lane.b32.xlu0 %v412, 28
      %v1151 = vpop.permute.xlu0 %1150
      %1152 = vrot.lane.b32.xlu0 %v499, 28
      %v1153 = vpop.permute.xlu0 %1152
      %1154 = vrot.lane.b32.xlu0 %v501, 28
      %v1155 = vpop.permute.xlu0 %1154
      %1156 = vrot.lane.b32.xlu0 %v512, 28
      %v1157 = vpop.permute.xlu0 %1156
      %1158 = vrot.lane.b32.xlu0 %v514, 28
      %v1159 = vpop.permute.xlu0 %1158
      %1192 = vrot.lane.b32.xlu0 %v426, 32
      %v1193 = vpop.permute.xlu0 %1192
      %1194 = vrot.lane.b32.xlu0 %v428, 32
      %v1195 = vpop.permute.xlu0 %1194
      %1196 = vrot.lane.b32.xlu0 %v431, 32
      %v1197 = vpop.permute.xlu0 %1196
      %1198 = vrot.lane.b32.xlu0 %v433, 32
      %v1199 = vpop.permute.xlu0 %1198
      %1200 = vrot.lane.b32.xlu0 %v436, 32
      %v1201 = vpop.permute.xlu0 %1200
      %1202 = vrot.lane.b32.xlu0 %v438, 32
      %v1203 = vpop.permute.xlu0 %1202
      %1204 = vrot.lane.b32.xlu0 %v441, 32
      %v1205 = vpop.permute.xlu0 %1204
      %1206 = vrot.lane.b32.xlu0 %v443, 32
      %v1207 = vpop.permute.xlu0 %1206
      %1208 = vrot.lane.b32.xlu0 %v446, 32
      %v1209 = vpop.permute.xlu0 %1208
      %1210 = vrot.lane.b32.xlu0 %v448, 32
      %v1211 = vpop.permute.xlu0 %1210
      %1212 = vrot.lane.b32.xlu0 %v451, 32
      %v1213 = vpop.permute.xlu0 %1212
      %1214 = vrot.lane.b32.xlu0 %v453, 32
      %v1215 = vpop.permute.xlu0 %1214
      %1216 = vrot.lane.b32.xlu0 %v456, 32
      %v1217 = vpop.permute.xlu0 %1216
      %1218 = vrot.lane.b32.xlu0 %v458, 32
      %v1219 = vpop.permute.xlu0 %1218
      %1220 = vrot.lane.b32.xlu0 %v461, 32
      %v1221 = vpop.permute.xlu0 %1220
      %1222 = vrot.lane.b32.xlu0 %v463, 32
      %v1223 = vpop.permute.xlu0 %1222
      %1224 = vrot.lane.b32.xlu0 %v466, 32
      %v1225 = vpop.permute.xlu0 %1224
      %1226 = vrot.lane.b32.xlu0 %v468, 32
      %v1227 = vpop.permute.xlu0 %1226
      %1228 = vrot.lane.b32.xlu0 %v471, 32
      %v1229 = vpop.permute.xlu0 %1228
      %1230 = vrot.lane.b32.xlu0 %v473, 32
      %v1231 = vpop.permute.xlu0 %1230
      %1232 = vrot.lane.b32.xlu0 %v476, 32
      %v1233 = vpop.permute.xlu0 %1232
      %1234 = vrot.lane.b32.xlu0 %v478, 32
      %v1235 = vpop.permute.xlu0 %1234
      %1236 = vrot.lane.b32.xlu0 %v481, 32
      %v1237 = vpop.permute.xlu0 %1236
      %1238 = vrot.lane.b32.xlu0 %v483, 32
      %v1239 = vpop.permute.xlu0 %1238
      %1240 = vrot.lane.b32.xlu0 %v486, 32
      %v1241 = vpop.permute.xlu0 %1240
      %1242 = vrot.lane.b32.xlu0 %v488, 32
      %v1243 = vpop.permute.xlu0 %1242
      %1244 = vrot.lane.b32.xlu0 %v491, 32
      %v1245 = vpop.permute.xlu0 %1244
      %1246 = vrot.lane.b32.xlu0 %v493, 32
      %v1247 = vpop.permute.xlu0 %1246
      %1248 = vrot.lane.b32.xlu0 %v504, 32
      %v1249 = vpop.permute.xlu0 %1248
      %1250 = vrot.lane.b32.xlu0 %v506, 32
      %v1251 = vpop.permute.xlu0 %1250
      %1252 = vrot.lane.b32.xlu0 %v517, 32
      %v1253 = vpop.permute.xlu0 %1252
      %1254 = vrot.lane.b32.xlu0 %v519, 32
      %v1255 = vpop.permute.xlu0 %1254
      %vm1288 = vcmask 31744
      %v1289 = vsel %vm1288, %v225, %v521
      %v1290 = vsel %vm1288, %v226, %v523
      %v1291 = vsel %vm1288, %v228, %v525
      %v1292 = vsel %vm1288, %v229, %v527
      %v1293 = vsel %vm1288, %v231, %v529
      %v1294 = vsel %vm1288, %v232, %v531
      %v1295 = vsel %vm1288, %v234, %v533
      %v1296 = vsel %vm1288, %v235, %v535
      %v1297 = vsel %vm1288, %v237, %v537
      %v1298 = vsel %vm1288, %v238, %v539
      %v1299 = vsel %vm1288, %v240, %v541
      %v1300 = vsel %vm1288, %v241, %v543
      %v1301 = vsel %vm1288, %v243, %v545
      %v1302 = vsel %vm1288, %v244, %v547
      %v1303 = vsel %vm1288, %v246, %v549
      %v1304 = vsel %vm1288, %v247, %v551
      %v1305 = vsel %vm1288, %v249, %v553
      %v1306 = vsel %vm1288, %v250, %v555
      %v1307 = vsel %vm1288, %v252, %v557
      %v1308 = vsel %vm1288, %v253, %v559
      %v1309 = vsel %vm1288, %v255, %v561
      %v1310 = vsel %vm1288, %v256, %v563
      %v1311 = vsel %vm1288, %v258, %v565
      %v1312 = vsel %vm1288, %v259, %v567
      %v1313 = vsel %vm1288, %v261, %v569
      %v1314 = vsel %vm1288, %v262, %v571
      %v1315 = vsel %vm1288, %v264, %v573
      %v1316 = vsel %vm1288, %v265, %v575
      %v1317 = vsel %vm1288, %v267, %v577
      %v1318 = vsel %vm1288, %v268, %v579
      %v1319 = vsel %vm1288, %v270, %v581
      %v1320 = vsel %vm1288, %v271, %v583
      %vm1321 = vcmask 64512
      %v1322 = vsel %vm1321, %v1289, %v617
      %v1323 = vsel %vm1321, %v1290, %v619
      %v1324 = vsel %vm1321, %v1291, %v621
      %v1325 = vsel %vm1321, %v1292, %v623
      %v1326 = vsel %vm1321, %v1293, %v625
      %v1327 = vsel %vm1321, %v1294, %v627
      %v1328 = vsel %vm1321, %v1295, %v629
      %v1329 = vsel %vm1321, %v1296, %v631
      %v1330 = vsel %vm1321, %v1297, %v633
      %v1331 = vsel %vm1321, %v1298, %v635
      %v1332 = vsel %vm1321, %v1299, %v637
      %v1333 = vsel %vm1321, %v1300, %v639
      %v1334 = vsel %vm1321, %v1301, %v641
      %v1335 = vsel %vm1321, %v1302, %v643
      %v1336 = vsel %vm1321, %v1303, %v645
      %v1337 = vsel %vm1321, %v1304, %v647
      %v1338 = vsel %vm1321, %v1305, %v649
      %v1339 = vsel %vm1321, %v1306, %v651
      %v1340 = vsel %vm1321, %v1307, %v653
      %v1341 = vsel %vm1321, %v1308, %v655
      %v1342 = vsel %vm1321, %v1309, %v657
      %v1343 = vsel %vm1321, %v1310, %v659
      %v1344 = vsel %vm1321, %v1311, %v661
      %v1345 = vsel %vm1321, %v1312, %v663
      %v1346 = vsel %vm1321, %v1313, %v665
      %v1347 = vsel %vm1321, %v1314, %v667
      %v1348 = vsel %vm1321, %v1315, %v669
      %v1349 = vsel %vm1321, %v1316, %v671
      %v1350 = vsel %vm1321, %v1317, %v673
      %v1351 = vsel %vm1321, %v1318, %v675
      %v1352 = vsel %vm1321, %v1319, %v677
      %v1353 = vsel %vm1321, %v1320, %v679
      %vm1354 = vcmask 97280
      %v1355 = vsel %vm1354, %v1322, %v713
      %v1356 = vsel %vm1354, %v1323, %v715
      %v1357 = vsel %vm1354, %v1324, %v717
      %v1358 = vsel %vm1354, %v1325, %v719
      %v1359 = vsel %vm1354, %v1326, %v721
      %v1360 = vsel %vm1354, %v1327, %v723
      %v1361 = vsel %vm1354, %v1328, %v725
      %v1362 = vsel %vm1354, %v1329, %v727
      %v1363 = vsel %vm1354, %v1330, %v729
      %v1364 = vsel %vm1354, %v1331, %v731
      %v1365 = vsel %vm1354, %v1332, %v733
      %v1366 = vsel %vm1354, %v1333, %v735
      %v1367 = vsel %vm1354, %v1334, %v737
      %v1368 = vsel %vm1354, %v1335, %v739
      %v1369 = vsel %vm1354, %v1336, %v741
      %v1370 = vsel %vm1354, %v1337, %v743
      %v1371 = vsel %vm1354, %v1338, %v745
      %v1372 = vsel %vm1354, %v1339, %v747
      %v1373 = vsel %vm1354, %v1340, %v749
      %v1374 = vsel %vm1354, %v1341, %v751
      %v1375 = vsel %vm1354, %v1342, %v753
      %v1376 = vsel %vm1354, %v1343, %v755
      %v1377 = vsel %vm1354, %v1344, %v757
      %v1378 = vsel %vm1354, %v1345, %v759
      %v1379 = vsel %vm1354, %v1346, %v761
      %v1380 = vsel %vm1354, %v1347, %v763
      %v1381 = vsel %vm1354, %v1348, %v765
      %v1382 = vsel %vm1354, %v1349, %v767
      %v1383 = vsel %vm1354, %v1350, %v769
      %v1384 = vsel %vm1354, %v1351, %v771
      %v1385 = vsel %vm1354, %v1352, %v773
      %v1386 = vsel %vm1354, %v1353, %v775
      %vm1387 = vcmask 130048
      %v1388 = vsel %vm1387, %v1355, %v809
      %v1389 = vsel %vm1387, %v1356, %v811
      %v1390 = vsel %vm1387, %v1357, %v813
      %v1391 = vsel %vm1387, %v1358, %v815
      %v1392 = vsel %vm1387, %v1359, %v817
      %v1393 = vsel %vm1387, %v1360, %v819
      %v1394 = vsel %vm1387, %v1361, %v821
      %v1395 = vsel %vm1387, %v1362, %v823
      %v1396 = vsel %vm1387, %v1363, %v825
      %v1397 = vsel %vm1387, %v1364, %v827
      %v1398 = vsel %vm1387, %v1365, %v829
      %v1399 = vsel %vm1387, %v1366, %v831
      %v1400 = vsel %vm1387, %v1367, %v833
      %v1401 = vsel %vm1387, %v1368, %v835
      %v1402 = vsel %vm1387, %v1369, %v837
      %v1403 = vsel %vm1387, %v1370, %v839
      %v1404 = vsel %vm1387, %v1371, %v841
      %v1405 = vsel %vm1387, %v1372, %v843
      %v1406 = vsel %vm1387, %v1373, %v845
      %v1407 = vsel %vm1387, %v1374, %v847
      %v1408 = vsel %vm1387, %v1375, %v849
      %v1409 = vsel %vm1387, %v1376, %v851
      %v1410 = vsel %vm1387, %v1377, %v853
      %v1411 = vsel %vm1387, %v1378, %v855
      %v1412 = vsel %vm1387, %v1379, %v857
      %v1413 = vsel %vm1387, %v1380, %v859
      %v1414 = vsel %vm1387, %v1381, %v861
      %v1415 = vsel %vm1387, %v1382, %v863
      %v1416 = vsel %vm1387, %v1383, %v865
      %v1417 = vsel %vm1387, %v1384, %v867
      %v1418 = vsel %vm1387, %v1385, %v869
      %v1419 = vsel %vm1387, %v1386, %v871
      %vm1420 = vcmask 162816
      %v1421 = vsel %vm1420, %v1388, %v905
      %v1422 = vsel %vm1420, %v1389, %v907
      %v1423 = vsel %vm1420, %v1390, %v909
      %v1424 = vsel %vm1420, %v1391, %v911
      %v1425 = vsel %vm1420, %v1392, %v913
      %v1426 = vsel %vm1420, %v1393, %v915
      %v1427 = vsel %vm1420, %v1394, %v917
      %v1428 = vsel %vm1420, %v1395, %v919
      %v1429 = vsel %vm1420, %v1396, %v921
      %v1430 = vsel %vm1420, %v1397, %v923
      %v1431 = vsel %vm1420, %v1398, %v925
      %v1432 = vsel %vm1420, %v1399, %v927
      %v1433 = vsel %vm1420, %v1400, %v929
      %v1434 = vsel %vm1420, %v1401, %v931
      %v1435 = vsel %vm1420, %v1402, %v933
      %v1436 = vsel %vm1420, %v1403, %v935
      %v1437 = vsel %vm1420, %v1404, %v937
      %v1438 = vsel %vm1420, %v1405, %v939
      %v1439 = vsel %vm1420, %v1406, %v941
      %v1440 = vsel %vm1420, %v1407, %v943
      %v1441 = vsel %vm1420, %v1408, %v945
      %v1442 = vsel %vm1420, %v1409, %v947
      %v1443 = vsel %vm1420, %v1410, %v949
      %v1444 = vsel %vm1420, %v1411, %v951
      %v1445 = vsel %vm1420, %v1412, %v953
      %v1446 = vsel %vm1420, %v1413, %v955
      %v1447 = vsel %vm1420, %v1414, %v957
      %v1448 = vsel %vm1420, %v1415, %v959
      %v1449 = vsel %vm1420, %v1416, %v961
      %v1450 = vsel %vm1420, %v1417, %v963
      %v1451 = vsel %vm1420, %v1418, %v965
      %v1452 = vsel %vm1420, %v1419, %v967
      %vm1453 = vcmask 195584
      %v1454 = vsel %vm1453, %v1421, %v1001
      %v1455 = vsel %vm1453, %v1422, %v1003
      %v1456 = vsel %vm1453, %v1423, %v1005
      %v1457 = vsel %vm1453, %v1424, %v1007
      %v1458 = vsel %vm1453, %v1425, %v1009
      %v1459 = vsel %vm1453, %v1426, %v1011
      %v1460 = vsel %vm1453, %v1427, %v1013
      %v1461 = vsel %vm1453, %v1428, %v1015
      %v1462 = vsel %vm1453, %v1429, %v1017
      %v1463 = vsel %vm1453, %v1430, %v1019
      %v1464 = vsel %vm1453, %v1431, %v1021
      %v1465 = vsel %vm1453, %v1432, %v1023
      %v1466 = vsel %vm1453, %v1433, %v1025
      %v1467 = vsel %vm1453, %v1434, %v1027
      %v1468 = vsel %vm1453, %v1435, %v1029
      %v1469 = vsel %vm1453, %v1436, %v1031
      %v1470 = vsel %vm1453, %v1437, %v1033
      %v1471 = vsel %vm1453, %v1438, %v1035
      %v1472 = vsel %vm1453, %v1439, %v1037
      %v1473 = vsel %vm1453, %v1440, %v1039
      %v1474 = vsel %vm1453, %v1441, %v1041
      %v1475 = vsel %vm1453, %v1442, %v1043
      %v1476 = vsel %vm1453, %v1443, %v1045
      %v1477 = vsel %vm1453, %v1444, %v1047
      %v1478 = vsel %vm1453, %v1445, %v1049
      %v1479 = vsel %vm1453, %v1446, %v1051
      %v1480 = vsel %vm1453, %v1447, %v1053
      %v1481 = vsel %vm1453, %v1448, %v1055
      %v1482 = vsel %vm1453, %v1449, %v1057
      %v1483 = vsel %vm1453, %v1450, %v1059
      %v1484 = vsel %vm1453, %v1451, %v1061
      %v1485 = vsel %vm1453, %v1452, %v1063
      %vm1486 = vcmask 228352
      %v1487 = vsel %vm1486, %v1454, %v1097
      %v1488 = vsel %vm1486, %v1455, %v1099
      %v1489 = vsel %vm1486, %v1456, %v1101
      %v1490 = vsel %vm1486, %v1457, %v1103
      %v1491 = vsel %vm1486, %v1458, %v1105
      %v1492 = vsel %vm1486, %v1459, %v1107
      %v1493 = vsel %vm1486, %v1460, %v1109
      %v1494 = vsel %vm1486, %v1461, %v1111
      %v1495 = vsel %vm1486, %v1462, %v1113
      %v1496 = vsel %vm1486, %v1463, %v1115
      %v1497 = vsel %vm1486, %v1464, %v1117
      %v1498 = vsel %vm1486, %v1465, %v1119
      %v1499 = vsel %vm1486, %v1466, %v1121
      %v1500 = vsel %vm1486, %v1467, %v1123
      %v1501 = vsel %vm1486, %v1468, %v1125
      %v1502 = vsel %vm1486, %v1469, %v1127
      %v1503 = vsel %vm1486, %v1470, %v1129
      %v1504 = vsel %vm1486, %v1471, %v1131
      %v1505 = vsel %vm1486, %v1472, %v1133
      %v1506 = vsel %vm1486, %v1473, %v1135
      %v1507 = vsel %vm1486, %v1474, %v1137
      %v1508 = vsel %vm1486, %v1475, %v1139
      %v1509 = vsel %vm1486, %v1476, %v1141
      %v1510 = vsel %vm1486, %v1477, %v1143
      %v1511 = vsel %vm1486, %v1478, %v1145
      %v1512 = vsel %vm1486, %v1479, %v1147
      %v1513 = vsel %vm1486, %v1480, %v1149
      %v1514 = vsel %vm1486, %v1481, %v1151
      %v1515 = vsel %vm1486, %v1482, %v1153
      %v1516 = vsel %vm1486, %v1483, %v1155
      %v1517 = vsel %vm1486, %v1484, %v1157
      %v1518 = vsel %vm1486, %v1485, %v1159
      %vm1519 = vcmask 261120
      %v1520 = vsel %vm1519, %v1487, %v1193
      %v1521 = vsel %vm1519, %v1488, %v1195
      %v1522 = vsel %vm1519, %v1489, %v1197
      %v1523 = vsel %vm1519, %v1490, %v1199
      %v1524 = vsel %vm1519, %v1491, %v1201
      %v1525 = vsel %vm1519, %v1492, %v1203
      %v1526 = vsel %vm1519, %v1493, %v1205
      %v1527 = vsel %vm1519, %v1494, %v1207
      %v1528 = vsel %vm1519, %v1495, %v1209
      %v1529 = vsel %vm1519, %v1496, %v1211
      %v1530 = vsel %vm1519, %v1497, %v1213
      %v1531 = vsel %vm1519, %v1498, %v1215
      %v1532 = vsel %vm1519, %v1499, %v1217
      %v1533 = vsel %vm1519, %v1500, %v1219
      %v1534 = vsel %vm1519, %v1501, %v1221
      %v1535 = vsel %vm1519, %v1502, %v1223
      %v1536 = vsel %vm1519, %v1503, %v1225
      %v1537 = vsel %vm1519, %v1504, %v1227
      %v1538 = vsel %vm1519, %v1505, %v1229
      %v1539 = vsel %vm1519, %v1506, %v1231
      %v1540 = vsel %vm1519, %v1507, %v1233
      %v1541 = vsel %vm1519, %v1508, %v1235
      %v1542 = vsel %vm1519, %v1509, %v1237
      %v1543 = vsel %vm1519, %v1510, %v1239
      %v1544 = vsel %vm1519, %v1511, %v1241
      %v1545 = vsel %vm1519, %v1512, %v1243
      %v1546 = vsel %vm1519, %v1513, %v1245
      %v1547 = vsel %vm1519, %v1514, %v1247
      %v1548 = vsel %vm1519, %v1515, %v1249
      %v1549 = vsel %vm1519, %v1516, %v1251
      %v1550 = vsel %vm1519, %v1517, %v1253
      %v1551 = vsel %vm1519, %v1518, %v1255
      %vm1552 = vcmask 293888
      %v1554 = vsel %vm1552, %v1520, 0
      %v1557 = vsel %vm1552, %v1521, 0
      %v1560 = vsel %vm1552, %v1522, 0
      %v1563 = vsel %vm1552, %v1523, 0
      %v1566 = vsel %vm1552, %v1524, 0
      %v1569 = vsel %vm1552, %v1525, 0
      %v1572 = vsel %vm1552, %v1526, 0
      %v1575 = vsel %vm1552, %v1527, 0
      %v1578 = vsel %vm1552, %v1528, 0
      %v1581 = vsel %vm1552, %v1529, 0
      %v1584 = vsel %vm1552, %v1530, 0
      %v1587 = vsel %vm1552, %v1531, 0
      %v1590 = vsel %vm1552, %v1532, 0
      %v1593 = vsel %vm1552, %v1533, 0
      %v1596 = vsel %vm1552, %v1534, 0
      %v1599 = vsel %vm1552, %v1535, 0
      %v1602 = vsel %vm1552, %v1536, 0
      %v1605 = vsel %vm1552, %v1537, 0
      %v1608 = vsel %vm1552, %v1538, 0
      %v1611 = vsel %vm1552, %v1539, 0
      %v1614 = vsel %vm1552, %v1540, 0
      %v1617 = vsel %vm1552, %v1541, 0
      %v1620 = vsel %vm1552, %v1542, 0
      %v1623 = vsel %vm1552, %v1543, 0
      %v1626 = vsel %vm1552, %v1544, 0
      %v1629 = vsel %vm1552, %v1545, 0
      %v1632 = vsel %vm1552, %v1546, 0
      %v1635 = vsel %vm1552, %v1547, 0
      %v1638 = vsel %vm1552, %v1548, 0
      %v1641 = vsel %vm1552, %v1549, 0
      %v1644 = vsel %vm1552, %v1550, 0
      %v1647 = vsel %vm1552, %v1551, 0
      %vm1649 = vcmask 1043456
      %v1651 = vsel %vm1649, %v283, 0
      %1653 = vmatprep.subr.mxu0 0.0
      %1654 = vmatpush1.msra.mxu0 %v279
      %1655 = vmatprep.subr.mxu0 0.0
      %1656 = vmatpush1.msra.mxu0 %v280
      %1657 = vmatprep.subr.mxu0 0.0
      %1658 = vmatpush1.msra.mxu0 %v281
      %1659 = vmatprep.subr.mxu0 0.0
      %1660 = vmatpush1.msra.mxu0 %v282
      %1661 = vmatprep.subr.mxu0 0.0
      %1662 = vmatpush1.msra.mxu0 %v1651
      %1663 = vmatprep.subr.mxu0 0.0
      %1664 = vmatpush1.msra.mxu0 0.0
      %1665 = vmatprep.subr.mxu0 0.0
      %1666 = vmatpush1.msra.mxu0 0.0
      %1667 = vmatprep.subr.mxu0 0.0
      %1668 = vmatpush1.msra.mxu0 0.0
      %1669 = vmatprep.subr.mxu0 0.0
      %1670 = vmatpush1.msra.mxu0 0.0
      %1671 = vmatprep.subr.mxu0 0.0
      %1672 = vmatpush1.msra.mxu0 0.0
      %1673 = vmatprep.subr.mxu0 0.0
      %1674 = vmatpush1.msra.mxu0 0.0
      %1675 = vmatprep.subr.mxu0 0.0
      %1676 = vmatpush1.msra.mxu0 0.0
      %1677 = vmatprep.subr.mxu0 0.0
      %1678 = vmatpush1.msra.mxu0 0.0
      %1679 = vmatprep.subr.mxu0 0.0
      %1680 = vmatpush1.msra.mxu0 0.0
      %1681 = vmatprep.subr.mxu0 0.0
      %1682 = vmatpush1.msra.mxu0 0.0
      %1683 = vmatprep.subr.mxu0 0.0
      %1684 = vmatpush1.msra.mxu0 0.0
      %1685 = vmatprep.subr.mxu0 0.0
      %1686 = vmatpush1.msra.mxu0 0.0
      %1687 = vmatprep.subr.mxu0 0.0
      %1688 = vmatpush1.msra.mxu0 0.0
      %1689 = vmatprep.subr.mxu0 0.0
      %1690 = vmatpush1.msra.mxu0 0.0
      %1691 = vmatprep.subr.mxu0 0.0
      %1692 = vmatpush1.msra.mxu0 0.0
      %1693 = vmatprep.subr.mxu0 0.0
      %1694 = vmatpush1.msra.mxu0 0.0
      %1695 = vmatprep.subr.mxu0 0.0
      %1696 = vmatpush1.msra.mxu0 0.0
      %1697 = vmatprep.subr.mxu0 0.0
      %1698 = vmatpush1.msra.mxu0 0.0
      %1699 = vmatprep.subr.mxu0 0.0
      %1700 = vmatpush1.msra.mxu0 0.0
      %1701 = vmatprep.subr.mxu0 0.0
      %1702 = vmatpush1.msra.mxu0 0.0
      %1703 = vmatprep.subr.mxu0 0.0
      %1704 = vmatpush1.msra.mxu0 0.0
      %1705 = vmatprep.subr.mxu0 0.0
      %1706 = vmatpush1.msra.mxu0 0.0
      %1707 = vmatprep.subr.mxu0 0.0
      %1708 = vmatpush1.msra.mxu0 0.0
      %1709 = vmatprep.subr.mxu0 0.0
      %1710 = vmatpush1.msra.mxu0 0.0
      %1711 = vmatprep.subr.mxu0 0.0
      %1712 = vmatpush1.msra.mxu0 0.0
      %1713 = vmatprep.subr.mxu0 0.0
      %1714 = vmatpush1.msra.mxu0 0.0
      %1715 = vmatprep.subr.mxu0 0.0
      %1716 = vmatpush1.msra.mxu0 0.0
      %1717 = vmatprep.mubr.f32.mxu0 0.0
      %1718 = vmatmul.mubr.f32.gmra.mrb[0].mxu0 %v1554
      %v1719 = vpop.f32.mrb[0].mxu0
      %v1720 = vadd.f32 0.0, %v1719
      %v1721 = vpop.f32.mrb[0].mxu0
      %1722 = vmatprep.mubr.f32.mxu0 0.0
      %1723 = vmatmul.mubr.f32.gmra.mrb[0].mxu0 %v1557
      %v1724 = vpop.f32.mrb[0].mxu0
      %v1725 = vadd.f32 0.0, %v1724
      %v1726 = vpop.f32.mrb[0].mxu0
      %1727 = vmatprep.mubr.f32.mxu0 0.0
      %1728 = vmatmul.mubr.f32.gmra.mrb[0].mxu0 %v1560
      %v1729 = vpop.f32.mrb[0].mxu0
      %v1730 = vadd.f32 0.0, %v1729
      %v1731 = vpop.f32.mrb[0].mxu0
      %1732 = vmatprep.mubr.f32.mxu0 0.0
      %1733 = vmatmul.mubr.f32.gmra.mrb[0].mxu0 %v1563
      %v1734 = vpop.f32.mrb[0].mxu0
      %v1735 = vadd.f32 0.0, %v1734
      %v1736 = vpop.f32.mrb[0].mxu0
      %1737 = vmatprep.mubr.f32.mxu0 0.0
      %1738 = vmatmul.mubr.f32.gmra.mrb[0].mxu0 %v1566
      %v1739 = vpop.f32.mrb[0].mxu0
      %v1740 = vadd.f32 0.0, %v1739
      %v1741 = vpop.f32.mrb[0].mxu0
      %1742 = vmatprep.mubr.f32.mxu0 0.0
      %1743 = vmatmul.mubr.f32.gmra.mrb[0].mxu0 %v1569
      %v1744 = vpop.f32.mrb[0].mxu0
      %v1745 = vadd.f32 0.0, %v1744
      %v1746 = vpop.f32.mrb[0].mxu0
      %1747 = vmatprep.mubr.f32.mxu0 0.0
      %1748 = vmatmul.mubr.f32.gmra.mrb[0].mxu0 %v1572
      %v1749 = vpop.f32.mrb[0].mxu0
      %v1750 = vadd.f32 0.0, %v1749
      %v1751 = vpop.f32.mrb[0].mxu0
      %1752 = vmatprep.mubr.f32.mxu0 0.0
      %1753 = vmatmul.mubr.f32.gmra.mrb[0].mxu0 %v1575
      %v1754 = vpop.f32.mrb[0].mxu0
      %v1755 = vadd.f32 0.0, %v1754
      %v1756 = vpop.f32.mrb[0].mxu0
      %1757 = vmatprep.mubr.f32.mxu0 0.0
      %1758 = vmatmul.mubr.f32.gmra.mrb[0].mxu0 %v1578
      %v1759 = vpop.f32.mrb[0].mxu0
      %v1760 = vadd.f32 0.0, %v1759
      %v1761 = vpop.f32.mrb[0].mxu0
      %1762 = vmatprep.mubr.f32.mxu0 0.0
      %1763 = vmatmul.mubr.f32.gmra.mrb[0].mxu0 %v1581
      %v1764 = vpop.f32.mrb[0].mxu0
      %v1765 = vadd.f32 0.0, %v1764
      %v1766 = vpop.f32.mrb[0].mxu0
      %1767 = vmatprep.mubr.f32.mxu0 0.0
      %1768 = vmatmul.mubr.f32.gmra.mrb[0].mxu0 %v1584
      %v1769 = vpop.f32.mrb[0].mxu0
      %v1770 = vadd.f32 0.0, %v1769
      %v1771 = vpop.f32.mrb[0].mxu0
      %1772 = vmatprep.mubr.f32.mxu0 0.0
      %1773 = vmatmul.mubr.f32.gmra.mrb[0].mxu0 %v1587
      %v1774 = vpop.f32.mrb[0].mxu0
      %v1775 = vadd.f32 0.0, %v1774
      %v1776 = vpop.f32.mrb[0].mxu0
      %1777 = vmatprep.mubr.f32.mxu0 0.0
      %1778 = vmatmul.mubr.f32.gmra.mrb[0].mxu0 %v1590
      %v1779 = vpop.f32.mrb[0].mxu0
      %v1780 = vadd.f32 0.0, %v1779
      %v1781 = vpop.f32.mrb[0].mxu0
      %1782 = vmatprep.mubr.f32.mxu0 0.0
      %1783 = vmatmul.mubr.f32.gmra.mrb[0].mxu0 %v1593
      %v1784 = vpop.f32.mrb[0].mxu0
      %v1785 = vadd.f32 0.0, %v1784
      %v1786 = vpop.f32.mrb[0].mxu0
      %1787 = vmatprep.mubr.f32.mxu0 0.0
      %1788 = vmatmul.mubr.f32.gmra.mrb[0].mxu0 %v1596
      %v1789 = vpop.f32.mrb[0].mxu0
      %v1790 = vadd.f32 0.0, %v1789
      %v1791 = vpop.f32.mrb[0].mxu0
      %1792 = vmatprep.mubr.f32.mxu0 0.0
      %1793 = vmatmul.mubr.f32.gmra.mrb[0].mxu0 %v1599
      %v1794 = vpop.f32.mrb[0].mxu0
      %v1795 = vadd.f32 0.0, %v1794
      %v1796 = vpop.f32.mrb[0].mxu0
      %1797 = vmatprep.mubr.f32.mxu0 0.0
      %1798 = vmatmul.mubr.f32.gmra.mrb[0].mxu0 %v1602
      %v1799 = vpop.f32.mrb[0].mxu0
      %v1800 = vadd.f32 0.0, %v1799
      %v1801 = vpop.f32.mrb[0].mxu0
      %1802 = vmatprep.mubr.f32.mxu0 0.0
      %1803 = vmatmul.mubr.f32.gmra.mrb[0].mxu0 %v1605
      %v1804 = vpop.f32.mrb[0].mxu0
      %v1805 = vadd.f32 0.0, %v1804
      %v1806 = vpop.f32.mrb[0].mxu0
      %1807 = vmatprep.mubr.f32.mxu0 0.0
      %1808 = vmatmul.mubr.f32.gmra.mrb[0].mxu0 %v1608
      %v1809 = vpop.f32.mrb[0].mxu0
      %v1810 = vadd.f32 0.0, %v1809
      %v1811 = vpop.f32.mrb[0].mxu0
      %1812 = vmatprep.mubr.f32.mxu0 0.0
      %1813 = vmatmul.mubr.f32.gmra.mrb[0].mxu0 %v1611
      %v1814 = vpop.f32.mrb[0].mxu0
      %v1815 = vadd.f32 0.0, %v1814
      %v1816 = vpop.f32.mrb[0].mxu0
      %1817 = vmatprep.mubr.f32.mxu0 0.0
      %1818 = vmatmul.mubr.f32.gmra.mrb[0].mxu0 %v1614
      %v1819 = vpop.f32.mrb[0].mxu0
      %v1820 = vadd.f32 0.0, %v1819
      %v1821 = vpop.f32.mrb[0].mxu0
      %1822 = vmatprep.mubr.f32.mxu0 0.0
      %1823 = vmatmul.mubr.f32.gmra.mrb[0].mxu0 %v1617
      %v1824 = vpop.f32.mrb[0].mxu0
      %v1825 = vadd.f32 0.0, %v1824
      %v1826 = vpop.f32.mrb[0].mxu0
      %1827 = vmatprep.mubr.f32.mxu0 0.0
      %1828 = vmatmul.mubr.f32.gmra.mrb[0].mxu0 %v1620
      %v1829 = vpop.f32.mrb[0].mxu0
      %v1830 = vadd.f32 0.0, %v1829
      %v1831 = vpop.f32.mrb[0].mxu0
      %1832 = vmatprep.mubr.f32.mxu0 0.0
      %1833 = vmatmul.mubr.f32.gmra.mrb[0].mxu0 %v1623
      %v1834 = vpop.f32.mrb[0].mxu0
      %v1835 = vadd.f32 0.0, %v1834
      %v1836 = vpop.f32.mrb[0].mxu0
      %1837 = vmatprep.mubr.f32.mxu0 0.0
      %1838 = vmatmul.mubr.f32.gmra.mrb[0].mxu0 %v1626
      %v1839 = vpop.f32.mrb[0].mxu0
      %v1840 = vadd.f32 0.0, %v1839
      %v1841 = vpop.f32.mrb[0].mxu0
      %1842 = vmatprep.mubr.f32.mxu0 0.0
      %1843 = vmatmul.mubr.f32.gmra.mrb[0].mxu0 %v1629
      %v1844 = vpop.f32.mrb[0].mxu0
      %v1845 = vadd.f32 0.0, %v1844
      %v1846 = vpop.f32.mrb[0].mxu0
      %1847 = vmatprep.mubr.f32.mxu0 0.0
      %1848 = vmatmul.mubr.f32.gmra.mrb[0].mxu0 %v1632
      %v1849 = vpop.f32.mrb[0].mxu0
      %v1850 = vadd.f32 0.0, %v1849
      %v1851 = vpop.f32.mrb[0].mxu0
      %1852 = vmatprep.mubr.f32.mxu0 0.0
      %1853 = vmatmul.mubr.f32.gmra.mrb[0].mxu0 %v1635
      %v1854 = vpop.f32.mrb[0].mxu0
      %v1855 = vadd.f32 0.0, %v1854
      %v1856 = vpop.f32.mrb[0].mxu0
      %1857 = vmatprep.mubr.f32.mxu0 0.0
      %1858 = vmatmul.mubr.f32.gmra.mrb[0].mxu0 %v1638
      %v1859 = vpop.f32.mrb[0].mxu0
      %v1860 = vadd.f32 0.0, %v1859
      %v1861 = vpop.f32.mrb[0].mxu0
      %1862 = vmatprep.mubr.f32.mxu0 0.0
      %1863 = vmatmul.mubr.f32.gmra.mrb[0].mxu0 %v1641
      %v1864 = vpop.f32.mrb[0].mxu0
      %v1865 = vadd.f32 0.0, %v1864
      %v1866 = vpop.f32.mrb[0].mxu0
      %1867 = vmatprep.mubr.f32.mxu0 0.0
      %1868 = vmatmul.mubr.f32.gmra.mrb[0].mxu0 %v1644
      %v1869 = vpop.f32.mrb[0].mxu0
      %v1870 = vadd.f32 0.0, %v1869
      %v1871 = vpop.f32.mrb[0].mxu0
      %1872 = vmatprep.mubr.f32.mxu0 0.0
      %1873 = vmatmul.mubr.f32.gmra.mrb[0].mxu0 %v1647
      %v1874 = vpop.f32.mrb[0].mxu0
      %v1875 = vadd.f32 0.0, %v1874
      %v1876 = vpop.f32.mrb[0].mxu0
      %1877 = vdwg.mxu0
      %v1878 = vmax.f32 %v1720, 0.0
      %v1879 = vmax.f32 %v1725, 0.0
      %v1880 = vmax.f32 %v1730, 0.0
      %v1881 = vmax.f32 %v1735, 0.0
      %v1882 = vmax.f32 %v1740, 0.0
      %v1883 = vmax.f32 %v1745, 0.0
      %v1884 = vmax.f32 %v1750, 0.0
      %v1885 = vmax.f32 %v1755, 0.0
      %v1886 = vmax.f32 %v1760, 0.0
      %v1887 = vmax.f32 %v1765, 0.0
      %v1888 = vmax.f32 %v1770, 0.0
      %v1889 = vmax.f32 %v1775, 0.0
      %v1890 = vmax.f32 %v1780, 0.0
      %v1891 = vmax.f32 %v1785, 0.0
      %v1892 = vmax.f32 %v1790, 0.0
      %v1893 = vmax.f32 %v1795, 0.0
      %v1894 = vmax.f32 %v1800, 0.0
      %v1895 = vmax.f32 %v1805, 0.0
      %v1896 = vmax.f32 %v1810, 0.0
      %v1897 = vmax.f32 %v1815, 0.0
      %v1898 = vmax.f32 %v1820, 0.0
      %v1899 = vmax.f32 %v1825, 0.0
      %v1900 = vmax.f32 %v1830, 0.0
      %v1901 = vmax.f32 %v1835, 0.0
      %v1902 = vmax.f32 %v1840, 0.0
      %v1903 = vmax.f32 %v1845, 0.0
      %v1904 = vmax.f32 %v1850, 0.0
      %v1905 = vmax.f32 %v1855, 0.0
      %v1906 = vmax.f32 %v1860, 0.0
      %v1907 = vmax.f32 %v1865, 0.0
      %v1908 = vmax.f32 %v1870, 0.0
      %v1909 = vmax.f32 %v1875, 0.0
      %v1926 = vrot.slane %v1880, 1
      %v1927 = vrot.slane %v1878, 1
      %v1928 = vrot.slane %v1882, 1
      %v1929 = vrot.slane %v1884, 1
      %v1930 = vrot.slane %v1886, 1
      %v1931 = vrot.slane %v1888, 1
      %v1932 = vrot.slane %v1890, 1
      %v1933 = vrot.slane %v1892, 1
      %v1934 = vrot.slane %v1894, 1
      %v1935 = vrot.slane %v1896, 1
      %v1936 = vrot.slane %v1898, 1
      %v1937 = vrot.slane %v1900, 1
      %v1938 = vrot.slane %v1902, 1
      %v1939 = vrot.slane %v1904, 1
      %v1940 = vrot.slane %v1906, 1
      %v1941 = vrot.slane %v1908, 1
      %vm1974 = vcmask 1040384
      %v1975 = vrot.slane %v1880, 7
      %v1976 = vrot.slane %v1881, 7
      %v1977 = vsel %vm1974, %v1975, %v1976
      %v1978 = vrot.slane %v1878, 7
      %v1979 = vrot.slane %v1879, 7
      %v1980 = vsel %vm1974, %v1978, %v1979
      %v1981 = vrot.slane %v1882, 7
      %v1982 = vrot.slane %v1883, 7
      %v1983 = vsel %vm1974, %v1981, %v1982
      %v1984 = vrot.slane %v1884, 7
      %v1985 = vrot.slane %v1885, 7
      %v1986 = vsel %vm1974, %v1984, %v1985
      %v1987 = vrot.slane %v1886, 7
      %v1988 = vrot.slane %v1887, 7
      %v1989 = vsel %vm1974, %v1987, %v1988
      %v1990 = vrot.slane %v1888, 7
      %v1991 = vrot.slane %v1889, 7
      %v1992 = vsel %vm1974, %v1990, %v1991
      %v1993 = vrot.slane %v1890, 7
      %v1994 = vrot.slane %v1891, 7
      %v1995 = vsel %vm1974, %v1993, %v1994
      %v1996 = vrot.slane %v1892, 7
      %v1997 = vrot.slane %v1893, 7
      %v1998 = vsel %vm1974, %v1996, %v1997
      %v1999 = vrot.slane %v1894, 7
      %v2000 = vrot.slane %v1895, 7
      %v2001 = vsel %vm1974, %v1999, %v2000
      %v2002 = vrot.slane %v1896, 7
      %v2003 = vrot.slane %v1897, 7
      %v2004 = vsel %vm1974, %v2002, %v2003
      %v2005 = vrot.slane %v1898, 7
      %v2006 = vrot.slane %v1899, 7
      %v2007 = vsel %vm1974, %v2005, %v2006
      %v2008 = vrot.slane %v1900, 7
      %v2009 = vrot.slane %v1901, 7
      %v2010 = vsel %vm1974, %v2008, %v2009
      %v2011 = vrot.slane %v1902, 7
      %v2012 = vrot.slane %v1903, 7
      %v2013 = vsel %vm1974, %v2011, %v2012
      %v2014 = vrot.slane %v1904, 7
      %v2015 = vrot.slane %v1905, 7
      %v2016 = vsel %vm1974, %v2014, %v2015
      %v2017 = vrot.slane %v1906, 7
      %v2018 = vrot.slane %v1907, 7
      %v2019 = vsel %vm1974, %v2017, %v2018
      %v2020 = vrot.slane %v1908, 7
      %v2021 = vrot.slane %v1909, 7
      %v2022 = vsel %vm1974, %v2020, %v2021
      %v2070 = vrot.slane %v1881, 5
      %v2071 = vrot.slane %v1879, 5
      %v2072 = vrot.slane %v1883, 5
      %v2073 = vrot.slane %v1885, 5
      %v2074 = vrot.slane %v1887, 5
      %v2075 = vrot.slane %v1889, 5
      %v2076 = vrot.slane %v1891, 5
      %v2077 = vrot.slane %v1893, 5
      %v2078 = vrot.slane %v1895, 5
      %v2079 = vrot.slane %v1897, 5
      %v2080 = vrot.slane %v1899, 5
      %v2081 = vrot.slane %v1901, 5
      %v2082 = vrot.slane %v1903, 5
      %v2083 = vrot.slane %v1905, 5
      %v2084 = vrot.slane %v1907, 5
      %v2085 = vrot.slane %v1909, 5
      %v2102 = vsel %vm1974, %v1926, %v1975
      %v2103 = vsel %vm1974, %v1927, %v1978
      %v2104 = vsel %vm1974, %v1928, %v1981
      %v2105 = vsel %vm1974, %v1929, %v1984
      %v2106 = vsel %vm1974, %v1930, %v1987
      %v2107 = vsel %vm1974, %v1931, %v1990
      %v2108 = vsel %vm1974, %v1932, %v1993
      %v2109 = vsel %vm1974, %v1933, %v1996
      %v2110 = vsel %vm1974, %v1934, %v1999
      %v2111 = vsel %vm1974, %v1935, %v2002
      %v2112 = vsel %vm1974, %v1936, %v2005
      %v2113 = vsel %vm1974, %v1937, %v2008
      %v2114 = vsel %vm1974, %v1938, %v2011
      %v2115 = vsel %vm1974, %v1939, %v2014
      %v2116 = vsel %vm1974, %v1940, %v2017
      %v2117 = vsel %vm1974, %v1941, %v2020
      %v2118 = vsel %vm1974, %v1976, %v2070
      %v2119 = vsel %vm1974, %v1979, %v2071
      %v2120 = vsel %vm1974, %v1982, %v2072
      %v2121 = vsel %vm1974, %v1985, %v2073
      %v2122 = vsel %vm1974, %v1988, %v2074
      %v2123 = vsel %vm1974, %v1991, %v2075
      %v2124 = vsel %vm1974, %v1994, %v2076
      %v2125 = vsel %vm1974, %v1997, %v2077
      %v2126 = vsel %vm1974, %v2000, %v2078
      %v2127 = vsel %vm1974, %v2003, %v2079
      %v2128 = vsel %vm1974, %v2006, %v2080
      %v2129 = vsel %vm1974, %v2009, %v2081
      %v2130 = vsel %vm1974, %v2012, %v2082
      %v2131 = vsel %vm1974, %v2015, %v2083
      %v2132 = vsel %vm1974, %v2018, %v2084
      %v2133 = vsel %vm1974, %v2021, %v2085
      %v2134 = vld [vmem:[%s2] sm:$0xff]
      %v2135 = vld [vmem:[%s2 + $0x8] sm:$0xff]
      %v2136 = vld [vmem:[%s2 + $0x10] sm:$0xff]
      %v2137 = vld [vmem:[%s2 + $0x18] sm:$0xff]
      %v2138 = vld [vmem:[%s2 + $0x20] sm:$0xff]
      %v2139 = vld [vmem:[%s2 + $0x28] sm:$0xff]
      %v2140 = vld [vmem:[%s2 + $0x30] sm:$0xff]
      %v2141 = vld [vmem:[%s2 + $0x38] sm:$0xff]
      %v2142 = vld [vmem:[%s2 + $0x40] sm:$0xff]
      %v2173 = vrot.slane %v2102, 1
      %v2174 = vrot.slane %v1977, 1
      %v2175 = vsel %vm332, %v2173, %v2174
      %v2176 = vrot.slane %v2118, 1
      %v2177 = vsel %vm332, %v2174, %v2176
      %v2178 = vrot.slane %v2103, 1
      %v2179 = vrot.slane %v1980, 1
      %v2180 = vsel %vm332, %v2178, %v2179
      %v2181 = vrot.slane %v2119, 1
      %v2182 = vsel %vm332, %v2179, %v2181
      %v2183 = vrot.slane %v2104, 1
      %v2184 = vrot.slane %v1983, 1
      %v2185 = vsel %vm332, %v2183, %v2184
      %v2186 = vrot.slane %v2120, 1
      %v2187 = vsel %vm332, %v2184, %v2186
      %v2188 = vrot.slane %v2105, 1
      %v2189 = vrot.slane %v1986, 1
      %v2190 = vsel %vm332, %v2188, %v2189
      %v2191 = vrot.slane %v2121, 1
      %v2192 = vsel %vm332, %v2189, %v2191
      %v2193 = vrot.slane %v2106, 1
      %v2194 = vrot.slane %v1989, 1
      %v2195 = vsel %vm332, %v2193, %v2194
      %v2196 = vrot.slane %v2122, 1
      %v2197 = vsel %vm332, %v2194, %v2196
      %v2198 = vrot.slane %v2107, 1
      %v2199 = vrot.slane %v1992, 1
      %v2200 = vsel %vm332, %v2198, %v2199
      %v2201 = vrot.slane %v2123, 1
      %v2202 = vsel %vm332, %v2199, %v2201
      %v2203 = vrot.slane %v2108, 1
      %v2204 = vrot.slane %v1995, 1
      %v2205 = vsel %vm332, %v2203, %v2204
      %v2206 = vrot.slane %v2124, 1
      %v2207 = vsel %vm332, %v2204, %v2206
      %v2208 = vrot.slane %v2109, 1
      %v2209 = vrot.slane %v1998, 1
      %v2210 = vsel %vm332, %v2208, %v2209
      %v2211 = vrot.slane %v2125, 1
      %v2212 = vsel %vm332, %v2209, %v2211
      %v2213 = vrot.slane %v2110, 1
      %v2214 = vrot.slane %v2001, 1
      %v2215 = vsel %vm332, %v2213, %v2214
      %v2216 = vrot.slane %v2126, 1
      %v2217 = vsel %vm332, %v2214, %v2216
      %v2218 = vrot.slane %v2111, 1
      %v2219 = vrot.slane %v2004, 1
      %v2220 = vsel %vm332, %v2218, %v2219
      %v2221 = vrot.slane %v2127, 1
      %v2222 = vsel %vm332, %v2219, %v2221
      %v2223 = vrot.slane %v2112, 1
      %v2224 = vrot.slane %v2007, 1
      %v2225 = vsel %vm332, %v2223, %v2224
      %v2226 = vrot.slane %v2128, 1
      %v2227 = vsel %vm332, %v2224, %v2226
      %v2228 = vrot.slane %v2113, 1
      %v2229 = vrot.slane %v2010, 1
      %v2230 = vsel %vm332, %v2228, %v2229
      %v2231 = vrot.slane %v2129, 1
      %v2232 = vsel %vm332, %v2229, %v2231
      %v2233 = vrot.slane %v2114, 1
      %v2234 = vrot.slane %v2013, 1
      %v2235 = vsel %vm332, %v2233, %v2234
      %v2236 = vrot.slane %v2130, 1
      %v2237 = vsel %vm332, %v2234, %v2236
      %v2238 = vrot.slane %v2115, 1
      %v2239 = vrot.slane %v2016, 1
      %v2240 = vsel %vm332, %v2238, %v2239
      %v2241 = vrot.slane %v2131, 1
      %v2242 = vsel %vm332, %v2239, %v2241
      %v2243 = vrot.slane %v2116, 1
      %v2244 = vrot.slane %v2019, 1
      %v2245 = vsel %vm332, %v2243, %v2244
      %v2246 = vrot.slane %v2132, 1
      %v2247 = vsel %vm332, %v2244, %v2246
      %v2248 = vrot.slane %v2102, 2
      %v2249 = vrot.slane %v1977, 2
      %v2250 = vsel %vm413, %v2248, %v2249
      %v2251 = vrot.slane %v2118, 2
      %v2252 = vsel %vm413, %v2249, %v2251
      %v2253 = vrot.slane %v2103, 2
      %v2254 = vrot.slane %v1980, 2
      %v2255 = vsel %vm413, %v2253, %v2254
      %v2256 = vrot.slane %v2119, 2
      %v2257 = vsel %vm413, %v2254, %v2256
      %v2258 = vrot.slane %v2104, 2
      %v2259 = vrot.slane %v1983, 2
      %v2260 = vsel %vm413, %v2258, %v2259
      %v2261 = vrot.slane %v2120, 2
      %v2262 = vsel %vm413, %v2259, %v2261
      %v2263 = vrot.slane %v2105, 2
      %v2264 = vrot.slane %v1986, 2
      %v2265 = vsel %vm413, %v2263, %v2264
      %v2266 = vrot.slane %v2121, 2
      %v2267 = vsel %vm413, %v2264, %v2266
      %v2268 = vrot.slane %v2106, 2
      %v2269 = vrot.slane %v1989, 2
      %v2270 = vsel %vm413, %v2268, %v2269
      %v2271 = vrot.slane %v2122, 2
      %v2272 = vsel %vm413, %v2269, %v2271
      %v2273 = vrot.slane %v2107, 2
      %v2274 = vrot.slane %v1992, 2
      %v2275 = vsel %vm413, %v2273, %v2274
      %v2276 = vrot.slane %v2123, 2
      %v2277 = vsel %vm413, %v2274, %v2276
      %v2278 = vrot.slane %v2108, 2
      %v2279 = vrot.slane %v1995, 2
      %v2280 = vsel %vm413, %v2278, %v2279
      %v2281 = vrot.slane %v2124, 2
      %v2282 = vsel %vm413, %v2279, %v2281
      %v2283 = vrot.slane %v2109, 2
      %v2284 = vrot.slane %v1998, 2
      %v2285 = vsel %vm413, %v2283, %v2284
      %v2286 = vrot.slane %v2125, 2
      %v2287 = vsel %vm413, %v2284, %v2286
      %v2288 = vrot.slane %v2110, 2
      %v2289 = vrot.slane %v2001, 2
      %v2290 = vsel %vm413, %v2288, %v2289
      %v2291 = vrot.slane %v2126, 2
      %v2292 = vsel %vm413, %v2289, %v2291
      %v2293 = vrot.slane %v2111, 2
      %v2294 = vrot.slane %v2004, 2
      %v2295 = vsel %vm413, %v2293, %v2294
      %v2296 = vrot.slane %v2127, 2
      %v2297 = vsel %vm413, %v2294, %v2296
      %v2298 = vrot.slane %v2112, 2
      %v2299 = vrot.slane %v2007, 2
      %v2300 = vsel %vm413, %v2298, %v2299
      %v2301 = vrot.slane %v2128, 2
      %v2302 = vsel %vm413, %v2299, %v2301
      %v2303 = vrot.slane %v2113, 2
      %v2304 = vrot.slane %v2010, 2
      %v2305 = vsel %vm413, %v2303, %v2304
      %v2306 = vrot.slane %v2129, 2
      %v2307 = vsel %vm413, %v2304, %v2306
      %v2308 = vrot.slane %v2114, 2
      %v2309 = vrot.slane %v2013, 2
      %v2310 = vsel %vm413, %v2308, %v2309
      %v2311 = vrot.slane %v2130, 2
      %v2312 = vsel %vm413, %v2309, %v2311
      %v2313 = vrot.slane %v2115, 2
      %v2314 = vrot.slane %v2016, 2
      %v2315 = vsel %vm413, %v2313, %v2314
      %v2316 = vrot.slane %v2131, 2
      %v2317 = vsel %vm413, %v2314, %v2316
      %v2318 = vrot.slane %v2116, 2
      %v2319 = vrot.slane %v2019, 2
      %v2320 = vsel %vm413, %v2318, %v2319
      %v2321 = vrot.slane %v2132, 2
      %v2322 = vsel %vm413, %v2319, %v2321
      %v2325 = vrot.slane %v2117, 1
      %v2326 = vrot.slane %v2022, 1
      %v2327 = vsel %vm332, %v2325, %v2326
      %v2328 = vrot.slane %v2133, 1
      %v2329 = vsel %vm332, %v2326, %v2328
      %v2330 = vrot.slane %v2117, 2
      %v2331 = vrot.slane %v2022, 2
      %v2332 = vsel %vm413, %v2330, %v2331
      %v2333 = vrot.slane %v2133, 2
      %v2334 = vsel %vm413, %v2331, %v2333
      %2335 = vrot.lane.b32.xlu0 %v2175, 8
      %v2336 = vpop.permute.xlu0 %2335
      %2337 = vrot.lane.b32.xlu0 %v2177, 8
      %v2338 = vpop.permute.xlu0 %2337
      %2339 = vrot.lane.b32.xlu0 %v2180, 8
      %v2340 = vpop.permute.xlu0 %2339
      %2341 = vrot.lane.b32.xlu0 %v2182, 8
      %v2342 = vpop.permute.xlu0 %2341
      %2343 = vrot.lane.b32.xlu0 %v2185, 8
      %v2344 = vpop.permute.xlu0 %2343
      %2345 = vrot.lane.b32.xlu0 %v2187, 8
      %v2346 = vpop.permute.xlu0 %2345
      %2347 = vrot.lane.b32.xlu0 %v2190, 8
      %v2348 = vpop.permute.xlu0 %2347
      %2349 = vrot.lane.b32.xlu0 %v2192, 8
      %v2350 = vpop.permute.xlu0 %2349
      %2351 = vrot.lane.b32.xlu0 %v2195, 8
      %v2352 = vpop.permute.xlu0 %2351
      %2353 = vrot.lane.b32.xlu0 %v2197, 8
      %v2354 = vpop.permute.xlu0 %2353
      %2355 = vrot.lane.b32.xlu0 %v2200, 8
      %v2356 = vpop.permute.xlu0 %2355
      %2357 = vrot.lane.b32.xlu0 %v2202, 8
      %v2358 = vpop.permute.xlu0 %2357
      %2359 = vrot.lane.b32.xlu0 %v2205, 8
      %v2360 = vpop.permute.xlu0 %2359
      %2361 = vrot.lane.b32.xlu0 %v2207, 8
      %v2362 = vpop.permute.xlu0 %2361
      %2363 = vrot.lane.b32.xlu0 %v2210, 8
      %v2364 = vpop.permute.xlu0 %2363
      %2365 = vrot.lane.b32.xlu0 %v2212, 8
      %v2366 = vpop.permute.xlu0 %2365
      %2367 = vrot.lane.b32.xlu0 %v2215, 8
      %v2368 = vpop.permute.xlu0 %2367
      %2369 = vrot.lane.b32.xlu0 %v2217, 8
      %v2370 = vpop.permute.xlu0 %2369
      %2371 = vrot.lane.b32.xlu0 %v2220, 8
      %v2372 = vpop.permute.xlu0 %2371
      %2373 = vrot.lane.b32.xlu0 %v2222, 8
      %v2374 = vpop.permute.xlu0 %2373
      %2375 = vrot.lane.b32.xlu0 %v2225, 8
      %v2376 = vpop.permute.xlu0 %2375
      %2377 = vrot.lane.b32.xlu0 %v2227, 8
      %v2378 = vpop.permute.xlu0 %2377
      %2379 = vrot.lane.b32.xlu0 %v2230, 8
      %v2380 = vpop.permute.xlu0 %2379
      %2381 = vrot.lane.b32.xlu0 %v2232, 8
      %v2382 = vpop.permute.xlu0 %2381
      %2383 = vrot.lane.b32.xlu0 %v2235, 8
      %v2384 = vpop.permute.xlu0 %2383
      %2385 = vrot.lane.b32.xlu0 %v2237, 8
      %v2386 = vpop.permute.xlu0 %2385
      %2387 = vrot.lane.b32.xlu0 %v2240, 8
      %v2388 = vpop.permute.xlu0 %2387
      %2389 = vrot.lane.b32.xlu0 %v2242, 8
      %v2390 = vpop.permute.xlu0 %2389
      %2391 = vrot.lane.b32.xlu0 %v2245, 8
      %v2392 = vpop.permute.xlu0 %2391
      %2393 = vrot.lane.b32.xlu0 %v2247, 8
      %v2394 = vpop.permute.xlu0 %2393
      %2425 = vrot.lane.b32.xlu0 %v2250, 16
      %v2426 = vpop.permute.xlu0 %2425
      %2427 = vrot.lane.b32.xlu0 %v2252, 16
      %v2428 = vpop.permute.xlu0 %2427
      %2429 = vrot.lane.b32.xlu0 %v2255, 16
      %v2430 = vpop.permute.xlu0 %2429
      %2431 = vrot.lane.b32.xlu0 %v2257, 16
      %v2432 = vpop.permute.xlu0 %2431
      %2433 = vrot.lane.b32.xlu0 %v2260, 16
      %v2434 = vpop.permute.xlu0 %2433
      %2435 = vrot.lane.b32.xlu0 %v2262, 16
      %v2436 = vpop.permute.xlu0 %2435
      %2437 = vrot.lane.b32.xlu0 %v2265, 16
      %v2438 = vpop.permute.xlu0 %2437
      %2439 = vrot.lane.b32.xlu0 %v2267, 16
      %v2440 = vpop.permute.xlu0 %2439
      %2441 = vrot.lane.b32.xlu0 %v2270, 16
      %v2442 = vpop.permute.xlu0 %2441
      %2443 = vrot.lane.b32.xlu0 %v2272, 16
      %v2444 = vpop.permute.xlu0 %2443
      %2445 = vrot.lane.b32.xlu0 %v2275, 16
      %v2446 = vpop.permute.xlu0 %2445
      %2447 = vrot.lane.b32.xlu0 %v2277, 16
      %v2448 = vpop.permute.xlu0 %2447
      %2449 = vrot.lane.b32.xlu0 %v2280, 16
      %v2450 = vpop.permute.xlu0 %2449
      %2451 = vrot.lane.b32.xlu0 %v2282, 16
      %v2452 = vpop.permute.xlu0 %2451
      %2453 = vrot.lane.b32.xlu0 %v2285, 16
      %v2454 = vpop.permute.xlu0 %2453
      %2455 = vrot.lane.b32.xlu0 %v2287, 16
      %v2456 = vpop.permute.xlu0 %2455
      %2457 = vrot.lane.b32.xlu0 %v2290, 16
      %v2458 = vpop.permute.xlu0 %2457
      %2459 = vrot.lane.b32.xlu0 %v2292, 16
      %v2460 = vpop.permute.xlu0 %2459
      %2461 = vrot.lane.b32.xlu0 %v2295, 16
      %v2462 = vpop.permute.xlu0 %2461
      %2463 = vrot.lane.b32.xlu0 %v2297, 16
      %v2464 = vpop.permute.xlu0 %2463
      %2465 = vrot.lane.b32.xlu0 %v2300, 16
      %v2466 = vpop.permute.xlu0 %2465
      %2467 = vrot.lane.b32.xlu0 %v2302, 16
      %v2468 = vpop.permute.xlu0 %2467
      %2469 = vrot.lane.b32.xlu0 %v2305, 16
      %v2470 = vpop.permute.xlu0 %2469
      %2471 = vrot.lane.b32.xlu0 %v2307, 16
      %v2472 = vpop.permute.xlu0 %2471
      %2473 = vrot.lane.b32.xlu0 %v2310, 16
      %v2474 = vpop.permute.xlu0 %2473
      %2475 = vrot.lane.b32.xlu0 %v2312, 16
      %v2476 = vpop.permute.xlu0 %2475
      %2477 = vrot.lane.b32.xlu0 %v2315, 16
      %v2478 = vpop.permute.xlu0 %2477
      %2479 = vrot.lane.b32.xlu0 %v2317, 16
      %v2480 = vpop.permute.xlu0 %2479
      %2481 = vrot.lane.b32.xlu0 %v2320, 16
      %v2482 = vpop.permute.xlu0 %2481
      %2483 = vrot.lane.b32.xlu0 %v2322, 16
      %v2484 = vpop.permute.xlu0 %2483
      %2515 = vrot.lane.b32.xlu0 %v2103, 24
      %v2516 = vpop.permute.xlu0 %2515
      %2517 = vrot.lane.b32.xlu0 %v1980, 24
      %v2518 = vpop.permute.xlu0 %2517
      %2519 = vrot.lane.b32.xlu0 %v2102, 24
      %v2520 = vpop.permute.xlu0 %2519
      %2521 = vrot.lane.b32.xlu0 %v1977, 24
      %v2522 = vpop.permute.xlu0 %2521
      %2523 = vrot.lane.b32.xlu0 %v2104, 24
      %v2524 = vpop.permute.xlu0 %2523
      %2525 = vrot.lane.b32.xlu0 %v1983, 24
      %v2526 = vpop.permute.xlu0 %2525
      %2527 = vrot.lane.b32.xlu0 %v2105, 24
      %v2528 = vpop.permute.xlu0 %2527
      %2529 = vrot.lane.b32.xlu0 %v1986, 24
      %v2530 = vpop.permute.xlu0 %2529
      %2531 = vrot.lane.b32.xlu0 %v2106, 24
      %v2532 = vpop.permute.xlu0 %2531
      %2533 = vrot.lane.b32.xlu0 %v1989, 24
      %v2534 = vpop.permute.xlu0 %2533
      %2535 = vrot.lane.b32.xlu0 %v2107, 24
      %v2536 = vpop.permute.xlu0 %2535
      %2537 = vrot.lane.b32.xlu0 %v1992, 24
      %v2538 = vpop.permute.xlu0 %2537
      %2539 = vrot.lane.b32.xlu0 %v2108, 24
      %v2540 = vpop.permute.xlu0 %2539
      %2541 = vrot.lane.b32.xlu0 %v1995, 24
      %v2542 = vpop.permute.xlu0 %2541
      %2543 = vrot.lane.b32.xlu0 %v2109, 24
      %v2544 = vpop.permute.xlu0 %2543
      %2545 = vrot.lane.b32.xlu0 %v1998, 24
      %v2546 = vpop.permute.xlu0 %2545
      %2547 = vrot.lane.b32.xlu0 %v2110, 24
      %v2548 = vpop.permute.xlu0 %2547
      %2549 = vrot.lane.b32.xlu0 %v2001, 24
      %v2550 = vpop.permute.xlu0 %2549
      %2551 = vrot.lane.b32.xlu0 %v2111, 24
      %v2552 = vpop.permute.xlu0 %2551
      %2553 = vrot.lane.b32.xlu0 %v2004, 24
      %v2554 = vpop.permute.xlu0 %2553
      %2555 = vrot.lane.b32.xlu0 %v2112, 24
      %v2556 = vpop.permute.xlu0 %2555
      %2557 = vrot.lane.b32.xlu0 %v2007, 24
      %v2558 = vpop.permute.xlu0 %2557
      %2559 = vrot.lane.b32.xlu0 %v2113, 24
      %v2560 = vpop.permute.xlu0 %2559
      %2561 = vrot.lane.b32.xlu0 %v2010, 24
      %v2562 = vpop.permute.xlu0 %2561
      %2563 = vrot.lane.b32.xlu0 %v2114, 24
      %v2564 = vpop.permute.xlu0 %2563
      %2565 = vrot.lane.b32.xlu0 %v2013, 24
      %v2566 = vpop.permute.xlu0 %2565
      %2567 = vrot.lane.b32.xlu0 %v2115, 24
      %v2568 = vpop.permute.xlu0 %2567
      %2569 = vrot.lane.b32.xlu0 %v2016, 24
      %v2570 = vpop.permute.xlu0 %2569
      %2571 = vrot.lane.b32.xlu0 %v2116, 24
      %v2572 = vpop.permute.xlu0 %2571
      %2573 = vrot.lane.b32.xlu0 %v2019, 24
      %v2574 = vpop.permute.xlu0 %2573
      %2575 = vrot.lane.b32.xlu0 %v2117, 24
      %v2576 = vpop.permute.xlu0 %2575
      %2577 = vrot.lane.b32.xlu0 %v2022, 24
      %v2578 = vpop.permute.xlu0 %2577
      %2611 = vrot.lane.b32.xlu0 %v2180, 32
      %v2612 = vpop.permute.xlu0 %2611
      %2613 = vrot.lane.b32.xlu0 %v2182, 32
      %v2614 = vpop.permute.xlu0 %2613
      %2615 = vrot.lane.b32.xlu0 %v2175, 32
      %v2616 = vpop.permute.xlu0 %2615
      %2617 = vrot.lane.b32.xlu0 %v2177, 32
      %v2618 = vpop.permute.xlu0 %2617
      %2619 = vrot.lane.b32.xlu0 %v2185, 32
      %v2620 = vpop.permute.xlu0 %2619
      %2621 = vrot.lane.b32.xlu0 %v2187, 32
      %v2622 = vpop.permute.xlu0 %2621
      %2623 = vrot.lane.b32.xlu0 %v2190, 32
      %v2624 = vpop.permute.xlu0 %2623
      %2625 = vrot.lane.b32.xlu0 %v2192, 32
      %v2626 = vpop.permute.xlu0 %2625
      %2627 = vrot.lane.b32.xlu0 %v2195, 32
      %v2628 = vpop.permute.xlu0 %2627
      %2629 = vrot.lane.b32.xlu0 %v2197, 32
      %v2630 = vpop.permute.xlu0 %2629
      %2631 = vrot.lane.b32.xlu0 %v2200, 32
      %v2632 = vpop.permute.xlu0 %2631
      %2633 = vrot.lane.b32.xlu0 %v2202, 32
      %v2634 = vpop.permute.xlu0 %2633
      %2635 = vrot.lane.b32.xlu0 %v2205, 32
      %v2636 = vpop.permute.xlu0 %2635
      %2637 = vrot.lane.b32.xlu0 %v2207, 32
      %v2638 = vpop.permute.xlu0 %2637
      %2639 = vrot.lane.b32.xlu0 %v2210, 32
      %v2640 = vpop.permute.xlu0 %2639
      %2641 = vrot.lane.b32.xlu0 %v2212, 32
      %v2642 = vpop.permute.xlu0 %2641
      %2643 = vrot.lane.b32.xlu0 %v2215, 32
      %v2644 = vpop.permute.xlu0 %2643
      %2645 = vrot.lane.b32.xlu0 %v2217, 32
      %v2646 = vpop.permute.xlu0 %2645
      %2647 = vrot.lane.b32.xlu0 %v2220, 32
      %v2648 = vpop.permute.xlu0 %2647
      %2649 = vrot.lane.b32.xlu0 %v2222, 32
      %v2650 = vpop.permute.xlu0 %2649
      %2651 = vrot.lane.b32.xlu0 %v2225, 32
      %v2652 = vpop.permute.xlu0 %2651
      %2653 = vrot.lane.b32.xlu0 %v2227, 32
      %v2654 = vpop.permute.xlu0 %2653
      %2655 = vrot.lane.b32.xlu0 %v2230, 32
      %v2656 = vpop.permute.xlu0 %2655
      %2657 = vrot.lane.b32.xlu0 %v2232, 32
      %v2658 = vpop.permute.xlu0 %2657
      %2659 = vrot.lane.b32.xlu0 %v2235, 32
      %v2660 = vpop.permute.xlu0 %2659
      %2661 = vrot.lane.b32.xlu0 %v2237, 32
      %v2662 = vpop.permute.xlu0 %2661
      %2663 = vrot.lane.b32.xlu0 %v2240, 32
      %v2664 = vpop.permute.xlu0 %2663
      %2665 = vrot.lane.b32.xlu0 %v2242, 32
      %v2666 = vpop.permute.xlu0 %2665
      %2667 = vrot.lane.b32.xlu0 %v2245, 32
      %v2668 = vpop.permute.xlu0 %2667
      %2669 = vrot.lane.b32.xlu0 %v2247, 32
      %v2670 = vpop.permute.xlu0 %2669
      %2671 = vrot.lane.b32.xlu0 %v2327, 32
      %v2672 = vpop.permute.xlu0 %2671
      %2673 = vrot.lane.b32.xlu0 %v2329, 32
      %v2674 = vpop.permute.xlu0 %2673
      %2707 = vrot.lane.b32.xlu0 %v2255, 40
      %v2708 = vpop.permute.xlu0 %2707
      %2709 = vrot.lane.b32.xlu0 %v2257, 40
      %v2710 = vpop.permute.xlu0 %2709
      %2711 = vrot.lane.b32.xlu0 %v2250, 40
      %v2712 = vpop.permute.xlu0 %2711
      %2713 = vrot.lane.b32.xlu0 %v2252, 40
      %v2714 = vpop.permute.xlu0 %2713
      %2715 = vrot.lane.b32.xlu0 %v2260, 40
      %v2716 = vpop.permute.xlu0 %2715
      %2717 = vrot.lane.b32.xlu0 %v2262, 40
      %v2718 = vpop.permute.xlu0 %2717
      %2719 = vrot.lane.b32.xlu0 %v2265, 40
      %v2720 = vpop.permute.xlu0 %2719
      %2721 = vrot.lane.b32.xlu0 %v2267, 40
      %v2722 = vpop.permute.xlu0 %2721
      %2723 = vrot.lane.b32.xlu0 %v2270, 40
      %v2724 = vpop.permute.xlu0 %2723
      %2725 = vrot.lane.b32.xlu0 %v2272, 40
      %v2726 = vpop.permute.xlu0 %2725
      %2727 = vrot.lane.b32.xlu0 %v2275, 40
      %v2728 = vpop.permute.xlu0 %2727
      %2729 = vrot.lane.b32.xlu0 %v2277, 40
      %v2730 = vpop.permute.xlu0 %2729
      %2731 = vrot.lane.b32.xlu0 %v2280, 40
      %v2732 = vpop.permute.xlu0 %2731
      %2733 = vrot.lane.b32.xlu0 %v2282, 40
      %v2734 = vpop.permute.xlu0 %2733
      %2735 = vrot.lane.b32.xlu0 %v2285, 40
      %v2736 = vpop.permute.xlu0 %2735
      %2737 = vrot.lane.b32.xlu0 %v2287, 40
      %v2738 = vpop.permute.xlu0 %2737
      %2739 = vrot.lane.b32.xlu0 %v2290, 40
      %v2740 = vpop.permute.xlu0 %2739
      %2741 = vrot.lane.b32.xlu0 %v2292, 40
      %v2742 = vpop.permute.xlu0 %2741
      %2743 = vrot.lane.b32.xlu0 %v2295, 40
      %v2744 = vpop.permute.xlu0 %2743
      %2745 = vrot.lane.b32.xlu0 %v2297, 40
      %v2746 = vpop.permute.xlu0 %2745
      %2747 = vrot.lane.b32.xlu0 %v2300, 40
      %v2748 = vpop.permute.xlu0 %2747
      %2749 = vrot.lane.b32.xlu0 %v2302, 40
      %v2750 = vpop.permute.xlu0 %2749
      %2751 = vrot.lane.b32.xlu0 %v2305, 40
      %v2752 = vpop.permute.xlu0 %2751
      %2753 = vrot.lane.b32.xlu0 %v2307, 40
      %v2754 = vpop.permute.xlu0 %2753
      %2755 = vrot.lane.b32.xlu0 %v2310, 40
      %v2756 = vpop.permute.xlu0 %2755
      %2757 = vrot.lane.b32.xlu0 %v2312, 40
      %v2758 = vpop.permute.xlu0 %2757
      %2759 = vrot.lane.b32.xlu0 %v2315, 40
      %v2760 = vpop.permute.xlu0 %2759
      %2761 = vrot.lane.b32.xlu0 %v2317, 40
      %v2762 = vpop.permute.xlu0 %2761
      %2763 = vrot.lane.b32.xlu0 %v2320, 40
      %v2764 = vpop.permute.xlu0 %2763
      %2765 = vrot.lane.b32.xlu0 %v2322, 40
      %v2766 = vpop.permute.xlu0 %2765
      %2767 = vrot.lane.b32.xlu0 %v2332, 40
      %v2768 = vpop.permute.xlu0 %2767
      %2769 = vrot.lane.b32.xlu0 %v2334, 40
      %v2770 = vpop.permute.xlu0 %2769
      %2803 = vrot.lane.b32.xlu0 %v2102, 48
      %v2804 = vpop.permute.xlu0 %2803
      %2805 = vrot.lane.b32.xlu0 %v1977, 48
      %v2806 = vpop.permute.xlu0 %2805
      %2807 = vrot.lane.b32.xlu0 %v2104, 48
      %v2808 = vpop.permute.xlu0 %2807
      %2809 = vrot.lane.b32.xlu0 %v1983, 48
      %v2810 = vpop.permute.xlu0 %2809
      %2811 = vrot.lane.b32.xlu0 %v2105, 48
      %v2812 = vpop.permute.xlu0 %2811
      %2813 = vrot.lane.b32.xlu0 %v1986, 48
      %v2814 = vpop.permute.xlu0 %2813
      %2815 = vrot.lane.b32.xlu0 %v2106, 48
      %v2816 = vpop.permute.xlu0 %2815
      %2817 = vrot.lane.b32.xlu0 %v1989, 48
      %v2818 = vpop.permute.xlu0 %2817
      %2819 = vrot.lane.b32.xlu0 %v2107, 48
      %v2820 = vpop.permute.xlu0 %2819
      %2821 = vrot.lane.b32.xlu0 %v1992, 48
      %v2822 = vpop.permute.xlu0 %2821
      %2823 = vrot.lane.b32.xlu0 %v2108, 48
      %v2824 = vpop.permute.xlu0 %2823
      %2825 = vrot.lane.b32.xlu0 %v1995, 48
      %v2826 = vpop.permute.xlu0 %2825
      %2827 = vrot.lane.b32.xlu0 %v2109, 48
      %v2828 = vpop.permute.xlu0 %2827
      %2829 = vrot.lane.b32.xlu0 %v1998, 48
      %v2830 = vpop.permute.xlu0 %2829
      %2831 = vrot.lane.b32.xlu0 %v2110, 48
      %v2832 = vpop.permute.xlu0 %2831
      %2833 = vrot.lane.b32.xlu0 %v2001, 48
      %v2834 = vpop.permute.xlu0 %2833
      %2835 = vrot.lane.b32.xlu0 %v2111, 48
      %v2836 = vpop.permute.xlu0 %2835
      %2837 = vrot.lane.b32.xlu0 %v2004, 48
      %v2838 = vpop.permute.xlu0 %2837
      %2839 = vrot.lane.b32.xlu0 %v2112, 48
      %v2840 = vpop.permute.xlu0 %2839
      %2841 = vrot.lane.b32.xlu0 %v2007, 48
      %v2842 = vpop.permute.xlu0 %2841
      %2843 = vrot.lane.b32.xlu0 %v2113, 48
      %v2844 = vpop.permute.xlu0 %2843
      %2845 = vrot.lane.b32.xlu0 %v2010, 48
      %v2846 = vpop.permute.xlu0 %2845
      %2847 = vrot.lane.b32.xlu0 %v2114, 48
      %v2848 = vpop.permute.xlu0 %2847
      %2849 = vrot.lane.b32.xlu0 %v2013, 48
      %v2850 = vpop.permute.xlu0 %2849
      %2851 = vrot.lane.b32.xlu0 %v2115, 48
      %v2852 = vpop.permute.xlu0 %2851
      %2853 = vrot.lane.b32.xlu0 %v2016, 48
      %v2854 = vpop.permute.xlu0 %2853
      %2855 = vrot.lane.b32.xlu0 %v2116, 48
      %v2856 = vpop.permute.xlu0 %2855
      %2857 = vrot.lane.b32.xlu0 %v2019, 48
      %v2858 = vpop.permute.xlu0 %2857
      %2859 = vrot.lane.b32.xlu0 %v2117, 48
      %v2860 = vpop.permute.xlu0 %2859
      %2861 = vrot.lane.b32.xlu0 %v2022, 48
      %v2862 = vpop.permute.xlu0 %2861
      %2893 = vrot.lane.b32.xlu0 %v2175, 56
      %v2894 = vpop.permute.xlu0 %2893
      %2895 = vrot.lane.b32.xlu0 %v2177, 56
      %v2896 = vpop.permute.xlu0 %2895
      %2897 = vrot.lane.b32.xlu0 %v2185, 56
      %v2898 = vpop.permute.xlu0 %2897
      %2899 = vrot.lane.b32.xlu0 %v2187, 56
      %v2900 = vpop.permute.xlu0 %2899
      %2901 = vrot.lane.b32.xlu0 %v2190, 56
      %v2902 = vpop.permute.xlu0 %2901
      %2903 = vrot.lane.b32.xlu0 %v2192, 56
      %v2904 = vpop.permute.xlu0 %2903
      %2905 = vrot.lane.b32.xlu0 %v2195, 56
      %v2906 = vpop.permute.xlu0 %2905
      %2907 = vrot.lane.b32.xlu0 %v2197, 56
      %v2908 = vpop.permute.xlu0 %2907
      %2909 = vrot.lane.b32.xlu0 %v2200, 56
      %v2910 = vpop.permute.xlu0 %2909
      %2911 = vrot.lane.b32.xlu0 %v2202, 56
      %v2912 = vpop.permute.xlu0 %2911
      %2913 = vrot.lane.b32.xlu0 %v2205, 56
      %v2914 = vpop.permute.xlu0 %2913
      %2915 = vrot.lane.b32.xlu0 %v2207, 56
      %v2916 = vpop.permute.xlu0 %2915
      %2917 = vrot.lane.b32.xlu0 %v2210, 56
      %v2918 = vpop.permute.xlu0 %2917
      %2919 = vrot.lane.b32.xlu0 %v2212, 56
      %v2920 = vpop.permute.xlu0 %2919
      %2921 = vrot.lane.b32.xlu0 %v2215, 56
      %v2922 = vpop.permute.xlu0 %2921
      %2923 = vrot.lane.b32.xlu0 %v2217, 56
      %v2924 = vpop.permute.xlu0 %2923
      %2925 = vrot.lane.b32.xlu0 %v2220, 56
      %v2926 = vpop.permute.xlu0 %2925
      %2927 = vrot.lane.b32.xlu0 %v2222, 56
      %v2928 = vpop.permute.xlu0 %2927
      %2929 = vrot.lane.b32.xlu0 %v2225, 56
      %v2930 = vpop.permute.xlu0 %2929
      %2931 = vrot.lane.b32.xlu0 %v2227, 56
      %v2932 = vpop.permute.xlu0 %2931
      %2933 = vrot.lane.b32.xlu0 %v2230, 56
      %v2934 = vpop.permute.xlu0 %2933
      %2935 = vrot.lane.b32.xlu0 %v2232, 56
      %v2936 = vpop.permute.xlu0 %2935
      %2937 = vrot.lane.b32.xlu0 %v2235, 56
      %v2938 = vpop.permute.xlu0 %2937
      %2939 = vrot.lane.b32.xlu0 %v2237, 56
      %v2940 = vpop.permute.xlu0 %2939
      %2941 = vrot.lane.b32.xlu0 %v2240, 56
      %v2942 = vpop.permute.xlu0 %2941
      %2943 = vrot.lane.b32.xlu0 %v2242, 56
      %v2944 = vpop.permute.xlu0 %2943
      %2945 = vrot.lane.b32.xlu0 %v2245, 56
      %v2946 = vpop.permute.xlu0 %2945
      %2947 = vrot.lane.b32.xlu0 %v2247, 56
      %v2948 = vpop.permute.xlu0 %2947
      %2949 = vrot.lane.b32.xlu0 %v2327, 56
      %v2950 = vpop.permute.xlu0 %2949
      %2951 = vrot.lane.b32.xlu0 %v2329, 56
      %v2952 = vpop.permute.xlu0 %2951
      %2983 = vrot.lane.b32.xlu0 %v2250, 64
      %v2984 = vpop.permute.xlu0 %2983
      %2985 = vrot.lane.b32.xlu0 %v2252, 64
      %v2986 = vpop.permute.xlu0 %2985
      %2987 = vrot.lane.b32.xlu0 %v2260, 64
      %v2988 = vpop.permute.xlu0 %2987
      %2989 = vrot.lane.b32.xlu0 %v2262, 64
      %v2990 = vpop.permute.xlu0 %2989
      %2991 = vrot.lane.b32.xlu0 %v2265, 64
      %v2992 = vpop.permute.xlu0 %2991
      %2993 = vrot.lane.b32.xlu0 %v2267, 64
      %v2994 = vpop.permute.xlu0 %2993
      %2995 = vrot.lane.b32.xlu0 %v2270, 64
      %v2996 = vpop.permute.xlu0 %2995
      %2997 = vrot.lane.b32.xlu0 %v2272, 64
      %v2998 = vpop.permute.xlu0 %2997
      %2999 = vrot.lane.b32.xlu0 %v2275, 64
      %v3000 = vpop.permute.xlu0 %2999
      %3001 = vrot.lane.b32.xlu0 %v2277, 64
      %v3002 = vpop.permute.xlu0 %3001
      %3003 = vrot.lane.b32.xlu0 %v2280, 64
      %v3004 = vpop.permute.xlu0 %3003
      %3005 = vrot.lane.b32.xlu0 %v2282, 64
      %v3006 = vpop.permute.xlu0 %3005
      %3007 = vrot.lane.b32.xlu0 %v2285, 64
      %v3008 = vpop.permute.xlu0 %3007
      %3009 = vrot.lane.b32.xlu0 %v2287, 64
      %v3010 = vpop.permute.xlu0 %3009
      %3011 = vrot.lane.b32.xlu0 %v2290, 64
      %v3012 = vpop.permute.xlu0 %3011
      %3013 = vrot.lane.b32.xlu0 %v2292, 64
      %v3014 = vpop.permute.xlu0 %3013
      %3015 = vrot.lane.b32.xlu0 %v2295, 64
      %v3016 = vpop.permute.xlu0 %3015
      %3017 = vrot.lane.b32.xlu0 %v2297, 64
      %v3018 = vpop.permute.xlu0 %3017
      %3019 = vrot.lane.b32.xlu0 %v2300, 64
      %v3020 = vpop.permute.xlu0 %3019
      %3021 = vrot.lane.b32.xlu0 %v2302, 64
      %v3022 = vpop.permute.xlu0 %3021
      %3023 = vrot.lane.b32.xlu0 %v2305, 64
      %v3024 = vpop.permute.xlu0 %3023
      %3025 = vrot.lane.b32.xlu0 %v2307, 64
      %v3026 = vpop.permute.xlu0 %3025
      %3027 = vrot.lane.b32.xlu0 %v2310, 64
      %v3028 = vpop.permute.xlu0 %3027
      %3029 = vrot.lane.b32.xlu0 %v2312, 64
      %v3030 = vpop.permute.xlu0 %3029
      %3031 = vrot.lane.b32.xlu0 %v2315, 64
      %v3032 = vpop.permute.xlu0 %3031
      %3033 = vrot.lane.b32.xlu0 %v2317, 64
      %v3034 = vpop.permute.xlu0 %3033
      %3035 = vrot.lane.b32.xlu0 %v2320, 64
      %v3036 = vpop.permute.xlu0 %3035
      %3037 = vrot.lane.b32.xlu0 %v2322, 64
      %v3038 = vpop.permute.xlu0 %3037
      %3039 = vrot.lane.b32.xlu0 %v2332, 64
      %v3040 = vpop.permute.xlu0 %3039
      %3041 = vrot.lane.b32.xlu0 %v2334, 64
      %v3042 = vpop.permute.xlu0 %3041
      %v3073 = vsel %vm1321, %v2102, %v2336
      %v3074 = vsel %vm1321, %v1977, %v2338
      %v3075 = vsel %vm1321, %v2103, %v2340
      %v3076 = vsel %vm1321, %v1980, %v2342
      %v3077 = vsel %vm1321, %v2104, %v2344
      %v3078 = vsel %vm1321, %v1983, %v2346
      %v3079 = vsel %vm1321, %v2105, %v2348
      %v3080 = vsel %vm1321, %v1986, %v2350
      %v3081 = vsel %vm1321, %v2106, %v2352
      %v3082 = vsel %vm1321, %v1989, %v2354
      %v3083 = vsel %vm1321, %v2107, %v2356
      %v3084 = vsel %vm1321, %v1992, %v2358
      %v3085 = vsel %vm1321, %v2108, %v2360
      %v3086 = vsel %vm1321, %v1995, %v2362
      %v3087 = vsel %vm1321, %v2109, %v2364
      %v3088 = vsel %vm1321, %v1998, %v2366
      %v3089 = vsel %vm1321, %v2110, %v2368
      %v3090 = vsel %vm1321, %v2001, %v2370
      %v3091 = vsel %vm1321, %v2111, %v2372
      %v3092 = vsel %vm1321, %v2004, %v2374
      %v3093 = vsel %vm1321, %v2112, %v2376
      %v3094 = vsel %vm1321, %v2007, %v2378
      %v3095 = vsel %vm1321, %v2113, %v2380
      %v3096 = vsel %vm1321, %v2010, %v2382
      %v3097 = vsel %vm1321, %v2114, %v2384
      %v3098 = vsel %vm1321, %v2013, %v2386
      %v3099 = vsel %vm1321, %v2115, %v2388
      %v3100 = vsel %vm1321, %v2016, %v2390
      %v3101 = vsel %vm1321, %v2116, %v2392
      %v3102 = vsel %vm1321, %v2019, %v2394
      %v3103 = vsel %vm1387, %v3073, %v2426
      %v3104 = vsel %vm1387, %v3074, %v2428
      %v3105 = vsel %vm1387, %v3075, %v2430
      %v3106 = vsel %vm1387, %v3076, %v2432
      %v3107 = vsel %vm1387, %v3077, %v2434
      %v3108 = vsel %vm1387, %v3078, %v2436
      %v3109 = vsel %vm1387, %v3079, %v2438
      %v3110 = vsel %vm1387, %v3080, %v2440
      %v3111 = vsel %vm1387, %v3081, %v2442
      %v3112 = vsel %vm1387, %v3082, %v2444
      %v3113 = vsel %vm1387, %v3083, %v2446
      %v3114 = vsel %vm1387, %v3084, %v2448
      %v3115 = vsel %vm1387, %v3085, %v2450
      %v3116 = vsel %vm1387, %v3086, %v2452
      %v3117 = vsel %vm1387, %v3087, %v2454
      %v3118 = vsel %vm1387, %v3088, %v2456
      %v3119 = vsel %vm1387, %v3089, %v2458
      %v3120 = vsel %vm1387, %v3090, %v2460
      %v3121 = vsel %vm1387, %v3091, %v2462
      %v3122 = vsel %vm1387, %v3092, %v2464
      %v3123 = vsel %vm1387, %v3093, %v2466
      %v3124 = vsel %vm1387, %v3094, %v2468
      %v3125 = vsel %vm1387, %v3095, %v2470
      %v3126 = vsel %vm1387, %v3096, %v2472
      %v3127 = vsel %vm1387, %v3097, %v2474
      %v3128 = vsel %vm1387, %v3098, %v2476
      %v3129 = vsel %vm1387, %v3099, %v2478
      %v3130 = vsel %vm1387, %v3100, %v2480
      %v3131 = vsel %vm1387, %v3101, %v2482
      %v3132 = vsel %vm1387, %v3102, %v2484
      %v3133 = vsel %vm1453, %v3103, %v2516
      %v3134 = vsel %vm1453, %v3104, %v2518
      %v3135 = vsel %vm1453, %v3105, %v2520
      %v3136 = vsel %vm1453, %v3106, %v2522
      %v3137 = vsel %vm1453, %v3103, %v2524
      %v3138 = vsel %vm1453, %v3104, %v2526
      %v3139 = vsel %vm1453, %v3107, %v2528
      %v3140 = vsel %vm1453, %v3108, %v2530
      %v3141 = vsel %vm1453, %v3109, %v2532
      %v3142 = vsel %vm1453, %v3110, %v2534
      %v3143 = vsel %vm1453, %v3111, %v2536
      %v3144 = vsel %vm1453, %v3112, %v2538
      %v3145 = vsel %vm1453, %v3113, %v2540
      %v3146 = vsel %vm1453, %v3114, %v2542
      %v3147 = vsel %vm1453, %v3115, %v2544
      %v3148 = vsel %vm1453, %v3116, %v2546
      %v3149 = vsel %vm1453, %v3117, %v2548
      %v3150 = vsel %vm1453, %v3118, %v2550
      %v3151 = vsel %vm1453, %v3119, %v2552
      %v3152 = vsel %vm1453, %v3120, %v2554
      %v3153 = vsel %vm1453, %v3121, %v2556
      %v3154 = vsel %vm1453, %v3122, %v2558
      %v3155 = vsel %vm1453, %v3123, %v2560
      %v3156 = vsel %vm1453, %v3124, %v2562
      %v3157 = vsel %vm1453, %v3125, %v2564
      %v3158 = vsel %vm1453, %v3126, %v2566
      %v3159 = vsel %vm1453, %v3127, %v2568
      %v3160 = vsel %vm1453, %v3128, %v2570
      %v3161 = vsel %vm1453, %v3129, %v2572
      %v3162 = vsel %vm1453, %v3130, %v2574
      %v3163 = vsel %vm1453, %v3131, %v2576
      %v3164 = vsel %vm1453, %v3132, %v2578
      %v3165 = vsel %vm1519, %v3133, %v2612
      %v3166 = vsel %vm1519, %v3134, %v2614
      %v3167 = vsel %vm1519, %v3135, %v2616
      %v3168 = vsel %vm1519, %v3136, %v2618
      %v3169 = vsel %vm1519, %v3137, %v2620
      %v3170 = vsel %vm1519, %v3138, %v2622
      %v3171 = vsel %vm1519, %v3139, %v2624
      %v3172 = vsel %vm1519, %v3140, %v2626
      %v3173 = vsel %vm1519, %v3141, %v2628
      %v3174 = vsel %vm1519, %v3142, %v2630
      %v3175 = vsel %vm1519, %v3143, %v2632
      %v3176 = vsel %vm1519, %v3144, %v2634
      %v3177 = vsel %vm1519, %v3145, %v2636
      %v3178 = vsel %vm1519, %v3146, %v2638
      %v3179 = vsel %vm1519, %v3147, %v2640
      %v3180 = vsel %vm1519, %v3148, %v2642
      %v3181 = vsel %vm1519, %v3149, %v2644
      %v3182 = vsel %vm1519, %v3150, %v2646
      %v3183 = vsel %vm1519, %v3151, %v2648
      %v3184 = vsel %vm1519, %v3152, %v2650
      %v3185 = vsel %vm1519, %v3153, %v2652
      %v3186 = vsel %vm1519, %v3154, %v2654
      %v3187 = vsel %vm1519, %v3155, %v2656
      %v3188 = vsel %vm1519, %v3156, %v2658
      %v3189 = vsel %vm1519, %v3157, %v2660
      %v3190 = vsel %vm1519, %v3158, %v2662
      %v3191 = vsel %vm1519, %v3159, %v2664
      %v3192 = vsel %vm1519, %v3160, %v2666
      %v3193 = vsel %vm1519, %v3161, %v2668
      %v3194 = vsel %vm1519, %v3162, %v2670
      %v3195 = vsel %vm1519, %v3163, %v2672
      %v3196 = vsel %vm1519, %v3164, %v2674
      %vm3197 = vcmask 326656
      %v3198 = vsel %vm3197, %v3165, %v2708
      %v3199 = vsel %vm3197, %v3166, %v2710
      %v3200 = vsel %vm3197, %v3167, %v2712
      %v3201 = vsel %vm3197, %v3168, %v2714
      %v3202 = vsel %vm3197, %v3169, %v2716
      %v3203 = vsel %vm3197, %v3170, %v2718
      %v3204 = vsel %vm3197, %v3171, %v2720
      %v3205 = vsel %vm3197, %v3172, %v2722
      %v3206 = vsel %vm3197, %v3173, %v2724
      %v3207 = vsel %vm3197, %v3174, %v2726
      %v3208 = vsel %vm3197, %v3175, %v2728
      %v3209 = vsel %vm3197, %v3176, %v2730
      %v3210 = vsel %vm3197, %v3177, %v2732
      %v3211 = vsel %vm3197, %v3178, %v2734
      %v3212 = vsel %vm3197, %v3179, %v2736
      %v3213 = vsel %vm3197, %v3180, %v2738
      %v3214 = vsel %vm3197, %v3181, %v2740
      %v3215 = vsel %vm3197, %v3182, %v2742
      %v3216 = vsel %vm3197, %v3183, %v2744
      %v3217 = vsel %vm3197, %v3184, %v2746
      %v3218 = vsel %vm3197, %v3185, %v2748
      %v3219 = vsel %vm3197, %v3186, %v2750
      %v3220 = vsel %vm3197, %v3187, %v2752
      %v3221 = vsel %vm3197, %v3188, %v2754
      %v3222 = vsel %vm3197, %v3189, %v2756
      %v3223 = vsel %vm3197, %v3190, %v2758
      %v3224 = vsel %vm3197, %v3191, %v2760
      %v3225 = vsel %vm3197, %v3192, %v2762
      %v3226 = vsel %vm3197, %v3193, %v2764
      %v3227 = vsel %vm3197, %v3194, %v2766
      %v3228 = vsel %vm3197, %v3195, %v2768
      %v3229 = vsel %vm3197, %v3196, %v2770
      %vm3230 = vcmask 392192
      %v3231 = vsel %vm3230, %v3198, %v2804
      %v3232 = vsel %vm3230, %v3199, %v2806
      %v3233 = vsel %vm3230, %v3200, %v2808
      %v3234 = vsel %vm3230, %v3201, %v2810
      %v3235 = vsel %vm3230, %v3202, %v2812
      %v3236 = vsel %vm3230, %v3203, %v2814
      %v3237 = vsel %vm3230, %v3204, %v2816
      %v3238 = vsel %vm3230, %v3205, %v2818
      %v3239 = vsel %vm3230, %v3206, %v2820
      %v3240 = vsel %vm3230, %v3207, %v2822
      %v3241 = vsel %vm3230, %v3208, %v2824
      %v3242 = vsel %vm3230, %v3209, %v2826
      %v3243 = vsel %vm3230, %v3210, %v2828
      %v3244 = vsel %vm3230, %v3211, %v2830
      %v3245 = vsel %vm3230, %v3212, %v2832
      %v3246 = vsel %vm3230, %v3213, %v2834
      %v3247 = vsel %vm3230, %v3214, %v2836
      %v3248 = vsel %vm3230, %v3215, %v2838
      %v3249 = vsel %vm3230, %v3216, %v2840
      %v3250 = vsel %vm3230, %v3217, %v2842
      %v3251 = vsel %vm3230, %v3218, %v2844
      %v3252 = vsel %vm3230, %v3219, %v2846
      %v3253 = vsel %vm3230, %v3220, %v2848
      %v3254 = vsel %vm3230, %v3221, %v2850
      %v3255 = vsel %vm3230, %v3222, %v2852
      %v3256 = vsel %vm3230, %v3223, %v2854
      %v3257 = vsel %vm3230, %v3224, %v2856
      %v3258 = vsel %vm3230, %v3225, %v2858
      %v3259 = vsel %vm3230, %v3226, %v2860
      %v3260 = vsel %vm3230, %v3227, %v2862
      %v3261 = vsel %vm3230, %v3228, %v2856
      %v3262 = vsel %vm3230, %v3229, %v2858
      %vm3263 = vcmask 457728
      %v3264 = vsel %vm3263, %v3231, %v2894
      %v3265 = vsel %vm3263, %v3232, %v2896
      %v3266 = vsel %vm3263, %v3233, %v2898
      %v3267 = vsel %vm3263, %v3234, %v2900
      %v3268 = vsel %vm3263, %v3235, %v2902
      %v3269 = vsel %vm3263, %v3236, %v2904
      %v3270 = vsel %vm3263, %v3237, %v2906
      %v3271 = vsel %vm3263, %v3238, %v2908
      %v3272 = vsel %vm3263, %v3239, %v2910
      %v3273 = vsel %vm3263, %v3240, %v2912
      %v3274 = vsel %vm3263, %v3241, %v2914
      %v3275 = vsel %vm3263, %v3242, %v2916
      %v3276 = vsel %vm3263, %v3243, %v2918
      %v3277 = vsel %vm3263, %v3244, %v2920
      %v3278 = vsel %vm3263, %v3245, %v2922
      %v3279 = vsel %vm3263, %v3246, %v2924
      %v3280 = vsel %vm3263, %v3247, %v2926
      %v3281 = vsel %vm3263, %v3248, %v2928
      %v3282 = vsel %vm3263, %v3249, %v2930
      %v3283 = vsel %vm3263, %v3250, %v2932
      %v3284 = vsel %vm3263, %v3251, %v2934
      %v3285 = vsel %vm3263, %v3252, %v2936
      %v3286 = vsel %vm3263, %v3253, %v2938
      %v3287 = vsel %vm3263, %v3254, %v2940
      %v3288 = vsel %vm3263, %v3255, %v2942
      %v3289 = vsel %vm3263, %v3256, %v2944
      %v3290 = vsel %vm3263, %v3257, %v2946
      %v3291 = vsel %vm3263, %v3258, %v2948
      %v3292 = vsel %vm3263, %v3259, %v2950
      %v3293 = vsel %vm3263, %v3260, %v2952
      %v3294 = vsel %vm3263, %v3261, %v2946
      %v3295 = vsel %vm3263, %v3262, %v2948
      %vm3296 = vcmask 523264
      %v3297 = vsel %vm3296, %v3264, %v2984
      %v3298 = vsel %vm3296, %v3265, %v2986
      %v3299 = vsel %vm3296, %v3266, %v2988
      %v3300 = vsel %vm3296, %v3267, %v2990
      %v3301 = vsel %vm3296, %v3268, %v2992
      %v3302 = vsel %vm3296, %v3269, %v2994
      %v3303 = vsel %vm3296, %v3270, %v2996
      %v3304 = vsel %vm3296, %v3271, %v2998
      %v3305 = vsel %vm3296, %v3272, %v3000
      %v3306 = vsel %vm3296, %v3273, %v3002
      %v3307 = vsel %vm3296, %v3274, %v3004
      %v3308 = vsel %vm3296, %v3275, %v3006
      %v3309 = vsel %vm3296, %v3276, %v3008
      %v3310 = vsel %vm3296, %v3277, %v3010
      %v3311 = vsel %vm3296, %v3278, %v3012
      %v3312 = vsel %vm3296, %v3279, %v3014
      %v3313 = vsel %vm3296, %v3280, %v3016
      %v3314 = vsel %vm3296, %v3281, %v3018
      %v3315 = vsel %vm3296, %v3282, %v3020
      %v3316 = vsel %vm3296, %v3283, %v3022
      %v3317 = vsel %vm3296, %v3284, %v3024
      %v3318 = vsel %vm3296, %v3285, %v3026
      %v3319 = vsel %vm3296, %v3286, %v3028
      %v3320 = vsel %vm3296, %v3287, %v3030
      %v3321 = vsel %vm3296, %v3288, %v3032
      %v3322 = vsel %vm3296, %v3289, %v3034
      %v3323 = vsel %vm3296, %v3290, %v3036
      %v3324 = vsel %vm3296, %v3291, %v3038
      %v3325 = vsel %vm3296, %v3292, %v3040
      %v3326 = vsel %vm3296, %v3293, %v3042
      %v3327 = vsel %vm3296, %v3294, %v3036
      %v3328 = vsel %vm3296, %v3295, %v3038
      %vm3329 = vcmask 588800
      %v3331 = vsel %vm3329, %v3297, 0
      %v3334 = vsel %vm3329, %v3298, 0
      %v3337 = vsel %vm3329, %v3299, 0
      %v3340 = vsel %vm3329, %v3300, 0
      %v3343 = vsel %vm3329, %v3301, 0
      %v3346 = vsel %vm3329, %v3302, 0
      %v3349 = vsel %vm3329, %v3303, 0
      %v3352 = vsel %vm3329, %v3304, 0
      %v3355 = vsel %vm3329, %v3305, 0
      %v3358 = vsel %vm3329, %v3306, 0
      %v3361 = vsel %vm3329, %v3307, 0
      %v3364 = vsel %vm3329, %v3308, 0
      %v3367 = vsel %vm3329, %v3309, 0
      %v3370 = vsel %vm3329, %v3310, 0
      %v3373 = vsel %vm3329, %v3311, 0
      %v3376 = vsel %vm3329, %v3312, 0
      %v3379 = vsel %vm3329, %v3313, 0
      %v3382 = vsel %vm3329, %v3314, 0
      %v3385 = vsel %vm3329, %v3315, 0
      %v3388 = vsel %vm3329, %v3316, 0
      %v3391 = vsel %vm3329, %v3317, 0
      %v3394 = vsel %vm3329, %v3318, 0
      %v3397 = vsel %vm3329, %v3319, 0
      %v3400 = vsel %vm3329, %v3320, 0
      %v3403 = vsel %vm3329, %v3321, 0
      %v3406 = vsel %vm3329, %v3322, 0
      %v3409 = vsel %vm3329, %v3323, 0
      %v3412 = vsel %vm3329, %v3324, 0
      %v3415 = vsel %vm3329, %v3325, 0
      %v3418 = vsel %vm3329, %v3326, 0
      %v3421 = vsel %vm3329, %v3327, 0
      %v3424 = vsel %vm3329, %v3328, 0
      %3426 = vmatprep.subr.mxu0 0.0
      %3427 = vmatpush1.msra.mxu0 %v2134
      %3428 = vmatprep.subr.mxu0 0.0
      %3429 = vmatpush1.msra.mxu0 %v2135
      %3430 = vmatprep.subr.mxu0 0.0
      %3431 = vmatpush1.msra.mxu0 %v2136
      %3432 = vmatprep.subr.mxu0 0.0
      %3433 = vmatpush1.msra.mxu0 %v2137
      %3434 = vmatprep.subr.mxu0 0.0
      %3435 = vmatpush1.msra.mxu0 %v2138
      %3436 = vmatprep.subr.mxu0 0.0
      %3437 = vmatpush1.msra.mxu0 %v2139
      %3438 = vmatprep.subr.mxu0 0.0
      %3439 = vmatpush1.msra.mxu0 %v2140
      %3440 = vmatprep.subr.mxu0 0.0
      %3441 = vmatpush1.msra.mxu0 %v2141
      %3442 = vmatprep.subr.mxu0 0.0
      %3443 = vmatpush1.msra.mxu0 %v2142
      %3444 = vmatprep.subr.mxu0 0.0
      %3445 = vmatpush1.msra.mxu0 0.0
      %3446 = vmatprep.subr.mxu0 0.0
      %3447 = vmatpush1.msra.mxu0 0.0
      %3448 = vmatprep.subr.mxu0 0.0
      %3449 = vmatpush1.msra.mxu0 0.0
      %3450 = vmatprep.subr.mxu0 0.0
      %3451 = vmatpush1.msra.mxu0 0.0
      %3452 = vmatprep.subr.mxu0 0.0
      %3453 = vmatpush1.msra.mxu0 0.0
      %3454 = vmatprep.subr.mxu0 0.0
      %3455 = vmatpush1.msra.mxu0 0.0
      %3456 = vmatprep.subr.mxu0 0.0
      %3457 = vmatpush1.msra.mxu0 0.0
      %3458 = vmatprep.subr.mxu0 0.0
      %3459 = vmatpush1.msra.mxu0 0.0
      %3460 = vmatprep.subr.mxu0 0.0
      %3461 = vmatpush1.msra.mxu0 0.0
      %3462 = vmatprep.subr.mxu0 0.0
      %3463 = vmatpush1.msra.mxu0 0.0
      %3464 = vmatprep.subr.mxu0 0.0
      %3465 = vmatpush1.msra.mxu0 0.0
      %3466 = vmatprep.subr.mxu0 0.0
      %3467 = vmatpush1.msra.mxu0 0.0
      %3468 = vmatprep.subr.mxu0 0.0
      %3469 = vmatpush1.msra.mxu0 0.0
      %3470 = vmatprep.subr.mxu0 0.0
      %3471 = vmatpush1.msra.mxu0 0.0
      %3472 = vmatprep.subr.mxu0 0.0
      %3473 = vmatpush1.msra.mxu0 0.0
      %3474 = vmatprep.subr.mxu0 0.0
      %3475 = vmatpush1.msra.mxu0 0.0
      %3476 = vmatprep.subr.mxu0 0.0
      %3477 = vmatpush1.msra.mxu0 0.0
      %3478 = vmatprep.subr.mxu0 0.0
      %3479 = vmatpush1.msra.mxu0 0.0
      %3480 = vmatprep.subr.mxu0 0.0
      %3481 = vmatpush1.msra.mxu0 0.0
      %3482 = vmatprep.subr.mxu0 0.0
      %3483 = vmatpush1.msra.mxu0 0.0
      %3484 = vmatprep.subr.mxu0 0.0
      %3485 = vmatpush1.msra.mxu0 0.0
      %3486 = vmatprep.subr.mxu0 0.0
      %3487 = vmatpush1.msra.mxu0 0.0
      %3488 = vmatprep.subr.mxu0 0.0
      %3489 = vmatpush1.msra.mxu0 0.0
      %3490 = vmatprep.mubr.f32.mxu0 0.0
      %3491 = vmatmul.mubr.f32.gmra.mrb[0].mxu0 %v3331
      %v3492 = vpop.f32.mrb[0].mxu0
      %v3493 = vadd.f32 0.0, %v3492
      %v3494 = vpop.f32.mrb[0].mxu0
      %3495 = vmatprep.mubr.f32.mxu0 0.0
      %3496 = vmatmul.mubr.f32.gmra.mrb[0].mxu0 %v3334
      %v3497 = vpop.f32.mrb[0].mxu0
      %v3498 = vadd.f32 0.0, %v3497
      %v3499 = vpop.f32.mrb[0].mxu0
      %3500 = vmatprep.mubr.f32.mxu0 0.0
      %3501 = vmatmul.mubr.f32.gmra.mrb[0].mxu0 %v3337
      %v3502 = vpop.f32.mrb[0].mxu0
      %v3503 = vadd.f32 0.0, %v3502
      %v3504 = vpop.f32.mrb[0].mxu0
      %3505 = vmatprep.mubr.f32.mxu0 0.0
      %3506 = vmatmul.mubr.f32.gmra.mrb[0].mxu0 %v3340
      %v3507 = vpop.f32.mrb[0].mxu0
      %v3508 = vadd.f32 0.0, %v3507
      %v3509 = vpop.f32.mrb[0].mxu0
      %3510 = vmatprep.mubr.f32.mxu0 0.0
      %3511 = vmatmul.mubr.f32.gmra.mrb[0].mxu0 %v3343
      %v3512 = vpop.f32.mrb[0].mxu0
      %v3513 = vadd.f32 0.0, %v3512
      %v3514 = vpop.f32.mrb[0].mxu0
      %3515 = vmatprep.mubr.f32.mxu0 0.0
      %3516 = vmatmul.mubr.f32.gmra.mrb[0].mxu0 %v3346
      %v3517 = vpop.f32.mrb[0].mxu0
      %v3518 = vadd.f32 0.0, %v3517
      %v3519 = vpop.f32.mrb[0].mxu0
      %3520 = vmatprep.mubr.f32.mxu0 0.0
      %3521 = vmatmul.mubr.f32.gmra.mrb[0].mxu0 %v3349
      %v3522 = vpop.f32.mrb[0].mxu0
      %v3523 = vadd.f32 0.0, %v3522
      %v3524 = vpop.f32.mrb[0].mxu0
      %3525 = vmatprep.mubr.f32.mxu0 0.0
      %3526 = vmatmul.mubr.f32.gmra.mrb[0].mxu0 %v3352
      %v3527 = vpop.f32.mrb[0].mxu0
      %v3528 = vadd.f32 0.0, %v3527
      %v3529 = vpop.f32.mrb[0].mxu0
      %3530 = vmatprep.mubr.f32.mxu0 0.0
      %3531 = vmatmul.mubr.f32.gmra.mrb[0].mxu0 %v3355
      %v3532 = vpop.f32.mrb[0].mxu0
      %v3533 = vadd.f32 0.0, %v3532
      %v3534 = vpop.f32.mrb[0].mxu0
      %3535 = vmatprep.mubr.f32.mxu0 0.0
      %3536 = vmatmul.mubr.f32.gmra.mrb[0].mxu0 %v3358
      %v3537 = vpop.f32.mrb[0].mxu0
      %v3538 = vadd.f32 0.0, %v3537
      %v3539 = vpop.f32.mrb[0].mxu0
      %3540 = vmatprep.mubr.f32.mxu0 0.0
      %3541 = vmatmul.mubr.f32.gmra.mrb[0].mxu0 %v3361
      %v3542 = vpop.f32.mrb[0].mxu0
      %v3543 = vadd.f32 0.0, %v3542
      %v3544 = vpop.f32.mrb[0].mxu0
      %3545 = vmatprep.mubr.f32.mxu0 0.0
      %3546 = vmatmul.mubr.f32.gmra.mrb[0].mxu0 %v3364
      %v3547 = vpop.f32.mrb[0].mxu0
      %v3548 = vadd.f32 0.0, %v3547
      %v3549 = vpop.f32.mrb[0].mxu0
      %3550 = vmatprep.mubr.f32.mxu0 0.0
      %3551 = vmatmul.mubr.f32.gmra.mrb[0].mxu0 %v3367
      %v3552 = vpop.f32.mrb[0].mxu0
      %v3553 = vadd.f32 0.0, %v3552
      %v3554 = vpop.f32.mrb[0].mxu0
      %3555 = vmatprep.mubr.f32.mxu0 0.0
      %3556 = vmatmul.mubr.f32.gmra.mrb[0].mxu0 %v3370
      %v3557 = vpop.f32.mrb[0].mxu0
      %v3558 = vadd.f32 0.0, %v3557
      %v3559 = vpop.f32.mrb[0].mxu0
      %3560 = vmatprep.mubr.f32.mxu0 0.0
      %3561 = vmatmul.mubr.f32.gmra.mrb[0].mxu0 %v3373
      %v3562 = vpop.f32.mrb[0].mxu0
      %v3563 = vadd.f32 0.0, %v3562
      %v3564 = vpop.f32.mrb[0].mxu0
      %3565 = vmatprep.mubr.f32.mxu0 0.0
      %3566 = vmatmul.mubr.f32.gmra.mrb[0].mxu0 %v3376
      %v3567 = vpop.f32.mrb[0].mxu0
      %v3568 = vadd.f32 0.0, %v3567
      %v3569 = vpop.f32.mrb[0].mxu0
      %3570 = vmatprep.mubr.f32.mxu0 0.0
      %3571 = vmatmul.mubr.f32.gmra.mrb[0].mxu0 %v3379
      %v3572 = vpop.f32.mrb[0].mxu0
      %v3573 = vadd.f32 0.0, %v3572
      %v3574 = vpop.f32.mrb[0].mxu0
      %3575 = vmatprep.mubr.f32.mxu0 0.0
      %3576 = vmatmul.mubr.f32.gmra.mrb[0].mxu0 %v3382
      %v3577 = vpop.f32.mrb[0].mxu0
      %v3578 = vadd.f32 0.0, %v3577
      %v3579 = vpop.f32.mrb[0].mxu0
      %3580 = vmatprep.mubr.f32.mxu0 0.0
      %3581 = vmatmul.mubr.f32.gmra.mrb[0].mxu0 %v3385
      %v3582 = vpop.f32.mrb[0].mxu0
      %v3583 = vadd.f32 0.0, %v3582
      %v3584 = vpop.f32.mrb[0].mxu0
      %3585 = vmatprep.mubr.f32.mxu0 0.0
      %3586 = vmatmul.mubr.f32.gmra.mrb[0].mxu0 %v3388
      %v3587 = vpop.f32.mrb[0].mxu0
      %v3588 = vadd.f32 0.0, %v3587
      %v3589 = vpop.f32.mrb[0].mxu0
      %3590 = vmatprep.mubr.f32.mxu0 0.0
      %3591 = vmatmul.mubr.f32.gmra.mrb[0].mxu0 %v3391
      %v3592 = vpop.f32.mrb[0].mxu0
      %v3593 = vadd.f32 0.0, %v3592
      %v3594 = vpop.f32.mrb[0].mxu0
      %3595 = vmatprep.mubr.f32.mxu0 0.0
      %3596 = vmatmul.mubr.f32.gmra.mrb[0].mxu0 %v3394
      %v3597 = vpop.f32.mrb[0].mxu0
      %v3598 = vadd.f32 0.0, %v3597
      %v3599 = vpop.f32.mrb[0].mxu0
      %3600 = vmatprep.mubr.f32.mxu0 0.0
      %3601 = vmatmul.mubr.f32.gmra.mrb[0].mxu0 %v3397
      %v3602 = vpop.f32.mrb[0].mxu0
      %v3603 = vadd.f32 0.0, %v3602
      %v3604 = vpop.f32.mrb[0].mxu0
      %3605 = vmatprep.mubr.f32.mxu0 0.0
      %3606 = vmatmul.mubr.f32.gmra.mrb[0].mxu0 %v3400
      %v3607 = vpop.f32.mrb[0].mxu0
      %v3608 = vadd.f32 0.0, %v3607
      %v3609 = vpop.f32.mrb[0].mxu0
      %3610 = vmatprep.mubr.f32.mxu0 0.0
      %3611 = vmatmul.mubr.f32.gmra.mrb[0].mxu0 %v3403
      %v3612 = vpop.f32.mrb[0].mxu0
      %v3613 = vadd.f32 0.0, %v3612
      %v3614 = vpop.f32.mrb[0].mxu0
      %3615 = vmatprep.mubr.f32.mxu0 0.0
      %3616 = vmatmul.mubr.f32.gmra.mrb[0].mxu0 %v3406
      %v3617 = vpop.f32.mrb[0].mxu0
      %v3618 = vadd.f32 0.0, %v3617
      %v3619 = vpop.f32.mrb[0].mxu0
      %3620 = vmatprep.mubr.f32.mxu0 0.0
      %3621 = vmatmul.mubr.f32.gmra.mrb[0].mxu0 %v3409
      %v3622 = vpop.f32.mrb[0].mxu0
      %v3623 = vadd.f32 0.0, %v3622
      %v3624 = vpop.f32.mrb[0].mxu0
      %3625 = vmatprep.mubr.f32.mxu0 0.0
      %3626 = vmatmul.mubr.f32.gmra.mrb[0].mxu0 %v3412
      %v3627 = vpop.f32.mrb[0].mxu0
      %v3628 = vadd.f32 0.0, %v3627
      %v3629 = vpop.f32.mrb[0].mxu0
      %3630 = vmatprep.mubr.f32.mxu0 0.0
      %3631 = vmatmul.mubr.f32.gmra.mrb[0].mxu0 %v3415
      %v3632 = vpop.f32.mrb[0].mxu0
      %v3633 = vadd.f32 0.0, %v3632
      %v3634 = vpop.f32.mrb[0].mxu0
      %3635 = vmatprep.mubr.f32.mxu0 0.0
      %3636 = vmatmul.mubr.f32.gmra.mrb[0].mxu0 %v3418
      %v3637 = vpop.f32.mrb[0].mxu0
      %v3638 = vadd.f32 0.0, %v3637
      %v3639 = vpop.f32.mrb[0].mxu0
      %3640 = vmatprep.mubr.f32.mxu0 0.0
      %3641 = vmatmul.mubr.f32.gmra.mrb[0].mxu0 %v3421
      %v3642 = vpop.f32.mrb[0].mxu0
      %v3643 = vadd.f32 0.0, %v3642
      %v3644 = vpop.f32.mrb[0].mxu0
      %3645 = vmatprep.mubr.f32.mxu0 0.0
      %3646 = vmatmul.mubr.f32.gmra.mrb[0].mxu0 %v3424
      %v3647 = vpop.f32.mrb[0].mxu0
      %v3648 = vadd.f32 0.0, %v3647
      %v3649 = vpop.f32.mrb[0].mxu0
      %3650 = vdwg.mxu0
      %v3651 = vld [vmem:[%s3] sm:$0xf]
      %v3652 = vsel %vm1288, %v340, 0
      %v3654 = vsel %vm1288, %v342, 0
      %v3656 = vsel %vm1288, %v345, 0
      %v3658 = vsel %vm1288, %v347, 0
      %v3660 = vsel %vm1288, %v350, 0
      %v3662 = vsel %vm1288, %v352, 0
      %v3664 = vsel %vm1288, %v355, 0
      %v3666 = vsel %vm1288, %v357, 0
      %v3668 = vsel %vm1288, %v360, 0
      %v3670 = vsel %vm1288, %v362, 0
      %v3672 = vsel %vm1288, %v365, 0
      %v3674 = vsel %vm1288, %v367, 0
      %v3676 = vsel %vm1288, %v370, 0
      %v3678 = vsel %vm1288, %v372, 0
      %v3680 = vsel %vm1288, %v375, 0
      %v3682 = vsel %vm1288, %v377, 0
      %v3684 = vsel %vm1288, %v380, 0
      %v3686 = vsel %vm1288, %v382, 0
      %v3688 = vsel %vm1288, %v385, 0
      %v3690 = vsel %vm1288, %v387, 0
      %v3692 = vsel %vm1288, %v390, 0
      %v3694 = vsel %vm1288, %v392, 0
      %v3696 = vsel %vm1288, %v395, 0
      %v3698 = vsel %vm1288, %v397, 0
      %v3700 = vsel %vm1288, %v400, 0
      %v3702 = vsel %vm1288, %v402, 0
      %v3704 = vsel %vm1288, %v405, 0
      %v3706 = vsel %vm1288, %v407, 0
      %v3708 = vsel %vm1288, %v410, 0
      %v3710 = vsel %vm1288, %v412, 0
      %v3712 = vsel %vm1288, %v499, 0
      %v3714 = vsel %vm1288, %v501, 0
      %v3717 = vsel %vm1649, %v3651, 0
      %3719 = vmatprep.subr.mxu0 0.0
      %3720 = vmatpush1.msra.mxu0 %v3717
      %3721 = vmatprep.subr.mxu0 0.0
      %3722 = vmatpush1.msra.mxu0 0.0
      %3723 = vmatprep.subr.mxu0 0.0
      %3724 = vmatpush1.msra.mxu0 0.0
      %3725 = vmatprep.subr.mxu0 0.0
      %3726 = vmatpush1.msra.mxu0 0.0
      %3727 = vmatprep.subr.mxu0 0.0
      %3728 = vmatpush1.msra.mxu0 0.0
      %3729 = vmatprep.subr.mxu0 0.0
      %3730 = vmatpush1.msra.mxu0 0.0
      %3731 = vmatprep.subr.mxu0 0.0
      %3732 = vmatpush1.msra.mxu0 0.0
      %3733 = vmatprep.subr.mxu0 0.0
      %3734 = vmatpush1.msra.mxu0 0.0
      %3735 = vmatprep.subr.mxu0 0.0
      %3736 = vmatpush1.msra.mxu0 0.0
      %3737 = vmatprep.subr.mxu0 0.0
      %3738 = vmatpush1.msra.mxu0 0.0
      %3739 = vmatprep.subr.mxu0 0.0
      %3740 = vmatpush1.msra.mxu0 0.0
      %3741 = vmatprep.subr.mxu0 0.0
      %3742 = vmatpush1.msra.mxu0 0.0
      %3743 = vmatprep.subr.mxu0 0.0
      %3744 = vmatpush1.msra.mxu0 0.0
      %3745 = vmatprep.subr.mxu0 0.0
      %3746 = vmatpush1.msra.mxu0 0.0
      %3747 = vmatprep.subr.mxu0 0.0
      %3748 = vmatpush1.msra.mxu0 0.0
      %3749 = vmatprep.subr.mxu0 0.0
      %3750 = vmatpush1.msra.mxu0 0.0
      %3751 = vmatprep.subr.mxu0 0.0
      %3752 = vmatpush1.msra.mxu0 0.0
      %3753 = vmatprep.subr.mxu0 0.0
      %3754 = vmatpush1.msra.mxu0 0.0
      %3755 = vmatprep.subr.mxu0 0.0
      %3756 = vmatpush1.msra.mxu0 0.0
      %3757 = vmatprep.subr.mxu0 0.0
      %3758 = vmatpush1.msra.mxu0 0.0
      %3759 = vmatprep.subr.mxu0 0.0
      %3760 = vmatpush1.msra.mxu0 0.0
      %3761 = vmatprep.subr.mxu0 0.0
      %3762 = vmatpush1.msra.mxu0 0.0
      %3763 = vmatprep.subr.mxu0 0.0
      %3764 = vmatpush1.msra.mxu0 0.0
      %3765 = vmatprep.subr.mxu0 0.0
      %3766 = vmatpush1.msra.mxu0 0.0
      %3767 = vmatprep.subr.mxu0 0.0
      %3768 = vmatpush1.msra.mxu0 0.0
      %3769 = vmatprep.subr.mxu0 0.0
      %3770 = vmatpush1.msra.mxu0 0.0
      %3771 = vmatprep.subr.mxu0 0.0
      %3772 = vmatpush1.msra.mxu0 0.0
      %3773 = vmatprep.subr.mxu0 0.0
      %3774 = vmatpush1.msra.mxu0 0.0
      %3775 = vmatprep.subr.mxu0 0.0
      %3776 = vmatpush1.msra.mxu0 0.0
      %3777 = vmatprep.subr.mxu0 0.0
      %3778 = vmatpush1.msra.mxu0 0.0
      %3779 = vmatprep.subr.mxu0 0.0
      %3780 = vmatpush1.msra.mxu0 0.0
      %3781 = vmatprep.subr.mxu0 0.0
      %3782 = vmatpush1.msra.mxu0 0.0
      %3783 = vmatprep.mubr.f32.mxu0 0.0
      %3784 = vmatmul.mubr.f32.gmra.mrb[0].mxu0 %v3652
      %v3785 = vpop.f32.mrb[0].mxu0
      %v3786 = vadd.f32 0.0, %v3785
      %v3787 = vpop.f32.mrb[0].mxu0
      %3788 = vmatprep.mubr.f32.mxu0 0.0
      %3789 = vmatmul.mubr.f32.gmra.mrb[0].mxu0 %v3654
      %v3790 = vpop.f32.mrb[0].mxu0
      %v3791 = vadd.f32 0.0, %v3790
      %v3792 = vpop.f32.mrb[0].mxu0
      %3793 = vmatprep.mubr.f32.mxu0 0.0
      %3794 = vmatmul.mubr.f32.gmra.mrb[0].mxu0 %v3656
      %v3795 = vpop.f32.mrb[0].mxu0
      %v3796 = vadd.f32 0.0, %v3795
      %v3797 = vpop.f32.mrb[0].mxu0
      %3798 = vmatprep.mubr.f32.mxu0 0.0
      %3799 = vmatmul.mubr.f32.gmra.mrb[0].mxu0 %v3658
      %v3800 = vpop.f32.mrb[0].mxu0
      %v3801 = vadd.f32 0.0, %v3800
      %v3802 = vpop.f32.mrb[0].mxu0
      %3803 = vmatprep.mubr.f32.mxu0 0.0
      %3804 = vmatmul.mubr.f32.gmra.mrb[0].mxu0 %v3660
      %v3805 = vpop.f32.mrb[0].mxu0
      %v3806 = vadd.f32 0.0, %v3805
      %v3807 = vpop.f32.mrb[0].mxu0
      %3808 = vmatprep.mubr.f32.mxu0 0.0
      %3809 = vmatmul.mubr.f32.gmra.mrb[0].mxu0 %v3662
      %v3810 = vpop.f32.mrb[0].mxu0
      %v3811 = vadd.f32 0.0, %v3810
      %v3812 = vpop.f32.mrb[0].mxu0
      %3813 = vmatprep.mubr.f32.mxu0 0.0
      %3814 = vmatmul.mubr.f32.gmra.mrb[0].mxu0 %v3664
      %v3815 = vpop.f32.mrb[0].mxu0
      %v3816 = vadd.f32 0.0, %v3815
      %v3817 = vpop.f32.mrb[0].mxu0
      %3818 = vmatprep.mubr.f32.mxu0 0.0
      %3819 = vmatmul.mubr.f32.gmra.mrb[0].mxu0 %v3666
      %v3820 = vpop.f32.mrb[0].mxu0
      %v3821 = vadd.f32 0.0, %v3820
      %v3822 = vpop.f32.mrb[0].mxu0
      %3823 = vmatprep.mubr.f32.mxu0 0.0
      %3824 = vmatmul.mubr.f32.gmra.mrb[0].mxu0 %v3668
      %v3825 = vpop.f32.mrb[0].mxu0
      %v3826 = vadd.f32 0.0, %v3825
      %v3827 = vpop.f32.mrb[0].mxu0
      %3828 = vmatprep.mubr.f32.mxu0 0.0
      %3829 = vmatmul.mubr.f32.gmra.mrb[0].mxu0 %v3670
      %v3830 = vpop.f32.mrb[0].mxu0
      %v3831 = vadd.f32 0.0, %v3830
      %v3832 = vpop.f32.mrb[0].mxu0
      %3833 = vmatprep.mubr.f32.mxu0 0.0
      %3834 = vmatmul.mubr.f32.gmra.mrb[0].mxu0 %v3672
      %v3835 = vpop.f32.mrb[0].mxu0
      %v3836 = vadd.f32 0.0, %v3835
      %v3837 = vpop.f32.mrb[0].mxu0
      %3838 = vmatprep.mubr.f32.mxu0 0.0
      %3839 = vmatmul.mubr.f32.gmra.mrb[0].mxu0 %v3674
      %v3840 = vpop.f32.mrb[0].mxu0
      %v3841 = vadd.f32 0.0, %v3840
      %v3842 = vpop.f32.mrb[0].mxu0
      %3843 = vmatprep.mubr.f32.mxu0 0.0
      %3844 = vmatmul.mubr.f32.gmra.mrb[0].mxu0 %v3676
      %v3845 = vpop.f32.mrb[0].mxu0
      %v3846 = vadd.f32 0.0, %v3845
      %v3847 = vpop.f32.mrb[0].mxu0
      %3848 = vmatprep.mubr.f32.mxu0 0.0
      %3849 = vmatmul.mubr.f32.gmra.mrb[0].mxu0 %v3678
      %v3850 = vpop.f32.mrb[0].mxu0
      %v3851 = vadd.f32 0.0, %v3850
      %v3852 = vpop.f32.mrb[0].mxu0
      %3853 = vmatprep.mubr.f32.mxu0 0.0
      %3854 = vmatmul.mubr.f32.gmra.mrb[0].mxu0 %v3680
      %v3855 = vpop.f32.mrb[0].mxu0
      %v3856 = vadd.f32 0.0, %v3855
      %v3857 = vpop.f32.mrb[0].mxu0
      %3858 = vmatprep.mubr.f32.mxu0 0.0
      %3859 = vmatmul.mubr.f32.gmra.mrb[0].mxu0 %v3682
      %v3860 = vpop.f32.mrb[0].mxu0
      %v3861 = vadd.f32 0.0, %v3860
      %v3862 = vpop.f32.mrb[0].mxu0
      %3863 = vmatprep.mubr.f32.mxu0 0.0
      %3864 = vmatmul.mubr.f32.gmra.mrb[0].mxu0 %v3684
      %v3865 = vpop.f32.mrb[0].mxu0
      %v3866 = vadd.f32 0.0, %v3865
      %v3867 = vpop.f32.mrb[0].mxu0
      %3868 = vmatprep.mubr.f32.mxu0 0.0
      %3869 = vmatmul.mubr.f32.gmra.mrb[0].mxu0 %v3686
      %v3870 = vpop.f32.mrb[0].mxu0
      %v3871 = vadd.f32 0.0, %v3870
      %v3872 = vpop.f32.mrb[0].mxu0
      %3873 = vmatprep.mubr.f32.mxu0 0.0
      %3874 = vmatmul.mubr.f32.gmra.mrb[0].mxu0 %v3688
      %v3875 = vpop.f32.mrb[0].mxu0
      %v3876 = vadd.f32 0.0, %v3875
      %v3877 = vpop.f32.mrb[0].mxu0
      %3878 = vmatprep.mubr.f32.mxu0 0.0
      %3879 = vmatmul.mubr.f32.gmra.mrb[0].mxu0 %v3690
      %v3880 = vpop.f32.mrb[0].mxu0
      %v3881 = vadd.f32 0.0, %v3880
      %v3882 = vpop.f32.mrb[0].mxu0
      %3883 = vmatprep.mubr.f32.mxu0 0.0
      %3884 = vmatmul.mubr.f32.gmra.mrb[0].mxu0 %v3692
      %v3885 = vpop.f32.mrb[0].mxu0
      %v3886 = vadd.f32 0.0, %v3885
      %v3887 = vpop.f32.mrb[0].mxu0
      %3888 = vmatprep.mubr.f32.mxu0 0.0
      %3889 = vmatmul.mubr.f32.gmra.mrb[0].mxu0 %v3694
      %v3890 = vpop.f32.mrb[0].mxu0
      %v3891 = vadd.f32 0.0, %v3890
      %v3892 = vpop.f32.mrb[0].mxu0
      %3893 = vmatprep.mubr.f32.mxu0 0.0
      %3894 = vmatmul.mubr.f32.gmra.mrb[0].mxu0 %v3696
      %v3895 = vpop.f32.mrb[0].mxu0
      %v3896 = vadd.f32 0.0, %v3895
      %v3897 = vpop.f32.mrb[0].mxu0
      %3898 = vmatprep.mubr.f32.mxu0 0.0
      %3899 = vmatmul.mubr.f32.gmra.mrb[0].mxu0 %v3698
      %v3900 = vpop.f32.mrb[0].mxu0
      %v3901 = vadd.f32 0.0, %v3900
      %v3902 = vpop.f32.mrb[0].mxu0
      %3903 = vmatprep.mubr.f32.mxu0 0.0
      %3904 = vmatmul.mubr.f32.gmra.mrb[0].mxu0 %v3700
      %v3905 = vpop.f32.mrb[0].mxu0
      %v3906 = vadd.f32 0.0, %v3905
      %v3907 = vpop.f32.mrb[0].mxu0
      %3908 = vmatprep.mubr.f32.mxu0 0.0
      %3909 = vmatmul.mubr.f32.gmra.mrb[0].mxu0 %v3702
      %v3910 = vpop.f32.mrb[0].mxu0
      %v3911 = vadd.f32 0.0, %v3910
      %v3912 = vpop.f32.mrb[0].mxu0
      %3913 = vmatprep.mubr.f32.mxu0 0.0
      %3914 = vmatmul.mubr.f32.gmra.mrb[0].mxu0 %v3704
      %v3915 = vpop.f32.mrb[0].mxu0
      %v3916 = vadd.f32 0.0, %v3915
      %v3917 = vpop.f32.mrb[0].mxu0
      %3918 = vmatprep.mubr.f32.mxu0 0.0
      %3919 = vmatmul.mubr.f32.gmra.mrb[0].mxu0 %v3706
      %v3920 = vpop.f32.mrb[0].mxu0
      %v3921 = vadd.f32 0.0, %v3920
      %v3922 = vpop.f32.mrb[0].mxu0
      %3923 = vmatprep.mubr.f32.mxu0 0.0
      %3924 = vmatmul.mubr.f32.gmra.mrb[0].mxu0 %v3708
      %v3925 = vpop.f32.mrb[0].mxu0
      %v3926 = vadd.f32 0.0, %v3925
      %v3927 = vpop.f32.mrb[0].mxu0
      %3928 = vmatprep.mubr.f32.mxu0 0.0
      %3929 = vmatmul.mubr.f32.gmra.mrb[0].mxu0 %v3710
      %v3930 = vpop.f32.mrb[0].mxu0
      %v3931 = vadd.f32 0.0, %v3930
      %v3932 = vpop.f32.mrb[0].mxu0
      %3933 = vmatprep.mubr.f32.mxu0 0.0
      %3934 = vmatmul.mubr.f32.gmra.mrb[0].mxu0 %v3712
      %v3935 = vpop.f32.mrb[0].mxu0
      %v3936 = vadd.f32 0.0, %v3935
      %v3937 = vpop.f32.mrb[0].mxu0
      %3938 = vmatprep.mubr.f32.mxu0 0.0
      %3939 = vmatmul.mubr.f32.gmra.mrb[0].mxu0 %v3714
      %v3940 = vpop.f32.mrb[0].mxu0
      %v3941 = vadd.f32 0.0, %v3940
      %v3942 = vpop.f32.mrb[0].mxu0
      %3943 = vdwg.mxu0
      %3976 = vrot.lane.b32.xlu0 %v3786, 8
      %v3977 = vpop.permute.xlu0 %3976
      %3978 = vrot.lane.b32.xlu0 %v3791, 8
      %v3979 = vpop.permute.xlu0 %3978
      %3980 = vrot.lane.b32.xlu0 %v3796, 8
      %v3981 = vpop.permute.xlu0 %3980
      %3982 = vrot.lane.b32.xlu0 %v3801, 8
      %v3983 = vpop.permute.xlu0 %3982
      %3984 = vrot.lane.b32.xlu0 %v3806, 8
      %v3985 = vpop.permute.xlu0 %3984
      %3986 = vrot.lane.b32.xlu0 %v3811, 8
      %v3987 = vpop.permute.xlu0 %3986
      %3988 = vrot.lane.b32.xlu0 %v3816, 8
      %v3989 = vpop.permute.xlu0 %3988
      %3990 = vrot.lane.b32.xlu0 %v3821, 8
      %v3991 = vpop.permute.xlu0 %3990
      %3992 = vrot.lane.b32.xlu0 %v3826, 8
      %v3993 = vpop.permute.xlu0 %3992
      %3994 = vrot.lane.b32.xlu0 %v3831, 8
      %v3995 = vpop.permute.xlu0 %3994
      %3996 = vrot.lane.b32.xlu0 %v3836, 8
      %v3997 = vpop.permute.xlu0 %3996
      %3998 = vrot.lane.b32.xlu0 %v3841, 8
      %v3999 = vpop.permute.xlu0 %3998
      %4000 = vrot.lane.b32.xlu0 %v3846, 8
      %v4001 = vpop.permute.xlu0 %4000
      %4002 = vrot.lane.b32.xlu0 %v3851, 8
      %v4003 = vpop.permute.xlu0 %4002
      %4004 = vrot.lane.b32.xlu0 %v3856, 8
      %v4005 = vpop.permute.xlu0 %4004
      %4006 = vrot.lane.b32.xlu0 %v3861, 8
      %v4007 = vpop.permute.xlu0 %4006
      %4008 = vrot.lane.b32.xlu0 %v3866, 8
      %v4009 = vpop.permute.xlu0 %4008
      %4010 = vrot.lane.b32.xlu0 %v3871, 8
      %v4011 = vpop.permute.xlu0 %4010
      %4012 = vrot.lane.b32.xlu0 %v3876, 8
      %v4013 = vpop.permute.xlu0 %4012
      %4014 = vrot.lane.b32.xlu0 %v3881, 8
      %v4015 = vpop.permute.xlu0 %4014
      %4016 = vrot.lane.b32.xlu0 %v3886, 8
      %v4017 = vpop.permute.xlu0 %4016
      %4018 = vrot.lane.b32.xlu0 %v3891, 8
      %v4019 = vpop.permute.xlu0 %4018
      %4020 = vrot.lane.b32.xlu0 %v3896, 8
      %v4021 = vpop.permute.xlu0 %4020
      %4022 = vrot.lane.b32.xlu0 %v3901, 8
      %v4023 = vpop.permute.xlu0 %4022
      %4024 = vrot.lane.b32.xlu0 %v3906, 8
      %v4025 = vpop.permute.xlu0 %4024
      %4026 = vrot.lane.b32.xlu0 %v3911, 8
      %v4027 = vpop.permute.xlu0 %4026
      %4028 = vrot.lane.b32.xlu0 %v3916, 8
      %v4029 = vpop.permute.xlu0 %4028
      %4030 = vrot.lane.b32.xlu0 %v3921, 8
      %v4031 = vpop.permute.xlu0 %4030
      %4032 = vrot.lane.b32.xlu0 %v3926, 8
      %v4033 = vpop.permute.xlu0 %4032
      %4034 = vrot.lane.b32.xlu0 %v3931, 8
      %v4035 = vpop.permute.xlu0 %4034
      %4036 = vrot.lane.b32.xlu0 %v3936, 8
      %v4037 = vpop.permute.xlu0 %4036
      %4038 = vrot.lane.b32.xlu0 %v3941, 8
      %v4039 = vpop.permute.xlu0 %4038
      %v4072 = vsel %vm1321, %v3493, %v3977
      %v4073 = vsel %vm1321, %v3498, %v3979
      %v4074 = vsel %vm1321, %v3503, %v3981
      %v4075 = vsel %vm1321, %v3508, %v3983
      %v4076 = vsel %vm1321, %v3513, %v3985
      %v4077 = vsel %vm1321, %v3518, %v3987
      %v4078 = vsel %vm1321, %v3523, %v3989
      %v4079 = vsel %vm1321, %v3528, %v3991
      %v4080 = vsel %vm1321, %v3533, %v3993
      %v4081 = vsel %vm1321, %v3538, %v3995
      %v4082 = vsel %vm1321, %v3543, %v3997
      %v4083 = vsel %vm1321, %v3548, %v3999
      %v4084 = vsel %vm1321, %v3553, %v4001
      %v4085 = vsel %vm1321, %v3558, %v4003
      %v4086 = vsel %vm1321, %v3563, %v4005
      %v4087 = vsel %vm1321, %v3568, %v4007
      %v4088 = vsel %vm1321, %v3573, %v4009
      %v4089 = vsel %vm1321, %v3578, %v4011
      %v4090 = vsel %vm1321, %v3583, %v4013
      %v4091 = vsel %vm1321, %v3588, %v4015
      %v4092 = vsel %vm1321, %v3593, %v4017
      %v4093 = vsel %vm1321, %v3598, %v4019
      %v4094 = vsel %vm1321, %v3603, %v4021
      %v4095 = vsel %vm1321, %v3608, %v4023
      %v4096 = vsel %vm1321, %v3613, %v4025
      %v4097 = vsel %vm1321, %v3618, %v4027
      %v4098 = vsel %vm1321, %v3623, %v4029
      %v4099 = vsel %vm1321, %v3628, %v4031
      %v4100 = vsel %vm1321, %v3633, %v4033
      %v4101 = vsel %vm1321, %v3638, %v4035
      %v4102 = vsel %vm1321, %v3643, %v4037
      %v4103 = vsel %vm1321, %v3648, %v4039
      %v4120 = vrot.slane %v4074, 1
      %v4121 = vrot.slane %v4072, 1
      %v4122 = vrot.slane %v4076, 1
      %v4123 = vrot.slane %v4078, 1
      %v4124 = vrot.slane %v4080, 1
      %v4125 = vrot.slane %v4082, 1
      %v4126 = vrot.slane %v4084, 1
      %v4127 = vrot.slane %v4086, 1
      %v4128 = vrot.slane %v4088, 1
      %v4129 = vrot.slane %v4090, 1
      %v4130 = vrot.slane %v4092, 1
      %v4131 = vrot.slane %v4094, 1
      %v4132 = vrot.slane %v4096, 1
      %v4133 = vrot.slane %v4098, 1
      %v4134 = vrot.slane %v4100, 1
      %v4135 = vrot.slane %v4102, 1
      %v4168 = vrot.slane %v4074, 7
      %v4169 = vrot.slane %v4075, 7
      %v4170 = vsel %vm1974, %v4168, %v4169
      %v4171 = vrot.slane %v4072, 7
      %v4172 = vrot.slane %v4073, 7
      %v4173 = vsel %vm1974, %v4171, %v4172
      %v4174 = vrot.slane %v4076, 7
      %v4175 = vrot.slane %v4077, 7
      %v4176 = vsel %vm1974, %v4174, %v4175
      %v4177 = vrot.slane %v4078, 7
      %v4178 = vrot.slane %v4079, 7
      %v4179 = vsel %vm1974, %v4177, %v4178
      %v4180 = vrot.slane %v4080, 7
      %v4181 = vrot.slane %v4081, 7
      %v4182 = vsel %vm1974, %v4180, %v4181
      %v4183 = vrot.slane %v4082, 7
      %v4184 = vrot.slane %v4083, 7
      %v4185 = vsel %vm1974, %v4183, %v4184
      %v4186 = vrot.slane %v4084, 7
      %v4187 = vrot.slane %v4085, 7
      %v4188 = vsel %vm1974, %v4186, %v4187
      %v4189 = vrot.slane %v4086, 7
      %v4190 = vrot.slane %v4087, 7
      %v4191 = vsel %vm1974, %v4189, %v4190
      %v4192 = vrot.slane %v4088, 7
      %v4193 = vrot.slane %v4089, 7
      %v4194 = vsel %vm1974, %v4192, %v4193
      %v4195 = vrot.slane %v4090, 7
      %v4196 = vrot.slane %v4091, 7
      %v4197 = vsel %vm1974, %v4195, %v4196
      %v4198 = vrot.slane %v4092, 7
      %v4199 = vrot.slane %v4093, 7
      %v4200 = vsel %vm1974, %v4198, %v4199
      %v4201 = vrot.slane %v4094, 7
      %v4202 = vrot.slane %v4095, 7
      %v4203 = vsel %vm1974, %v4201, %v4202
      %v4204 = vrot.slane %v4096, 7
      %v4205 = vrot.slane %v4097, 7
      %v4206 = vsel %vm1974, %v4204, %v4205
      %v4207 = vrot.slane %v4098, 7
      %v4208 = vrot.slane %v4099, 7
      %v4209 = vsel %vm1974, %v4207, %v4208
      %v4210 = vrot.slane %v4100, 7
      %v4211 = vrot.slane %v4101, 7
      %v4212 = vsel %vm1974, %v4210, %v4211
      %v4213 = vrot.slane %v4102, 7
      %v4214 = vrot.slane %v4103, 7
      %v4215 = vsel %vm1974, %v4213, %v4214
      %v4263 = vrot.slane %v4075, 5
      %v4264 = vrot.slane %v4073, 5
      %v4265 = vrot.slane %v4077, 5
      %v4266 = vrot.slane %v4079, 5
      %v4267 = vrot.slane %v4081, 5
      %v4268 = vrot.slane %v4083, 5
      %v4269 = vrot.slane %v4085, 5
      %v4270 = vrot.slane %v4087, 5
      %v4271 = vrot.slane %v4089, 5
      %v4272 = vrot.slane %v4091, 5
      %v4273 = vrot.slane %v4093, 5
      %v4274 = vrot.slane %v4095, 5
      %v4275 = vrot.slane %v4097, 5
      %v4276 = vrot.slane %v4099, 5
      %v4277 = vrot.slane %v4101, 5
      %v4278 = vrot.slane %v4103, 5
      %v4295 = vsel %vm1974, %v4120, %v4168
      %v4296 = vsel %vm1974, %v4121, %v4171
      %v4297 = vsel %vm1974, %v4122, %v4174
      %v4298 = vsel %vm1974, %v4123, %v4177
      %v4299 = vsel %vm1974, %v4124, %v4180
      %v4300 = vsel %vm1974, %v4125, %v4183
      %v4301 = vsel %vm1974, %v4126, %v4186
      %v4302 = vsel %vm1974, %v4127, %v4189
      %v4303 = vsel %vm1974, %v4128, %v4192
      %v4304 = vsel %vm1974, %v4129, %v4195
      %v4305 = vsel %vm1974, %v4130, %v4198
      %v4306 = vsel %vm1974, %v4131, %v4201
      %v4307 = vsel %vm1974, %v4132, %v4204
      %v4308 = vsel %vm1974, %v4133, %v4207
      %v4309 = vsel %vm1974, %v4134, %v4210
      %v4310 = vsel %vm1974, %v4135, %v4213
      %v4311 = vsel %vm1974, %v4169, %v4263
      %v4312 = vsel %vm1974, %v4172, %v4264
      %v4313 = vsel %vm1974, %v4175, %v4265
      %v4314 = vsel %vm1974, %v4178, %v4266
      %v4315 = vsel %vm1974, %v4181, %v4267
      %v4316 = vsel %vm1974, %v4184, %v4268
      %v4317 = vsel %vm1974, %v4187, %v4269
      %v4318 = vsel %vm1974, %v4190, %v4270
      %v4319 = vsel %vm1974, %v4193, %v4271
      %v4320 = vsel %vm1974, %v4196, %v4272
      %v4321 = vsel %vm1974, %v4199, %v4273
      %v4322 = vsel %vm1974, %v4202, %v4274
      %v4323 = vsel %vm1974, %v4205, %v4275
      %v4324 = vsel %vm1974, %v4208, %v4276
      %v4325 = vsel %vm1974, %v4211, %v4277
      %v4326 = vsel %vm1974, %v4214, %v4278
      %v4327 = vld [vmem:[%s4] sm:$0xff]
      %v4328 = vld [vmem:[%s4 + $0x8] sm:$0xff]
      %v4329 = vld [vmem:[%s4 + $0x10] sm:$0xff]
      %v4330 = vld [vmem:[%s4 + $0x18] sm:$0xff]
      %v4331 = vld [vmem:[%s4 + $0x20] sm:$0xff]
      %v4332 = vld [vmem:[%s4 + $0x28] sm:$0xff]
      %v4333 = vld [vmem:[%s4 + $0x30] sm:$0xff]
      %v4334 = vld [vmem:[%s4 + $0x38] sm:$0xff]
      %v4335 = vld [vmem:[%s4 + $0x40] sm:$0xff]
      %v4336 = vld [vmem:[%s4 + $0x48] sm:$0xff]
      %v4337 = vld [vmem:[%s4 + $0x50] sm:$0xff]
      %v4338 = vld [vmem:[%s4 + $0x58] sm:$0xff]
      %v4339 = vld [vmem:[%s4 + $0x60] sm:$0xff]
      %v4340 = vld [vmem:[%s4 + $0x68] sm:$0xff]
      %v4341 = vld [vmem:[%s4 + $0x70] sm:$0xff]
      %v4342 = vld [vmem:[%s4 + $0x78] sm:$0xff]
      %v4343 = vld [vmem:[%s4 + $0x80] sm:$0xff]
      %v4344 = vld [vmem:[%s4 + $0x88] sm:$0xff]
      %v4375 = vrot.slane %v4295, 1
      %v4376 = vrot.slane %v4170, 1
      %v4377 = vsel %vm332, %v4375, %v4376
      %v4378 = vrot.slane %v4311, 1
      %v4379 = vsel %vm332, %v4376, %v4378
      %v4380 = vrot.slane %v4296, 1
      %v4381 = vrot.slane %v4173, 1
      %v4382 = vsel %vm332, %v4380, %v4381
      %v4383 = vrot.slane %v4312, 1
      %v4384 = vsel %vm332, %v4381, %v4383
      %v4385 = vrot.slane %v4297, 1
      %v4386 = vrot.slane %v4176, 1
      %v4387 = vsel %vm332, %v4385, %v4386
      %v4388 = vrot.slane %v4313, 1
      %v4389 = vsel %vm332, %v4386, %v4388
      %v4390 = vrot.slane %v4298, 1
      %v4391 = vrot.slane %v4179, 1
      %v4392 = vsel %vm332, %v4390, %v4391
      %v4393 = vrot.slane %v4314, 1
      %v4394 = vsel %vm332, %v4391, %v4393
      %v4395 = vrot.slane %v4299, 1
      %v4396 = vrot.slane %v4182, 1
      %v4397 = vsel %vm332, %v4395, %v4396
      %v4398 = vrot.slane %v4315, 1
      %v4399 = vsel %vm332, %v4396, %v4398
      %v4400 = vrot.slane %v4300, 1
      %v4401 = vrot.slane %v4185, 1
      %v4402 = vsel %vm332, %v4400, %v4401
      %v4403 = vrot.slane %v4316, 1
      %v4404 = vsel %vm332, %v4401, %v4403
      %v4405 = vrot.slane %v4301, 1
      %v4406 = vrot.slane %v4188, 1
      %v4407 = vsel %vm332, %v4405, %v4406
      %v4408 = vrot.slane %v4317, 1
      %v4409 = vsel %vm332, %v4406, %v4408
      %v4410 = vrot.slane %v4302, 1
      %v4411 = vrot.slane %v4191, 1
      %v4412 = vsel %vm332, %v4410, %v4411
      %v4413 = vrot.slane %v4318, 1
      %v4414 = vsel %vm332, %v4411, %v4413
      %v4415 = vrot.slane %v4303, 1
      %v4416 = vrot.slane %v4194, 1
      %v4417 = vsel %vm332, %v4415, %v4416
      %v4418 = vrot.slane %v4319, 1
      %v4419 = vsel %vm332, %v4416, %v4418
      %v4420 = vrot.slane %v4304, 1
      %v4421 = vrot.slane %v4197, 1
      %v4422 = vsel %vm332, %v4420, %v4421
      %v4423 = vrot.slane %v4320, 1
      %v4424 = vsel %vm332, %v4421, %v4423
      %v4425 = vrot.slane %v4305, 1
      %v4426 = vrot.slane %v4200, 1
      %v4427 = vsel %vm332, %v4425, %v4426
      %v4428 = vrot.slane %v4321, 1
      %v4429 = vsel %vm332, %v4426, %v4428
      %v4430 = vrot.slane %v4306, 1
      %v4431 = vrot.slane %v4203, 1
      %v4432 = vsel %vm332, %v4430, %v4431
      %v4433 = vrot.slane %v4322, 1
      %v4434 = vsel %vm332, %v4431, %v4433
      %v4435 = vrot.slane %v4307, 1
      %v4436 = vrot.slane %v4206, 1
      %v4437 = vsel %vm332, %v4435, %v4436
      %v4438 = vrot.slane %v4323, 1
      %v4439 = vsel %vm332, %v4436, %v4438
      %v4440 = vrot.slane %v4308, 1
      %v4441 = vrot.slane %v4209, 1
      %v4442 = vsel %vm332, %v4440, %v4441
      %v4443 = vrot.slane %v4324, 1
      %v4444 = vsel %vm332, %v4441, %v4443
      %v4445 = vrot.slane %v4309, 1
      %v4446 = vrot.slane %v4212, 1
      %v4447 = vsel %vm332, %v4445, %v4446
      %v4448 = vrot.slane %v4325, 1
      %v4449 = vsel %vm332, %v4446, %v4448
      %v4450 = vrot.slane %v4295, 2
      %v4451 = vrot.slane %v4170, 2
      %v4452 = vsel %vm413, %v4450, %v4451
      %v4453 = vrot.slane %v4311, 2
      %v4454 = vsel %vm413, %v4451, %v4453
      %v4455 = vrot.slane %v4296, 2
      %v4456 = vrot.slane %v4173, 2
      %v4457 = vsel %vm413, %v4455, %v4456
      %v4458 = vrot.slane %v4312, 2
      %v4459 = vsel %vm413, %v4456, %v4458
      %v4460 = vrot.slane %v4297, 2
      %v4461 = vrot.slane %v4176, 2
      %v4462 = vsel %vm413, %v4460, %v4461
      %v4463 = vrot.slane %v4313, 2
      %v4464 = vsel %vm413, %v4461, %v4463
      %v4465 = vrot.slane %v4298, 2
      %v4466 = vrot.slane %v4179, 2
      %v4467 = vsel %vm413, %v4465, %v4466
      %v4468 = vrot.slane %v4314, 2
      %v4469 = vsel %vm413, %v4466, %v4468
      %v4470 = vrot.slane %v4299, 2
      %v4471 = vrot.slane %v4182, 2
      %v4472 = vsel %vm413, %v4470, %v4471
      %v4473 = vrot.slane %v4315, 2
      %v4474 = vsel %vm413, %v4471, %v4473
      %v4475 = vrot.slane %v4300, 2
      %v4476 = vrot.slane %v4185, 2
      %v4477 = vsel %vm413, %v4475, %v4476
      %v4478 = vrot.slane %v4316, 2
      %v4479 = vsel %vm413, %v4476, %v4478
      %v4480 = vrot.slane %v4301, 2
      %v4481 = vrot.slane %v4188, 2
      %v4482 = vsel %vm413, %v4480, %v4481
      %v4483 = vrot.slane %v4317, 2
      %v4484 = vsel %vm413, %v4481, %v4483
      %v4485 = vrot.slane %v4302, 2
      %v4486 = vrot.slane %v4191, 2
      %v4487 = vsel %vm413, %v4485, %v4486
      %v4488 = vrot.slane %v4318, 2
      %v4489 = vsel %vm413, %v4486, %v4488
      %v4490 = vrot.slane %v4303, 2
      %v4491 = vrot.slane %v4194, 2
      %v4492 = vsel %vm413, %v4490, %v4491
      %v4493 = vrot.slane %v4319, 2
      %v4494 = vsel %vm413, %v4491, %v4493
      %v4495 = vrot.slane %v4304, 2
      %v4496 = vrot.slane %v4197, 2
      %v4497 = vsel %vm413, %v4495, %v4496
      %v4498 = vrot.slane %v4320, 2
      %v4499 = vsel %vm413, %v4496, %v4498
      %v4500 = vrot.slane %v4305, 2
      %v4501 = vrot.slane %v4200, 2
      %v4502 = vsel %vm413, %v4500, %v4501
      %v4503 = vrot.slane %v4321, 2
      %v4504 = vsel %vm413, %v4501, %v4503
      %v4505 = vrot.slane %v4306, 2
      %v4506 = vrot.slane %v4203, 2
      %v4507 = vsel %vm413, %v4505, %v4506
      %v4508 = vrot.slane %v4322, 2
      %v4509 = vsel %vm413, %v4506, %v4508
      %v4510 = vrot.slane %v4307, 2
      %v4511 = vrot.slane %v4206, 2
      %v4512 = vsel %vm413, %v4510, %v4511
      %v4513 = vrot.slane %v4323, 2
      %v4514 = vsel %vm413, %v4511, %v4513
      %v4515 = vrot.slane %v4308, 2
      %v4516 = vrot.slane %v4209, 2
      %v4517 = vsel %vm413, %v4515, %v4516
      %v4518 = vrot.slane %v4324, 2
      %v4519 = vsel %vm413, %v4516, %v4518
      %v4520 = vrot.slane %v4309, 2
      %v4521 = vrot.slane %v4212, 2
      %v4522 = vsel %vm413, %v4520, %v4521
      %v4523 = vrot.slane %v4325, 2
      %v4524 = vsel %vm413, %v4521, %v4523
      %v4527 = vrot.slane %v4310, 1
      %v4528 = vrot.slane %v4215, 1
      %v4529 = vsel %vm332, %v4527, %v4528
      %v4530 = vrot.slane %v4326, 1
      %v4531 = vsel %vm332, %v4528, %v4530
      %v4532 = vrot.slane %v4310, 2
      %v4533 = vrot.slane %v4215, 2
      %v4534 = vsel %vm413, %v4532, %v4533
      %v4535 = vrot.slane %v4326, 2
      %v4536 = vsel %vm413, %v4533, %v4535
      %4537 = vrot.lane.b32.xlu0 %v4377, 16
      %v4538 = vpop.permute.xlu0 %4537
      %4539 = vrot.lane.b32.xlu0 %v4379, 16
      %v4540 = vpop.permute.xlu0 %4539
      %4541 = vrot.lane.b32.xlu0 %v4382, 16
      %v4542 = vpop.permute.xlu0 %4541
      %4543 = vrot.lane.b32.xlu0 %v4384, 16
      %v4544 = vpop.permute.xlu0 %4543
      %4545 = vrot.lane.b32.xlu0 %v4387, 16
      %v4546 = vpop.permute.xlu0 %4545
      %4547 = vrot.lane.b32.xlu0 %v4389, 16
      %v4548 = vpop.permute.xlu0 %4547
      %4549 = vrot.lane.b32.xlu0 %v4392, 16
      %v4550 = vpop.permute.xlu0 %4549
      %4551 = vrot.lane.b32.xlu0 %v4394, 16
      %v4552 = vpop.permute.xlu0 %4551
      %4553 = vrot.lane.b32.xlu0 %v4397, 16
      %v4554 = vpop.permute.xlu0 %4553
      %4555 = vrot.lane.b32.xlu0 %v4399, 16
      %v4556 = vpop.permute.xlu0 %4555
      %4557 = vrot.lane.b32.xlu0 %v4402, 16
      %v4558 = vpop.permute.xlu0 %4557
      %4559 = vrot.lane.b32.xlu0 %v4404, 16
      %v4560 = vpop.permute.xlu0 %4559
      %4561 = vrot.lane.b32.xlu0 %v4407, 16
      %v4562 = vpop.permute.xlu0 %4561
      %4563 = vrot.lane.b32.xlu0 %v4409, 16
      %v4564 = vpop.permute.xlu0 %4563
      %4565 = vrot.lane.b32.xlu0 %v4412, 16
      %v4566 = vpop.permute.xlu0 %4565
      %4567 = vrot.lane.b32.xlu0 %v4414, 16
      %v4568 = vpop.permute.xlu0 %4567
      %4569 = vrot.lane.b32.xlu0 %v4417, 16
      %v4570 = vpop.permute.xlu0 %4569
      %4571 = vrot.lane.b32.xlu0 %v4419, 16
      %v4572 = vpop.permute.xlu0 %4571
      %4573 = vrot.lane.b32.xlu0 %v4422, 16
      %v4574 = vpop.permute.xlu0 %4573
      %4575 = vrot.lane.b32.xlu0 %v4424, 16
      %v4576 = vpop.permute.xlu0 %4575
      %4577 = vrot.lane.b32.xlu0 %v4427, 16
      %v4578 = vpop.permute.xlu0 %4577
      %4579 = vrot.lane.b32.xlu0 %v4429, 16
      %v4580 = vpop.permute.xlu0 %4579
      %4581 = vrot.lane.b32.xlu0 %v4432, 16
      %v4582 = vpop.permute.xlu0 %4581
      %4583 = vrot.lane.b32.xlu0 %v4434, 16
      %v4584 = vpop.permute.xlu0 %4583
      %4585 = vrot.lane.b32.xlu0 %v4437, 16
      %v4586 = vpop.permute.xlu0 %4585
      %4587 = vrot.lane.b32.xlu0 %v4439, 16
      %v4588 = vpop.permute.xlu0 %4587
      %4589 = vrot.lane.b32.xlu0 %v4442, 16
      %v4590 = vpop.permute.xlu0 %4589
      %4591 = vrot.lane.b32.xlu0 %v4444, 16
      %v4592 = vpop.permute.xlu0 %4591
      %4593 = vrot.lane.b32.xlu0 %v4447, 16
      %v4594 = vpop.permute.xlu0 %4593
      %4595 = vrot.lane.b32.xlu0 %v4449, 16
      %v4596 = vpop.permute.xlu0 %4595
      %4627 = vrot.lane.b32.xlu0 %v4452, 32
      %v4628 = vpop.permute.xlu0 %4627
      %4629 = vrot.lane.b32.xlu0 %v4454, 32
      %v4630 = vpop.permute.xlu0 %4629
      %4631 = vrot.lane.b32.xlu0 %v4457, 32
      %v4632 = vpop.permute.xlu0 %4631
      %4633 = vrot.lane.b32.xlu0 %v4459, 32
      %v4634 = vpop.permute.xlu0 %4633
      %4635 = vrot.lane.b32.xlu0 %v4462, 32
      %v4636 = vpop.permute.xlu0 %4635
      %4637 = vrot.lane.b32.xlu0 %v4464, 32
      %v4638 = vpop.permute.xlu0 %4637
      %4639 = vrot.lane.b32.xlu0 %v4467, 32
      %v4640 = vpop.permute.xlu0 %4639
      %4641 = vrot.lane.b32.xlu0 %v4469, 32
      %v4642 = vpop.permute.xlu0 %4641
      %4643 = vrot.lane.b32.xlu0 %v4472, 32
      %v4644 = vpop.permute.xlu0 %4643
      %4645 = vrot.lane.b32.xlu0 %v4474, 32
      %v4646 = vpop.permute.xlu0 %4645
      %4647 = vrot.lane.b32.xlu0 %v4477, 32
      %v4648 = vpop.permute.xlu0 %4647
      %4649 = vrot.lane.b32.xlu0 %v4479, 32
      %v4650 = vpop.permute.xlu0 %4649
      %4651 = vrot.lane.b32.xlu0 %v4482, 32
      %v4652 = vpop.permute.xlu0 %4651
      %4653 = vrot.lane.b32.xlu0 %v4484, 32
      %v4654 = vpop.permute.xlu0 %4653
      %4655 = vrot.lane.b32.xlu0 %v4487, 32
      %v4656 = vpop.permute.xlu0 %4655
      %4657 = vrot.lane.b32.xlu0 %v4489, 32
      %v4658 = vpop.permute.xlu0 %4657
      %4659 = vrot.lane.b32.xlu0 %v4492, 32
      %v4660 = vpop.permute.xlu0 %4659
      %4661 = vrot.lane.b32.xlu0 %v4494, 32
      %v4662 = vpop.permute.xlu0 %4661
      %4663 = vrot.lane.b32.xlu0 %v4497, 32
      %v4664 = vpop.permute.xlu0 %4663
      %4665 = vrot.lane.b32.xlu0 %v4499, 32
      %v4666 = vpop.permute.xlu0 %4665
      %4667 = vrot.lane.b32.xlu0 %v4502, 32
      %v4668 = vpop.permute.xlu0 %4667
      %4669 = vrot.lane.b32.xlu0 %v4504, 32
      %v4670 = vpop.permute.xlu0 %4669
      %4671 = vrot.lane.b32.xlu0 %v4507, 32
      %v4672 = vpop.permute.xlu0 %4671
      %4673 = vrot.lane.b32.xlu0 %v4509, 32
      %v4674 = vpop.permute.xlu0 %4673
      %4675 = vrot.lane.b32.xlu0 %v4512, 32
      %v4676 = vpop.permute.xlu0 %4675
      %4677 = vrot.lane.b32.xlu0 %v4514, 32
      %v4678 = vpop.permute.xlu0 %4677
      %4679 = vrot.lane.b32.xlu0 %v4517, 32
      %v4680 = vpop.permute.xlu0 %4679
      %4681 = vrot.lane.b32.xlu0 %v4519, 32
      %v4682 = vpop.permute.xlu0 %4681
      %4683 = vrot.lane.b32.xlu0 %v4522, 32
      %v4684 = vpop.permute.xlu0 %4683
      %4685 = vrot.lane.b32.xlu0 %v4524, 32
      %v4686 = vpop.permute.xlu0 %4685
      %4717 = vrot.lane.b32.xlu0 %v4296, 48
      %v4718 = vpop.permute.xlu0 %4717
      %4719 = vrot.lane.b32.xlu0 %v4173, 48
      %v4720 = vpop.permute.xlu0 %4719
      %4721 = vrot.lane.b32.xlu0 %v4295, 48
      %v4722 = vpop.permute.xlu0 %4721
      %4723 = vrot.lane.b32.xlu0 %v4170, 48
      %v4724 = vpop.permute.xlu0 %4723
      %4725 = vrot.lane.b32.xlu0 %v4297, 48
      %v4726 = vpop.permute.xlu0 %4725
      %4727 = vrot.lane.b32.xlu0 %v4176, 48
      %v4728 = vpop.permute.xlu0 %4727
      %4729 = vrot.lane.b32.xlu0 %v4298, 48
      %v4730 = vpop.permute.xlu0 %4729
      %4731 = vrot.lane.b32.xlu0 %v4179, 48
      %v4732 = vpop.permute.xlu0 %4731
      %4733 = vrot.lane.b32.xlu0 %v4299, 48
      %v4734 = vpop.permute.xlu0 %4733
      %4735 = vrot.lane.b32.xlu0 %v4182, 48
      %v4736 = vpop.permute.xlu0 %4735
      %4737 = vrot.lane.b32.xlu0 %v4300, 48
      %v4738 = vpop.permute.xlu0 %4737
      %4739 = vrot.lane.b32.xlu0 %v4185, 48
      %v4740 = vpop.permute.xlu0 %4739
      %4741 = vrot.lane.b32.xlu0 %v4301, 48
      %v4742 = vpop.permute.xlu0 %4741
      %4743 = vrot.lane.b32.xlu0 %v4188, 48
      %v4744 = vpop.permute.xlu0 %4743
      %4745 = vrot.lane.b32.xlu0 %v4302, 48
      %v4746 = vpop.permute.xlu0 %4745
      %4747 = vrot.lane.b32.xlu0 %v4191, 48
      %v4748 = vpop.permute.xlu0 %4747
      %4749 = vrot.lane.b32.xlu0 %v4303, 48
      %v4750 = vpop.permute.xlu0 %4749
      %4751 = vrot.lane.b32.xlu0 %v4194, 48
      %v4752 = vpop.permute.xlu0 %4751
      %4753 = vrot.lane.b32.xlu0 %v4304, 48
      %v4754 = vpop.permute.xlu0 %4753
      %4755 = vrot.lane.b32.xlu0 %v4197, 48
      %v4756 = vpop.permute.xlu0 %4755
      %4757 = vrot.lane.b32.xlu0 %v4305, 48
      %v4758 = vpop.permute.xlu0 %4757
      %4759 = vrot.lane.b32.xlu0 %v4200, 48
      %v4760 = vpop.permute.xlu0 %4759
      %4761 = vrot.lane.b32.xlu0 %v4306, 48
      %v4762 = vpop.permute.xlu0 %4761
      %4763 = vrot.lane.b32.xlu0 %v4203, 48
      %v4764 = vpop.permute.xlu0 %4763
      %4765 = vrot.lane.b32.xlu0 %v4307, 48
      %v4766 = vpop.permute.xlu0 %4765
      %4767 = vrot.lane.b32.xlu0 %v4206, 48
      %v4768 = vpop.permute.xlu0 %4767
      %4769 = vrot.lane.b32.xlu0 %v4308, 48
      %v4770 = vpop.permute.xlu0 %4769
      %4771 = vrot.lane.b32.xlu0 %v4209, 48
      %v4772 = vpop.permute.xlu0 %4771
      %4773 = vrot.lane.b32.xlu0 %v4309, 48
      %v4774 = vpop.permute.xlu0 %4773
      %4775 = vrot.lane.b32.xlu0 %v4212, 48
      %v4776 = vpop.permute.xlu0 %4775
      %4777 = vrot.lane.b32.xlu0 %v4310, 48
      %v4778 = vpop.permute.xlu0 %4777
      %4779 = vrot.lane.b32.xlu0 %v4215, 48
      %v4780 = vpop.permute.xlu0 %4779
      %4813 = vrot.lane.b32.xlu0 %v4382, 64
      %v4814 = vpop.permute.xlu0 %4813
      %4815 = vrot.lane.b32.xlu0 %v4384, 64
      %v4816 = vpop.permute.xlu0 %4815
      %4817 = vrot.lane.b32.xlu0 %v4377, 64
      %v4818 = vpop.permute.xlu0 %4817
      %4819 = vrot.lane.b32.xlu0 %v4379, 64
      %v4820 = vpop.permute.xlu0 %4819
      %4821 = vrot.lane.b32.xlu0 %v4387, 64
      %v4822 = vpop.permute.xlu0 %4821
      %4823 = vrot.lane.b32.xlu0 %v4389, 64
      %v4824 = vpop.permute.xlu0 %4823
      %4825 = vrot.lane.b32.xlu0 %v4392, 64
      %v4826 = vpop.permute.xlu0 %4825
      %4827 = vrot.lane.b32.xlu0 %v4394, 64
      %v4828 = vpop.permute.xlu0 %4827
      %4829 = vrot.lane.b32.xlu0 %v4397, 64
      %v4830 = vpop.permute.xlu0 %4829
      %4831 = vrot.lane.b32.xlu0 %v4399, 64
      %v4832 = vpop.permute.xlu0 %4831
      %4833 = vrot.lane.b32.xlu0 %v4402, 64
      %v4834 = vpop.permute.xlu0 %4833
      %4835 = vrot.lane.b32.xlu0 %v4404, 64
      %v4836 = vpop.permute.xlu0 %4835
      %4837 = vrot.lane.b32.xlu0 %v4407, 64
      %v4838 = vpop.permute.xlu0 %4837
      %4839 = vrot.lane.b32.xlu0 %v4409, 64
      %v4840 = vpop.permute.xlu0 %4839
      %4841 = vrot.lane.b32.xlu0 %v4412, 64
      %v4842 = vpop.permute.xlu0 %4841
      %4843 = vrot.lane.b32.xlu0 %v4414, 64
      %v4844 = vpop.permute.xlu0 %4843
      %4845 = vrot.lane.b32.xlu0 %v4417, 64
      %v4846 = vpop.permute.xlu0 %4845
      %4847 = vrot.lane.b32.xlu0 %v4419, 64
      %v4848 = vpop.permute.xlu0 %4847
      %4849 = vrot.lane.b32.xlu0 %v4422, 64
      %v4850 = vpop.permute.xlu0 %4849
      %4851 = vrot.lane.b32.xlu0 %v4424, 64
      %v4852 = vpop.permute.xlu0 %4851
      %4853 = vrot.lane.b32.xlu0 %v4427, 64
      %v4854 = vpop.permute.xlu0 %4853
      %4855 = vrot.lane.b32.xlu0 %v4429, 64
      %v4856 = vpop.permute.xlu0 %4855
      %4857 = vrot.lane.b32.xlu0 %v4432, 64
      %v4858 = vpop.permute.xlu0 %4857
      %4859 = vrot.lane.b32.xlu0 %v4434, 64
      %v4860 = vpop.permute.xlu0 %4859
      %4861 = vrot.lane.b32.xlu0 %v4437, 64
      %v4862 = vpop.permute.xlu0 %4861
      %4863 = vrot.lane.b32.xlu0 %v4439, 64
      %v4864 = vpop.permute.xlu0 %4863
      %4865 = vrot.lane.b32.xlu0 %v4442, 64
      %v4866 = vpop.permute.xlu0 %4865
      %4867 = vrot.lane.b32.xlu0 %v4444, 64
      %v4868 = vpop.permute.xlu0 %4867
      %4869 = vrot.lane.b32.xlu0 %v4447, 64
      %v4870 = vpop.permute.xlu0 %4869
      %4871 = vrot.lane.b32.xlu0 %v4449, 64
      %v4872 = vpop.permute.xlu0 %4871
      %4873 = vrot.lane.b32.xlu0 %v4529, 64
      %v4874 = vpop.permute.xlu0 %4873
      %4875 = vrot.lane.b32.xlu0 %v4531, 64
      %v4876 = vpop.permute.xlu0 %4875
      %4909 = vrot.lane.b32.xlu0 %v4457, 80
      %v4910 = vpop.permute.xlu0 %4909
      %4911 = vrot.lane.b32.xlu0 %v4459, 80
      %v4912 = vpop.permute.xlu0 %4911
      %4913 = vrot.lane.b32.xlu0 %v4452, 80
      %v4914 = vpop.permute.xlu0 %4913
      %4915 = vrot.lane.b32.xlu0 %v4454, 80
      %v4916 = vpop.permute.xlu0 %4915
      %4917 = vrot.lane.b32.xlu0 %v4462, 80
      %v4918 = vpop.permute.xlu0 %4917
      %4919 = vrot.lane.b32.xlu0 %v4464, 80
      %v4920 = vpop.permute.xlu0 %4919
      %4921 = vrot.lane.b32.xlu0 %v4467, 80
      %v4922 = vpop.permute.xlu0 %4921
      %4923 = vrot.lane.b32.xlu0 %v4469, 80
      %v4924 = vpop.permute.xlu0 %4923
      %4925 = vrot.lane.b32.xlu0 %v4472, 80
      %v4926 = vpop.permute.xlu0 %4925
      %4927 = vrot.lane.b32.xlu0 %v4474, 80
      %v4928 = vpop.permute.xlu0 %4927
      %4929 = vrot.lane.b32.xlu0 %v4477, 80
      %v4930 = vpop.permute.xlu0 %4929
      %4931 = vrot.lane.b32.xlu0 %v4479, 80
      %v4932 = vpop.permute.xlu0 %4931
      %4933 = vrot.lane.b32.xlu0 %v4482, 80
      %v4934 = vpop.permute.xlu0 %4933
      %4935 = vrot.lane.b32.xlu0 %v4484, 80
      %v4936 = vpop.permute.xlu0 %4935
      %4937 = vrot.lane.b32.xlu0 %v4487, 80
      %v4938 = vpop.permute.xlu0 %4937
      %4939 = vrot.lane.b32.xlu0 %v4489, 80
      %v4940 = vpop.permute.xlu0 %4939
      %4941 = vrot.lane.b32.xlu0 %v4492, 80
      %v4942 = vpop.permute.xlu0 %4941
      %4943 = vrot.lane.b32.xlu0 %v4494, 80
      %v4944 = vpop.permute.xlu0 %4943
      %4945 = vrot.lane.b32.xlu0 %v4497, 80
      %v4946 = vpop.permute.xlu0 %4945
      %4947 = vrot.lane.b32.xlu0 %v4499, 80
      %v4948 = vpop.permute.xlu0 %4947
      %4949 = vrot.lane.b32.xlu0 %v4502, 80
      %v4950 = vpop.permute.xlu0 %4949
      %4951 = vrot.lane.b32.xlu0 %v4504, 80
      %v4952 = vpop.permute.xlu0 %4951
      %4953 = vrot.lane.b32.xlu0 %v4507, 80
      %v4954 = vpop.permute.xlu0 %4953
      %4955 = vrot.lane.b32.xlu0 %v4509, 80
      %v4956 = vpop.permute.xlu0 %4955
      %4957 = vrot.lane.b32.xlu0 %v4512, 80
      %v4958 = vpop.permute.xlu0 %4957
      %4959 = vrot.lane.b32.xlu0 %v4514, 80
      %v4960 = vpop.permute.xlu0 %4959
      %4961 = vrot.lane.b32.xlu0 %v4517, 80
      %v4962 = vpop.permute.xlu0 %4961
      %4963 = vrot.lane.b32.xlu0 %v4519, 80
      %v4964 = vpop.permute.xlu0 %4963
      %4965 = vrot.lane.b32.xlu0 %v4522, 80
      %v4966 = vpop.permute.xlu0 %4965
      %4967 = vrot.lane.b32.xlu0 %v4524, 80
      %v4968 = vpop.permute.xlu0 %4967
      %4969 = vrot.lane.b32.xlu0 %v4534, 80
      %v4970 = vpop.permute.xlu0 %4969
      %4971 = vrot.lane.b32.xlu0 %v4536, 80
      %v4972 = vpop.permute.xlu0 %4971
      %5005 = vrot.lane.b32.xlu0 %v4295, 96
      %v5006 = vpop.permute.xlu0 %5005
      %5007 = vrot.lane.b32.xlu0 %v4170, 96
      %v5008 = vpop.permute.xlu0 %5007
      %5009 = vrot.lane.b32.xlu0 %v4297, 96
      %v5010 = vpop.permute.xlu0 %5009
      %5011 = vrot.lane.b32.xlu0 %v4176, 96
      %v5012 = vpop.permute.xlu0 %5011
      %5013 = vrot.lane.b32.xlu0 %v4298, 96
      %v5014 = vpop.permute.xlu0 %5013
      %5015 = vrot.lane.b32.xlu0 %v4179, 96
      %v5016 = vpop.permute.xlu0 %5015
      %5017 = vrot.lane.b32.xlu0 %v4299, 96
      %v5018 = vpop.permute.xlu0 %5017
      %5019 = vrot.lane.b32.xlu0 %v4182, 96
      %v5020 = vpop.permute.xlu0 %5019
      %5021 = vrot.lane.b32.xlu0 %v4300, 96
      %v5022 = vpop.permute.xlu0 %5021
      %5023 = vrot.lane.b32.xlu0 %v4185, 96
      %v5024 = vpop.permute.xlu0 %5023
      %5025 = vrot.lane.b32.xlu0 %v4301, 96
      %v5026 = vpop.permute.xlu0 %5025
      %5027 = vrot.lane.b32.xlu0 %v4188, 96
      %v5028 = vpop.permute.xlu0 %5027
      %5029 = vrot.lane.b32.xlu0 %v4302, 96
      %v5030 = vpop.permute.xlu0 %5029
      %5031 = vrot.lane.b32.xlu0 %v4191, 96
      %v5032 = vpop.permute.xlu0 %5031
      %5033 = vrot.lane.b32.xlu0 %v4303, 96
      %v5034 = vpop.permute.xlu0 %5033
      %5035 = vrot.lane.b32.xlu0 %v4194, 96
      %v5036 = vpop.permute.xlu0 %5035
      %5037 = vrot.lane.b32.xlu0 %v4304, 96
      %v5038 = vpop.permute.xlu0 %5037
      %5039 = vrot.lane.b32.xlu0 %v4197, 96
      %v5040 = vpop.permute.xlu0 %5039
      %5041 = vrot.lane.b32.xlu0 %v4305, 96
      %v5042 = vpop.permute.xlu0 %5041
      %5043 = vrot.lane.b32.xlu0 %v4200, 96
      %v5044 = vpop.permute.xlu0 %5043
      %5045 = vrot.lane.b32.xlu0 %v4306, 96
      %v5046 = vpop.permute.xlu0 %5045
      %5047 = vrot.lane.b32.xlu0 %v4203, 96
      %v5048 = vpop.permute.xlu0 %5047
      %5049 = vrot.lane.b32.xlu0 %v4307, 96
      %v5050 = vpop.permute.xlu0 %5049
      %5051 = vrot.lane.b32.xlu0 %v4206, 96
      %v5052 = vpop.permute.xlu0 %5051
      %5053 = vrot.lane.b32.xlu0 %v4308, 96
      %v5054 = vpop.permute.xlu0 %5053
      %5055 = vrot.lane.b32.xlu0 %v4209, 96
      %v5056 = vpop.permute.xlu0 %5055
      %5057 = vrot.lane.b32.xlu0 %v4309, 96
      %v5058 = vpop.permute.xlu0 %5057
      %5059 = vrot.lane.b32.xlu0 %v4212, 96
      %v5060 = vpop.permute.xlu0 %5059
      %5061 = vrot.lane.b32.xlu0 %v4310, 96
      %v5062 = vpop.permute.xlu0 %5061
      %5063 = vrot.lane.b32.xlu0 %v4215, 96
      %v5064 = vpop.permute.xlu0 %5063
      %5095 = vrot.lane.b32.xlu0 %v4377, 112
      %v5096 = vpop.permute.xlu0 %5095
      %5097 = vrot.lane.b32.xlu0 %v4379, 112
      %v5098 = vpop.permute.xlu0 %5097
      %5099 = vrot.lane.b32.xlu0 %v4387, 112
      %v5100 = vpop.permute.xlu0 %5099
      %5101 = vrot.lane.b32.xlu0 %v4389, 112
      %v5102 = vpop.permute.xlu0 %5101
      %5103 = vrot.lane.b32.xlu0 %v4392, 112
      %v5104 = vpop.permute.xlu0 %5103
      %5105 = vrot.lane.b32.xlu0 %v4394, 112
      %v5106 = vpop.permute.xlu0 %5105
      %5107 = vrot.lane.b32.xlu0 %v4397, 112
      %v5108 = vpop.permute.xlu0 %5107
      %5109 = vrot.lane.b32.xlu0 %v4399, 112
      %v5110 = vpop.permute.xlu0 %5109
      %5111 = vrot.lane.b32.xlu0 %v4402, 112
      %v5112 = vpop.permute.xlu0 %5111
      %5113 = vrot.lane.b32.xlu0 %v4404, 112
      %v5114 = vpop.permute.xlu0 %5113
      %5115 = vrot.lane.b32.xlu0 %v4407, 112
      %v5116 = vpop.permute.xlu0 %5115
      %5117 = vrot.lane.b32.xlu0 %v4409, 112
      %v5118 = vpop.permute.xlu0 %5117
      %5119 = vrot.lane.b32.xlu0 %v4412, 112
      %v5120 = vpop.permute.xlu0 %5119
      %5121 = vrot.lane.b32.xlu0 %v4414, 112
      %v5122 = vpop.permute.xlu0 %5121
      %5123 = vrot.lane.b32.xlu0 %v4417, 112
      %v5124 = vpop.permute.xlu0 %5123
      %5125 = vrot.lane.b32.xlu0 %v4419, 112
      %v5126 = vpop.permute.xlu0 %5125
      %5127 = vrot.lane.b32.xlu0 %v4422, 112
      %v5128 = vpop.permute.xlu0 %5127
      %5129 = vrot.lane.b32.xlu0 %v4424, 112
      %v5130 = vpop.permute.xlu0 %5129
      %5131 = vrot.lane.b32.xlu0 %v4427, 112
      %v5132 = vpop.permute.xlu0 %5131
      %5133 = vrot.lane.b32.xlu0 %v4429, 112
      %v5134 = vpop.permute.xlu0 %5133
      %5135 = vrot.lane.b32.xlu0 %v4432, 112
      %v5136 = vpop.permute.xlu0 %5135
      %5137 = vrot.lane.b32.xlu0 %v4434, 112
      %v5138 = vpop.permute.xlu0 %5137
      %5139 = vrot.lane.b32.xlu0 %v4437, 112
      %v5140 = vpop.permute.xlu0 %5139
      %5141 = vrot.lane.b32.xlu0 %v4439, 112
      %v5142 = vpop.permute.xlu0 %5141
      %5143 = vrot.lane.b32.xlu0 %v4442, 112
      %v5144 = vpop.permute.xlu0 %5143
      %5145 = vrot.lane.b32.xlu0 %v4444, 112
      %v5146 = vpop.permute.xlu0 %5145
      %5147 = vrot.lane.b32.xlu0 %v4447, 112
      %v5148 = vpop.permute.xlu0 %5147
      %5149 = vrot.lane.b32.xlu0 %v4449, 112
      %v5150 = vpop.permute.xlu0 %5149
      %5151 = vrot.lane.b32.xlu0 %v4529, 112
      %v5152 = vpop.permute.xlu0 %5151
      %5153 = vrot.lane.b32.xlu0 %v4531, 112
      %v5154 = vpop.permute.xlu0 %5153
      %v5185 = vsel %vm1387, %v4295, %v4538
      %v5186 = vsel %vm1387, %v4170, %v4540
      %v5187 = vsel %vm1387, %v4296, %v4542
      %v5188 = vsel %vm1387, %v4173, %v4544
      %v5189 = vsel %vm1387, %v4297, %v4546
      %v5190 = vsel %vm1387, %v4176, %v4548
      %v5191 = vsel %vm1387, %v4298, %v4550
      %v5192 = vsel %vm1387, %v4179, %v4552
      %v5193 = vsel %vm1387, %v4299, %v4554
      %v5194 = vsel %vm1387, %v4182, %v4556
      %v5195 = vsel %vm1387, %v4300, %v4558
      %v5196 = vsel %vm1387, %v4185, %v4560
      %v5197 = vsel %vm1387, %v4301, %v4562
      %v5198 = vsel %vm1387, %v4188, %v4564
      %v5199 = vsel %vm1387, %v4302, %v4566
      %v5200 = vsel %vm1387, %v4191, %v4568
      %v5201 = vsel %vm1387, %v4303, %v4570
      %v5202 = vsel %vm1387, %v4194, %v4572
      %v5203 = vsel %vm1387, %v4304, %v4574
      %v5204 = vsel %vm1387, %v4197, %v4576
      %v5205 = vsel %vm1387, %v4305, %v4578
      %v5206 = vsel %vm1387, %v4200, %v4580
      %v5207 = vsel %vm1387, %v4306, %v4582
      %v5208 = vsel %vm1387, %v4203, %v4584
      %v5209 = vsel %vm1387, %v4307, %v4586
      %v5210 = vsel %vm1387, %v4206, %v4588
      %v5211 = vsel %vm1387, %v4308, %v4590
      %v5212 = vsel %vm1387, %v4209, %v4592
      %v5213 = vsel %vm1387, %v4309, %v4594
      %v5214 = vsel %vm1387, %v4212, %v4596
      %v5215 = vsel %vm1519, %v5185, %v4628
      %v5216 = vsel %vm1519, %v5186, %v4630
      %v5217 = vsel %vm1519, %v5187, %v4632
      %v5218 = vsel %vm1519, %v5188, %v4634
      %v5219 = vsel %vm1519, %v5189, %v4636
      %v5220 = vsel %vm1519, %v5190, %v4638
      %v5221 = vsel %vm1519, %v5191, %v4640
      %v5222 = vsel %vm1519, %v5192, %v4642
      %v5223 = vsel %vm1519, %v5193, %v4644
      %v5224 = vsel %vm1519, %v5194, %v4646
      %v5225 = vsel %vm1519, %v5195, %v4648
      %v5226 = vsel %vm1519, %v5196, %v4650
      %v5227 = vsel %vm1519, %v5197, %v4652
      %v5228 = vsel %vm1519, %v5198, %v4654
      %v5229 = vsel %vm1519, %v5199, %v4656
      %v5230 = vsel %vm1519, %v5200, %v4658
      %v5231 = vsel %vm1519, %v5201, %v4660
      %v5232 = vsel %vm1519, %v5202, %v4662
      %v5233 = vsel %vm1519, %v5203, %v4664
      %v5234 = vsel %vm1519, %v5204, %v4666
      %v5235 = vsel %vm1519, %v5205, %v4668
      %v5236 = vsel %vm1519, %v5206, %v4670
      %v5237 = vsel %vm1519, %v5207, %v4672
      %v5238 = vsel %vm1519, %v5208, %v4674
      %v5239 = vsel %vm1519, %v5209, %v4676
      %v5240 = vsel %vm1519, %v5210, %v4678
      %v5241 = vsel %vm1519, %v5211, %v4680
      %v5242 = vsel %vm1519, %v5212, %v4682
      %v5243 = vsel %vm1519, %v5213, %v4684
      %v5244 = vsel %vm1519, %v5214, %v4686
      %v5245 = vsel %vm3230, %v5215, %v4718
      %v5246 = vsel %vm3230, %v5216, %v4720
      %v5247 = vsel %vm3230, %v5217, %v4722
      %v5248 = vsel %vm3230, %v5218, %v4724
      %v5249 = vsel %vm3230, %v5215, %v4726
      %v5250 = vsel %vm3230, %v5216, %v4728
      %v5251 = vsel %vm3230, %v5219, %v4730
      %v5252 = vsel %vm3230, %v5220, %v4732
      %v5253 = vsel %vm3230, %v5221, %v4734
      %v5254 = vsel %vm3230, %v5222, %v4736
      %v5255 = vsel %vm3230, %v5223, %v4738
      %v5256 = vsel %vm3230, %v5224, %v4740
      %v5257 = vsel %vm3230, %v5225, %v4742
      %v5258 = vsel %vm3230, %v5226, %v4744
      %v5259 = vsel %vm3230, %v5227, %v4746
      %v5260 = vsel %vm3230, %v5228, %v4748
      %v5261 = vsel %vm3230, %v5229, %v4750
      %v5262 = vsel %vm3230, %v5230, %v4752
      %v5263 = vsel %vm3230, %v5231, %v4754
      %v5264 = vsel %vm3230, %v5232, %v4756
      %v5265 = vsel %vm3230, %v5233, %v4758
      %v5266 = vsel %vm3230, %v5234, %v4760
      %v5267 = vsel %vm3230, %v5235, %v4762
      %v5268 = vsel %vm3230, %v5236, %v4764
      %v5269 = vsel %vm3230, %v5237, %v4766
      %v5270 = vsel %vm3230, %v5238, %v4768
      %v5271 = vsel %vm3230, %v5239, %v4770
      %v5272 = vsel %vm3230, %v5240, %v4772
      %v5273 = vsel %vm3230, %v5241, %v4774
      %v5274 = vsel %vm3230, %v5242, %v4776
      %v5275 = vsel %vm3230, %v5243, %v4778
      %v5276 = vsel %vm3230, %v5244, %v4780
      %v5277 = vsel %vm3296, %v5245, %v4814
      %v5278 = vsel %vm3296, %v5246, %v4816
      %v5279 = vsel %vm3296, %v5247, %v4818
      %v5280 = vsel %vm3296, %v5248, %v4820
      %v5281 = vsel %vm3296, %v5249, %v4822
      %v5282 = vsel %vm3296, %v5250, %v4824
      %v5283 = vsel %vm3296, %v5251, %v4826
      %v5284 = vsel %vm3296, %v5252, %v4828
      %v5285 = vsel %vm3296, %v5253, %v4830
      %v5286 = vsel %vm3296, %v5254, %v4832
      %v5287 = vsel %vm3296, %v5255, %v4834
      %v5288 = vsel %vm3296, %v5256, %v4836
      %v5289 = vsel %vm3296, %v5257, %v4838
      %v5290 = vsel %vm3296, %v5258, %v4840
      %v5291 = vsel %vm3296, %v5259, %v4842
      %v5292 = vsel %vm3296, %v5260, %v4844
      %v5293 = vsel %vm3296, %v5261, %v4846
      %v5294 = vsel %vm3296, %v5262, %v4848
      %v5295 = vsel %vm3296, %v5263, %v4850
      %v5296 = vsel %vm3296, %v5264, %v4852
      %v5297 = vsel %vm3296, %v5265, %v4854
      %v5298 = vsel %vm3296, %v5266, %v4856
      %v5299 = vsel %vm3296, %v5267, %v4858
      %v5300 = vsel %vm3296, %v5268, %v4860
      %v5301 = vsel %vm3296, %v5269, %v4862
      %v5302 = vsel %vm3296, %v5270, %v4864
      %v5303 = vsel %vm3296, %v5271, %v4866
      %v5304 = vsel %vm3296, %v5272, %v4868
      %v5305 = vsel %vm3296, %v5273, %v4870
      %v5306 = vsel %vm3296, %v5274, %v4872
      %v5307 = vsel %vm3296, %v5275, %v4874
      %v5308 = vsel %vm3296, %v5276, %v4876
      %vm5309 = vcmask 654336
      %v5310 = vsel %vm5309, %v5277, %v4910
      %v5311 = vsel %vm5309, %v5278, %v4912
      %v5312 = vsel %vm5309, %v5279, %v4914
      %v5313 = vsel %vm5309, %v5280, %v4916
      %v5314 = vsel %vm5309, %v5281, %v4918
      %v5315 = vsel %vm5309, %v5282, %v4920
      %v5316 = vsel %vm5309, %v5283, %v4922
      %v5317 = vsel %vm5309, %v5284, %v4924
      %v5318 = vsel %vm5309, %v5285, %v4926
      %v5319 = vsel %vm5309, %v5286, %v4928
      %v5320 = vsel %vm5309, %v5287, %v4930
      %v5321 = vsel %vm5309, %v5288, %v4932
      %v5322 = vsel %vm5309, %v5289, %v4934
      %v5323 = vsel %vm5309, %v5290, %v4936
      %v5324 = vsel %vm5309, %v5291, %v4938
      %v5325 = vsel %vm5309, %v5292, %v4940
      %v5326 = vsel %vm5309, %v5293, %v4942
      %v5327 = vsel %vm5309, %v5294, %v4944
      %v5328 = vsel %vm5309, %v5295, %v4946
      %v5329 = vsel %vm5309, %v5296, %v4948
      %v5330 = vsel %vm5309, %v5297, %v4950
      %v5331 = vsel %vm5309, %v5298, %v4952
      %v5332 = vsel %vm5309, %v5299, %v4954
      %v5333 = vsel %vm5309, %v5300, %v4956
      %v5334 = vsel %vm5309, %v5301, %v4958
      %v5335 = vsel %vm5309, %v5302, %v4960
      %v5336 = vsel %vm5309, %v5303, %v4962
      %v5337 = vsel %vm5309, %v5304, %v4964
      %v5338 = vsel %vm5309, %v5305, %v4966
      %v5339 = vsel %vm5309, %v5306, %v4968
      %v5340 = vsel %vm5309, %v5307, %v4970
      %v5341 = vsel %vm5309, %v5308, %v4972
      %vm5342 = vcmask 785408
      %v5343 = vsel %vm5342, %v5310, %v5006
      %v5344 = vsel %vm5342, %v5311, %v5008
      %v5345 = vsel %vm5342, %v5312, %v5010
      %v5346 = vsel %vm5342, %v5313, %v5012
      %v5347 = vsel %vm5342, %v5314, %v5014
      %v5348 = vsel %vm5342, %v5315, %v5016
      %v5349 = vsel %vm5342, %v5316, %v5018
      %v5350 = vsel %vm5342, %v5317, %v5020
      %v5351 = vsel %vm5342, %v5318, %v5022
      %v5352 = vsel %vm5342, %v5319, %v5024
      %v5353 = vsel %vm5342, %v5320, %v5026
      %v5354 = vsel %vm5342, %v5321, %v5028
      %v5355 = vsel %vm5342, %v5322, %v5030
      %v5356 = vsel %vm5342, %v5323, %v5032
      %v5357 = vsel %vm5342, %v5324, %v5034
      %v5358 = vsel %vm5342, %v5325, %v5036
      %v5359 = vsel %vm5342, %v5326, %v5038
      %v5360 = vsel %vm5342, %v5327, %v5040
      %v5361 = vsel %vm5342, %v5328, %v5042
      %v5362 = vsel %vm5342, %v5329, %v5044
      %v5363 = vsel %vm5342, %v5330, %v5046
      %v5364 = vsel %vm5342, %v5331, %v5048
      %v5365 = vsel %vm5342, %v5332, %v5050
      %v5366 = vsel %vm5342, %v5333, %v5052
      %v5367 = vsel %vm5342, %v5334, %v5054
      %v5368 = vsel %vm5342, %v5335, %v5056
      %v5369 = vsel %vm5342, %v5336, %v5058
      %v5370 = vsel %vm5342, %v5337, %v5060
      %v5371 = vsel %vm5342, %v5338, %v5062
      %v5372 = vsel %vm5342, %v5339, %v5064
      %v5373 = vsel %vm5342, %v5340, %v5058
      %v5374 = vsel %vm5342, %v5341, %v5060
      %vm5375 = vcmask 916480
      %v5376 = vsel %vm5375, %v5343, %v5096
      %v5377 = vsel %vm5375, %v5344, %v5098
      %v5378 = vsel %vm5375, %v5345, %v5100
      %v5379 = vsel %vm5375, %v5346, %v5102
      %v5380 = vsel %vm5375, %v5347, %v5104
      %v5381 = vsel %vm5375, %v5348, %v5106
      %v5382 = vsel %vm5375, %v5349, %v5108
      %v5383 = vsel %vm5375, %v5350, %v5110
      %v5384 = vsel %vm5375, %v5351, %v5112
      %v5385 = vsel %vm5375, %v5352, %v5114
      %v5386 = vsel %vm5375, %v5353, %v5116
      %v5387 = vsel %vm5375, %v5354, %v5118
      %v5388 = vsel %vm5375, %v5355, %v5120
      %v5389 = vsel %vm5375, %v5356, %v5122
      %v5390 = vsel %vm5375, %v5357, %v5124
      %v5391 = vsel %vm5375, %v5358, %v5126
      %v5392 = vsel %vm5375, %v5359, %v5128
      %v5393 = vsel %vm5375, %v5360, %v5130
      %v5394 = vsel %vm5375, %v5361, %v5132
      %v5395 = vsel %vm5375, %v5362, %v5134
      %v5396 = vsel %vm5375, %v5363, %v5136
      %v5397 = vsel %vm5375, %v5364, %v5138
      %v5398 = vsel %vm5375, %v5365, %v5140
      %v5399 = vsel %vm5375, %v5366, %v5142
      %v5400 = vsel %vm5375, %v5367, %v5144
      %v5401 = vsel %vm5375, %v5368, %v5146
      %v5402 = vsel %vm5375, %v5369, %v5148
      %v5403 = vsel %vm5375, %v5370, %v5150
      %v5404 = vsel %vm5375, %v5371, %v5152
      %v5405 = vsel %vm5375, %v5372, %v5154
      %v5406 = vsel %vm5375, %v5373, %v5148
      %v5407 = vsel %vm5375, %v5374, %v5150
      %v5408 = vsel %vm1387, %v4452, 0
      %v5410 = vsel %vm1387, %v4454, 0
      %v5412 = vsel %vm1387, %v4462, 0
      %v5414 = vsel %vm1387, %v4464, 0
      %v5416 = vsel %vm1387, %v4467, 0
      %v5418 = vsel %vm1387, %v4469, 0
      %v5420 = vsel %vm1387, %v4472, 0
      %v5422 = vsel %vm1387, %v4474, 0
      %v5424 = vsel %vm1387, %v4477, 0
      %v5426 = vsel %vm1387, %v4479, 0
      %v5428 = vsel %vm1387, %v4482, 0
      %v5430 = vsel %vm1387, %v4484, 0
      %v5432 = vsel %vm1387, %v4487, 0
      %v5434 = vsel %vm1387, %v4489, 0
      %v5436 = vsel %vm1387, %v4492, 0
      %v5438 = vsel %vm1387, %v4494, 0
      %v5440 = vsel %vm1387, %v4497, 0
      %v5442 = vsel %vm1387, %v4499, 0
      %v5444 = vsel %vm1387, %v4502, 0
      %v5446 = vsel %vm1387, %v4504, 0
      %v5448 = vsel %vm1387, %v4507, 0
      %v5450 = vsel %vm1387, %v4509, 0
      %v5452 = vsel %vm1387, %v4512, 0
      %v5454 = vsel %vm1387, %v4514, 0
      %v5456 = vsel %vm1387, %v4517, 0
      %v5458 = vsel %vm1387, %v4519, 0
      %v5460 = vsel %vm1387, %v4522, 0
      %v5462 = vsel %vm1387, %v4524, 0
      %v5464 = vsel %vm1387, %v4534, 0
      %v5466 = vsel %vm1387, %v4536, 0
      %5468 = vmatprep.subr.mxu0 0.0
      %5469 = vmatpush1.msra.mxu0 %v4327
      %5470 = vmatprep.subr.mxu0 0.0
      %5471 = vmatpush1.msra.mxu0 %v4328
      %5472 = vmatprep.subr.mxu0 0.0
      %5473 = vmatpush1.msra.mxu0 %v4329
      %5474 = vmatprep.subr.mxu0 0.0
      %5475 = vmatpush1.msra.mxu0 %v4330
      %5476 = vmatprep.subr.mxu0 0.0
      %5477 = vmatpush1.msra.mxu0 %v4331
      %5478 = vmatprep.subr.mxu0 0.0
      %5479 = vmatpush1.msra.mxu0 %v4332
      %5480 = vmatprep.subr.mxu0 0.0
      %5481 = vmatpush1.msra.mxu0 %v4333
      %5482 = vmatprep.subr.mxu0 0.0
      %5483 = vmatpush1.msra.mxu0 %v4334
      %5484 = vmatprep.subr.mxu0 0.0
      %5485 = vmatpush1.msra.mxu0 %v4335
      %5486 = vmatprep.subr.mxu0 0.0
      %5487 = vmatpush1.msra.mxu0 %v4336
      %5488 = vmatprep.subr.mxu0 0.0
      %5489 = vmatpush1.msra.mxu0 %v4337
      %5490 = vmatprep.subr.mxu0 0.0
      %5491 = vmatpush1.msra.mxu0 %v4338
      %5492 = vmatprep.subr.mxu0 0.0
      %5493 = vmatpush1.msra.mxu0 %v4339
      %5494 = vmatprep.subr.mxu0 0.0
      %5495 = vmatpush1.msra.mxu0 %v4340
      %5496 = vmatprep.subr.mxu0 0.0
      %5497 = vmatpush1.msra.mxu0 %v4341
      %5498 = vmatprep.subr.mxu0 0.0
      %5499 = vmatpush1.msra.mxu0 %v4342
      %5500 = vmatprep.subr.mxu0 0.0
      %5501 = vmatpush1.msra.mxu0 %v4343
      %5502 = vmatprep.subr.mxu0 0.0
      %5503 = vmatpush1.msra.mxu0 %v4344
      %5504 = vmatprep.subr.mxu0 0.0
      %5505 = vmatpush1.msra.mxu0 0.0
      %5506 = vmatprep.subr.mxu0 0.0
      %5507 = vmatpush1.msra.mxu0 0.0
      %5508 = vmatprep.subr.mxu0 0.0
      %5509 = vmatpush1.msra.mxu0 0.0
      %5510 = vmatprep.subr.mxu0 0.0
      %5511 = vmatpush1.msra.mxu0 0.0
      %5512 = vmatprep.subr.mxu0 0.0
      %5513 = vmatpush1.msra.mxu0 0.0
      %5514 = vmatprep.subr.mxu0 0.0
      %5515 = vmatpush1.msra.mxu0 0.0
      %5516 = vmatprep.subr.mxu0 0.0
      %5517 = vmatpush1.msra.mxu0 0.0
      %5518 = vmatprep.subr.mxu0 0.0
      %5519 = vmatpush1.msra.mxu0 0.0
      %5520 = vmatprep.subr.mxu0 0.0
      %5521 = vmatpush1.msra.mxu0 0.0
      %5522 = vmatprep.subr.mxu0 0.0
      %5523 = vmatpush1.msra.mxu0 0.0
      %5524 = vmatprep.subr.mxu0 0.0
      %5525 = vmatpush1.msra.mxu0 0.0
      %5526 = vmatprep.subr.mxu0 0.0
      %5527 = vmatpush1.msra.mxu0 0.0
      %5528 = vmatprep.subr.mxu0 0.0
      %5529 = vmatpush1.msra.mxu0 0.0
      %5530 = vmatprep.subr.mxu0 0.0
      %5531 = vmatpush1.msra.mxu0 0.0
      %5532 = vmatprep.mubr.f32.mxu0 %v5408
      %5533 = vmatmul.mubr.f32.gmra.mrb[0].mxu0 %v5376
      %v5534 = vpop.f32.mrb[0].mxu0
      %v5535 = vadd.f32 0.0, %v5534
      %v5536 = vpop.f32.mrb[0].mxu0
      %5537 = vmatprep.mubr.f32.mxu0 %v5410
      %5538 = vmatmul.mubr.f32.gmra.mrb[0].mxu0 %v5377
      %v5539 = vpop.f32.mrb[0].mxu0
      %v5540 = vadd.f32 0.0, %v5539
      %v5541 = vpop.f32.mrb[0].mxu0
      %5542 = vmatprep.mubr.f32.mxu0 %v5412
      %5543 = vmatmul.mubr.f32.gmra.mrb[0].mxu0 %v5378
      %v5544 = vpop.f32.mrb[0].mxu0
      %v5545 = vadd.f32 0.0, %v5544
      %v5546 = vpop.f32.mrb[0].mxu0
      %5547 = vmatprep.mubr.f32.mxu0 %v5414
      %5548 = vmatmul.mubr.f32.gmra.mrb[0].mxu0 %v5379
      %v5549 = vpop.f32.mrb[0].mxu0
      %v5550 = vadd.f32 0.0, %v5549
      %v5551 = vpop.f32.mrb[0].mxu0
      %5552 = vmatprep.mubr.f32.mxu0 %v5416
      %5553 = vmatmul.mubr.f32.gmra.mrb[0].mxu0 %v5380
      %v5554 = vpop.f32.mrb[0].mxu0
      %v5555 = vadd.f32 0.0, %v5554
      %v5556 = vpop.f32.mrb[0].mxu0
      %5557 = vmatprep.mubr.f32.mxu0 %v5418
      %5558 = vmatmul.mubr.f32.gmra.mrb[0].mxu0 %v5381
      %v5559 = vpop.f32.mrb[0].mxu0
      %v5560 = vadd.f32 0.0, %v5559
      %v5561 = vpop.f32.mrb[0].mxu0
      %5562 = vmatprep.mubr.f32.mxu0 %v5420
      %5563 = vmatmul.mubr.f32.gmra.mrb[0].mxu0 %v5382
      %v5564 = vpop.f32.mrb[0].mxu0
      %v5565 = vadd.f32 0.0, %v5564
      %v5566 = vpop.f32.mrb[0].mxu0
      %5567 = vmatprep.mubr.f32.mxu0 %v5422
      %5568 = vmatmul.mubr.f32.gmra.mrb[0].mxu0 %v5383
      %v5569 = vpop.f32.mrb[0].mxu0
      %v5570 = vadd.f32 0.0, %v5569
      %v5571 = vpop.f32.mrb[0].mxu0
      %5572 = vmatprep.mubr.f32.mxu0 %v5424
      %5573 = vmatmul.mubr.f32.gmra.mrb[0].mxu0 %v5384
      %v5574 = vpop.f32.mrb[0].mxu0
      %v5575 = vadd.f32 0.0, %v5574
      %v5576 = vpop.f32.mrb[0].mxu0
      %5577 = vmatprep.mubr.f32.mxu0 %v5426
      %5578 = vmatmul.mubr.f32.gmra.mrb[0].mxu0 %v5385
      %v5579 = vpop.f32.mrb[0].mxu0
      %v5580 = vadd.f32 0.0, %v5579
      %v5581 = vpop.f32.mrb[0].mxu0
      %5582 = vmatprep.mubr.f32.mxu0 %v5428
      %5583 = vmatmul.mubr.f32.gmra.mrb[0].mxu0 %v5386
      %v5584 = vpop.f32.mrb[0].mxu0
      %v5585 = vadd.f32 0.0, %v5584
      %v5586 = vpop.f32.mrb[0].mxu0
      %5587 = vmatprep.mubr.f32.mxu0 %v5430
      %5588 = vmatmul.mubr.f32.gmra.mrb[0].mxu0 %v5387
      %v5589 = vpop.f32.mrb[0].mxu0
      %v5590 = vadd.f32 0.0, %v5589
      %v5591 = vpop.f32.mrb[0].mxu0
      %5592 = vmatprep.mubr.f32.mxu0 %v5432
      %5593 = vmatmul.mubr.f32.gmra.mrb[0].mxu0 %v5388
      %v5594 = vpop.f32.mrb[0].mxu0
      %v5595 = vadd.f32 0.0, %v5594
      %v5596 = vpop.f32.mrb[0].mxu0
      %5597 = vmatprep.mubr.f32.mxu0 %v5434
      %5598 = vmatmul.mubr.f32.gmra.mrb[0].mxu0 %v5389
      %v5599 = vpop.f32.mrb[0].mxu0
      %v5600 = vadd.f32 0.0, %v5599
      %v5601 = vpop.f32.mrb[0].mxu0
      %5602 = vmatprep.mubr.f32.mxu0 %v5436
      %5603 = vmatmul.mubr.f32.gmra.mrb[0].mxu0 %v5390
      %v5604 = vpop.f32.mrb[0].mxu0
      %v5605 = vadd.f32 0.0, %v5604
      %v5606 = vpop.f32.mrb[0].mxu0
      %5607 = vmatprep.mubr.f32.mxu0 %v5438
      %5608 = vmatmul.mubr.f32.gmra.mrb[0].mxu0 %v5391
      %v5609 = vpop.f32.mrb[0].mxu0
      %v5610 = vadd.f32 0.0, %v5609
      %v5611 = vpop.f32.mrb[0].mxu0
      %5612 = vmatprep.mubr.f32.mxu0 %v5440
      %5613 = vmatmul.mubr.f32.gmra.mrb[0].mxu0 %v5392
      %v5614 = vpop.f32.mrb[0].mxu0
      %v5615 = vadd.f32 0.0, %v5614
      %v5616 = vpop.f32.mrb[0].mxu0
      %5617 = vmatprep.mubr.f32.mxu0 %v5442
      %5618 = vmatmul.mubr.f32.gmra.mrb[0].mxu0 %v5393
      %v5619 = vpop.f32.mrb[0].mxu0
      %v5620 = vadd.f32 0.0, %v5619
      %v5621 = vpop.f32.mrb[0].mxu0
      %5622 = vmatprep.mubr.f32.mxu0 %v5444
      %5623 = vmatmul.mubr.f32.gmra.mrb[0].mxu0 %v5394
      %v5624 = vpop.f32.mrb[0].mxu0
      %v5625 = vadd.f32 0.0, %v5624
      %v5626 = vpop.f32.mrb[0].mxu0
      %5627 = vmatprep.mubr.f32.mxu0 %v5446
      %5628 = vmatmul.mubr.f32.gmra.mrb[0].mxu0 %v5395
      %v5629 = vpop.f32.mrb[0].mxu0
      %v5630 = vadd.f32 0.0, %v5629
      %v5631 = vpop.f32.mrb[0].mxu0
      %5632 = vmatprep.mubr.f32.mxu0 %v5448
      %5633 = vmatmul.mubr.f32.gmra.mrb[0].mxu0 %v5396
      %v5634 = vpop.f32.mrb[0].mxu0
      %v5635 = vadd.f32 0.0, %v5634
      %v5636 = vpop.f32.mrb[0].mxu0
      %5637 = vmatprep.mubr.f32.mxu0 %v5450
      %5638 = vmatmul.mubr.f32.gmra.mrb[0].mxu0 %v5397
      %v5639 = vpop.f32.mrb[0].mxu0
      %v5640 = vadd.f32 0.0, %v5639
      %v5641 = vpop.f32.mrb[0].mxu0
      %5642 = vmatprep.mubr.f32.mxu0 %v5452
      %5643 = vmatmul.mubr.f32.gmra.mrb[0].mxu0 %v5398
      %v5644 = vpop.f32.mrb[0].mxu0
      %v5645 = vadd.f32 0.0, %v5644
      %v5646 = vpop.f32.mrb[0].mxu0
      %5647 = vmatprep.mubr.f32.mxu0 %v5454
      %5648 = vmatmul.mubr.f32.gmra.mrb[0].mxu0 %v5399
      %v5649 = vpop.f32.mrb[0].mxu0
      %v5650 = vadd.f32 0.0, %v5649
      %v5651 = vpop.f32.mrb[0].mxu0
      %5652 = vmatprep.mubr.f32.mxu0 %v5456
      %5653 = vmatmul.mubr.f32.gmra.mrb[0].mxu0 %v5400
      %v5654 = vpop.f32.mrb[0].mxu0
      %v5655 = vadd.f32 0.0, %v5654
      %v5656 = vpop.f32.mrb[0].mxu0
      %5657 = vmatprep.mubr.f32.mxu0 %v5458
      %5658 = vmatmul.mubr.f32.gmra.mrb[0].mxu0 %v5401
      %v5659 = vpop.f32.mrb[0].mxu0
      %v5660 = vadd.f32 0.0, %v5659
      %v5661 = vpop.f32.mrb[0].mxu0
      %5662 = vmatprep.mubr.f32.mxu0 %v5460
      %5663 = vmatmul.mubr.f32.gmra.mrb[0].mxu0 %v5402
      %v5664 = vpop.f32.mrb[0].mxu0
      %v5665 = vadd.f32 0.0, %v5664
      %v5666 = vpop.f32.mrb[0].mxu0
      %5667 = vmatprep.mubr.f32.mxu0 %v5462
      %5668 = vmatmul.mubr.f32.gmra.mrb[0].mxu0 %v5403
      %v5669 = vpop.f32.mrb[0].mxu0
      %v5670 = vadd.f32 0.0, %v5669
      %v5671 = vpop.f32.mrb[0].mxu0
      %5672 = vmatprep.mubr.f32.mxu0 %v5464
      %5673 = vmatmul.mubr.f32.gmra.mrb[0].mxu0 %v5404
      %v5674 = vpop.f32.mrb[0].mxu0
      %v5675 = vadd.f32 0.0, %v5674
      %v5676 = vpop.f32.mrb[0].mxu0
      %5677 = vmatprep.mubr.f32.mxu0 %v5466
      %5678 = vmatmul.mubr.f32.gmra.mrb[0].mxu0 %v5405
      %v5679 = vpop.f32.mrb[0].mxu0
      %v5680 = vadd.f32 0.0, %v5679
      %v5681 = vpop.f32.mrb[0].mxu0
      %5682 = vmatprep.mubr.f32.mxu0 %v5460
      %5683 = vmatmul.mubr.f32.gmra.mrb[0].mxu0 %v5406
      %v5684 = vpop.f32.mrb[0].mxu0
      %v5685 = vadd.f32 0.0, %v5684
      %v5686 = vpop.f32.mrb[0].mxu0
      %5687 = vmatprep.mubr.f32.mxu0 %v5462
      %5688 = vmatmul.mubr.f32.gmra.mrb[0].mxu0 %v5407
      %v5689 = vpop.f32.mrb[0].mxu0
      %v5690 = vadd.f32 0.0, %v5689
      %v5691 = vpop.f32.mrb[0].mxu0
      %5692 = vdwg.mxu0
      %v5693 = vmax.f32 %v5535, 0.0
      %v5694 = vmax.f32 %v5540, 0.0
      %v5695 = vmax.f32 %v5545, 0.0
      %v5696 = vmax.f32 %v5550, 0.0
      %v5697 = vmax.f32 %v5555, 0.0
      %v5698 = vmax.f32 %v5560, 0.0
      %v5699 = vmax.f32 %v5565, 0.0
      %v5700 = vmax.f32 %v5570, 0.0
      %v5701 = vmax.f32 %v5575, 0.0
      %v5702 = vmax.f32 %v5580, 0.0
      %v5703 = vmax.f32 %v5585, 0.0
      %v5704 = vmax.f32 %v5590, 0.0
      %v5705 = vmax.f32 %v5595, 0.0
      %v5706 = vmax.f32 %v5600, 0.0
      %v5707 = vmax.f32 %v5605, 0.0
      %v5708 = vmax.f32 %v5610, 0.0
      %v5709 = vmax.f32 %v5615, 0.0
      %v5710 = vmax.f32 %v5620, 0.0
      %v5711 = vmax.f32 %v5625, 0.0
      %v5712 = vmax.f32 %v5630, 0.0
      %v5713 = vmax.f32 %v5635, 0.0
      %v5714 = vmax.f32 %v5640, 0.0
      %v5715 = vmax.f32 %v5645, 0.0
      %v5716 = vmax.f32 %v5650, 0.0
      %v5717 = vmax.f32 %v5655, 0.0
      %v5718 = vmax.f32 %v5660, 0.0
      %v5719 = vmax.f32 %v5665, 0.0
      %v5720 = vmax.f32 %v5670, 0.0
      %v5721 = vmax.f32 %v5675, 0.0
      %v5722 = vmax.f32 %v5680, 0.0
      %v5723 = vmax.f32 %v5685, 0.0
      %v5724 = vmax.f32 %v5690, 0.0
      %5725 = vst.msk [vmem:[%s224] sm:$0xff] %vm1321, %v5693
      %5726 = vst.msk [vmem:[%s224 + $0x8] sm:$0xff] %vm1321, %v5694
      %5727 = vst.msk [vmem:[%s224 + $0x10] sm:$0xff] %vm1321, %v5695
      %5728 = vst.msk [vmem:[%s224 + $0x18] sm:$0xff] %vm1321, %v5696
      %5729 = vst.msk [vmem:[%s224 + $0x20] sm:$0xff] %vm1321, %v5697
      %5730 = vst.msk [vmem:[%s224 + $0x28] sm:$0xff] %vm1321, %v5698
      %5731 = vst.msk [vmem:[%s224 + $0x30] sm:$0xff] %vm1321, %v5699
      %5732 = vst.msk [vmem:[%s224 + $0x38] sm:$0xff] %vm1321, %v5700
      %5733 = vst.msk [vmem:[%s224 + $0x40] sm:$0xff] %vm1321, %v5701
      %5734 = vst.msk [vmem:[%s224 + $0x48] sm:$0xff] %vm1321, %v5702
      %5735 = vst.msk [vmem:[%s224 + $0x50] sm:$0xff] %vm1321, %v5703
      %5736 = vst.msk [vmem:[%s224 + $0x58] sm:$0xff] %vm1321, %v5704
      %5737 = vst.msk [vmem:[%s224 + $0x60] sm:$0xff] %vm1321, %v5705
      %5738 = vst.msk [vmem:[%s224 + $0x68] sm:$0xff] %vm1321, %v5706
      %5739 = vst.msk [vmem:[%s224 + $0x70] sm:$0xff] %vm1321, %v5707
      %5740 = vst.msk [vmem:[%s224 + $0x78] sm:$0xff] %vm1321, %v5708
      %5741 = vst.msk [vmem:[%s224 + $0x80] sm:$0xff] %vm1321, %v5709
      %5742 = vst.msk [vmem:[%s224 + $0x88] sm:$0xff] %vm1321, %v5710
      %5743 = vst.msk [vmem:[%s224 + $0x90] sm:$0xff] %vm1321, %v5711
      %5744 = vst.msk [vmem:[%s224 + $0x98] sm:$0xff] %vm1321, %v5712
      %5745 = vst.msk [vmem:[%s224 + $0xa0] sm:$0xff] %vm1321, %v5713
      %5746 = vst.msk [vmem:[%s224 + $0xa8] sm:$0xff] %vm1321, %v5714
      %5747 = vst.msk [vmem:[%s224 + $0xb0] sm:$0xff] %vm1321, %v5715
      %5748 = vst.msk [vmem:[%s224 + $0xb8] sm:$0xff] %vm1321, %v5716
      %5749 = vst.msk [vmem:[%s224 + $0xc0] sm:$0xff] %vm1321, %v5717
      %5750 = vst.msk [vmem:[%s224 + $0xc8] sm:$0xff] %vm1321, %v5718
      %5751 = vst.msk [vmem:[%s224 + $0xd0] sm:$0xff] %vm1321, %v5719
      %5752 = vst.msk [vmem:[%s224 + $0xd8] sm:$0xff] %vm1321, %v5720
      %5753 = vst.msk [vmem:[%s224 + $0xe0] sm:$0xff] %vm1321, %v5721
      %5754 = vst.msk [vmem:[%s224 + $0xe8] sm:$0xff] %vm1321, %v5722
      %5755 = vst.msk [vmem:[%s224 + $0xf0] sm:$0xff] %vm1321, %v5723
      %5756 = vst.msk [vmem:[%s224 + $0xf8] sm:$0xff] %vm1321, %v5724
      %p5757 = scmp.lt.s32.totalorder %s16, 1
      %s5758 = scalar_select %p5757, %s16, 1
      %s5759 = smul.addr %s5758, 32
      %s5760 = smul.addr %s5759, 8
      %s5761 = scalar_lea.vmem %s5, %s5760
      // Predicated region
      $region41: #{basic_block_ganilla.1} parent=39 // pred_check
        %p5762 = pneg %p144
      $region42: #{basic_block_ganilla.1} parent=39 // pred_check_branch
        %5764 = sbr.rel (%p5762) target = $region44
      $region43: #{basic_block_ganilla.1} parent=39 // pred_region
        _
      $region44: #{basic_block_ganilla.1} parent=39 // pred_fallthru
        _
    $region40: #{basic_block_ganilla.1} parent=5 // pred_fallthru
      _
    %p5765 = scmp.le.s32.totalorder 2, %s11
    // Predicated region
    $region45: #{basic_block_ganilla.1} parent=5 // pred_check
      %p5766 = pneg %p5765
    $region46: #{basic_block_ganilla.1} parent=5 // pred_check_branch
      %5768 = sbr.rel (%p5766) target = $region48
    $region47: #{basic_block_ganilla.1} parent=5 // pred_region
      %s5769 = ssub.s32 %s11, 2
      // Predicated region
      $region49: #{basic_block_ganilla.1} parent=47 // pred_check
        %p5770 = pneg %p150
      $region50: #{basic_block_ganilla.1} parent=47 // pred_check_branch
        %5772 = sbr.rel (%p5770) target = $region52
      $region51: #{basic_block_ganilla.1} parent=47 // pred_region
        %p5773 = scmp.lt.s32.totalorder %s17, 1
        %s5774 = scalar_select %p5773, %s17, 1
        %s5775 = smul.addr %s5774, 32
        %s5776 = smul.addr %s5775, 8
        %s5777 = scalar_lea.vmem %s5, %s5776
      $region52: #{basic_block_ganilla.1} parent=47 // pred_fallthru
        _
    $region48: #{basic_block_ganilla.1} parent=5 // pred_fallthru
      _
  $region6: #{basic_block_ganilla.1} parent=0 // loop_footer
    %s15 = sadd.s32 1, %s11
  $region7: #{basic_block_ganilla.1} parent=0 // loop_footer_branch
    %10 = sbr.rel target = $region3
  $region8: #{basic_block_ganilla.1} parent=0 // loop_exit
    _

</llo_original>
